<compile_context>
chip_gen: v7x
topology: tpu7x:2x2x1
jax: 0.10.0
libtpu: 0.0.40
codegen_flags: <defaults>
</compile_context>

<pallas_src>
import functools

import jax
import jax.numpy as jnp
from jax import lax
from jax.experimental import pallas as pl
from jax.experimental.pallas import tpu as pltpu


def _round_up(x, m):
    return ((x + m - 1) // m) * m


# ----------------------------- Pallas kernel --------------------------------
def _bilstm_chunk_kernel(len_ref, b_ref, whh_ref, gxf_ref, gxb_ref,
                         outf_ref, outb_ref, hf_sc, cf_sc, hb_sc, cb_sc,
                         *, unroll):
    """Fused fwd+bwd LSTM recurrence over one time chunk.

    grid = (n_chunks,), walked sequentially ("arbitrary").  h/c for both
    directions live in VMEM scratch and are carried across chunks (reset at
    chunk 0).  The two direction chains are independent and are interleaved
    inside the same fori_loop body to hide MXU/EUP latency.

    Ref shapes (Hp = padded hidden, Bp = padded batch, cdt = compute dtype):
      len_ref : (Bp, 1)       int32  right-padded sequence lengths
      b_ref   : (2, 1, 4Hp)   f32    combined bias b_ih+b_hh, gate order i,f,o,g
      whh_ref : (2, Hp, 4Hp)  cdt    recurrent weights
      gxf_ref : (Tc, Bp, 4Hp) cdt    hoisted x@W_ih, fwd chunk  (= chunk i)
      gxb_ref : (Tc, Bp, 4Hp) cdt    hoisted x@W_ih, bwd chunk  (= chunk n-1-i)
      outf_ref, outb_ref : (Tc, Bp, Hp) cdt
    """
    i = pl.program_id(0)
    n_chunks = pl.num_programs(0)

    @pl.when(i == 0)
    def _():
        hf_sc[...] = jnp.zeros_like(hf_sc)
        cf_sc[...] = jnp.zeros_like(cf_sc)
        hb_sc[...] = jnp.zeros_like(hb_sc)
        cb_sc[...] = jnp.zeros_like(cb_sc)

    Tc = gxf_ref.shape[0]
    Hp = hf_sc.shape[-1]

    lens = len_ref[...]            # (Bp, 1) int32, loaded once per chunk
    b_f = b_ref[0]                 # (1, 4Hp) f32
    b_b = b_ref[1]
    whh_f = whh_ref[0]             # (Hp, 4Hp) compute dtype
    whh_b = whh_ref[1]

    t0_f = i * Tc                        # fwd chunk base (absolute time)
    t0_b = (n_chunks - 1 - i) * Tc       # bwd chunk base (absolute time)

    def cell(gates_x, bias, h, c, whh, valid):
        # gates_x: (Bp, 4Hp) cdt; bias: (1, 4Hp) f32; h/c: (Bp, Hp) f32.
        gates = gates_x.astype(jnp.float32) + bias + jnp.dot(
            h.astype(whh.dtype), whh, preferred_element_type=jnp.float32)
        # Gate order (i, f, o, g): one sigmoid over a contiguous (Bp, 3Hp)
        # slab, one tanh over (Bp, Hp).
        sig = jax.nn.sigmoid(gates[:, :3 * Hp])
        i_g = sig[:, 0 * Hp:1 * Hp]
        f_g = sig[:, 1 * Hp:2 * Hp]
        o_g = sig[:, 2 * Hp:3 * Hp]
        g_g = jnp.tanh(gates[:, 3 * Hp:])
        c_new = f_g * c + i_g * g_g
        h_new = o_g * jnp.tanh(c_new)
        # Padded steps (t >= length): freeze h/c, emit zeros (selects, not muls).
        h_next = jnp.where(valid, h_new, h)
        c_next = jnp.where(valid, c_new, c)
        out = jnp.where(valid, h_new, 0.0)
        return h_next, c_next, out

    def step(j, carry):
        hf, cf, hb, cb = carry
        # Forward chain: local timestep j.
        hf, cf, o_f = cell(gxf_ref[j], b_f, hf, cf, whh_f, (t0_f + j) < lens)
        outf_ref[j] = o_f.astype(outf_ref.dtype)
        # Backward chain: local timestep Tc-1-j (absolute time walks backwards).
        tb = Tc - 1 - j
        hb, cb, o_b = cell(gxb_ref[tb], b_b, hb, cb, whh_b, (t0_b + tb) < lens)
        outb_ref[tb] = o_b.astype(outb_ref.dtype)
        return hf, cf, hb, cb

    hf, cf, hb, cb = lax.fori_loop(
        0, Tc, step, (hf_sc[...], cf_sc[...], hb_sc[...], cb_sc[...]),
        unroll=unroll)
    hf_sc[...] = hf
    cf_sc[...] = cf
    hb_sc[...] = hb
    cb_sc[...] = cb


def _bilstm_layer(gx_f, gx_b, w_hh, bias, lengths_b1, *, hidden_pad,
                  time_chunk, out_dtype, vmem_limit_bytes):
    """gx_f/gx_b: (T_pad, Bp, 4Hp) compute_dtype (bwd uses reversed chunk
    order via index_map); w_hh: (2, Hp, 4Hp); bias: (2, 1, 4Hp) f32;
    lengths_b1: (Bp, 1) int32.  Returns (out_fwd, out_bwd), each
    (T_pad, Bp, Hp) in out_dtype."""
    T_pad, Bp, G = gx_f.shape
    Hp = hidden_pad
    Tc = time_chunk
    n_chunks = T_pad // Tc
    unroll = max(1, min(8, Tc))          # partial unroll: scheduling visibility
                                         # without blowing up live ranges

    kernel = functools.partial(_bilstm_chunk_kernel, unroll=unroll)
    out_struct = jax.ShapeDtypeStruct((T_pad, Bp, Hp), out_dtype)

    return pl.pallas_call(
        kernel,
        out_shape=(out_struct, out_struct),
        grid=(n_chunks,),
        in_specs=[
            pl.BlockSpec((Bp, 1), lambda i: (0, 0)),            # lengths
            pl.BlockSpec((2, 1, G), lambda i: (0, 0, 0)),       # bias (f32)
            pl.BlockSpec((2, Hp, G), lambda i: (0, 0, 0)),      # W_hh
            pl.BlockSpec((Tc, Bp, G), lambda i: (i, 0, 0)),     # gates_x fwd
            pl.BlockSpec((Tc, Bp, G),
                         lambda i: (n_chunks - 1 - i, 0, 0)),   # gates_x bwd
        ],
        out_specs=(
            pl.BlockSpec((Tc, Bp, Hp), lambda i: (i, 0, 0)),
            pl.BlockSpec((Tc, Bp, Hp), lambda i: (n_chunks - 1 - i, 0, 0)),
        ),
        scratch_shapes=[pltpu.VMEM((Bp, Hp), jnp.float32) for _ in range(4)],
        compiler_params=pltpu.CompilerParams(
            dimension_semantics=("arbitrary",),
            vmem_limit_bytes=int(vmem_limit_bytes),
        ),
    )(lengths_b1, bias, w_hh, gx_f, gx_b)


# ------------------------ chip-aware tile sizing ----------------------------
def _vmem_budget_bytes():
    """~75% of physical VMEM (capped at 100 MiB): 96 MiB on v5e/v6e (128 MiB),
    48 MiB on v7x (64 MiB).  Conservative fallback if introspection fails."""
    try:
        cap = int(pltpu.get_tpu_info().vmem_capacity_bytes)
    except Exception:
        cap = 64 * 1024 * 1024
    return max(16 * 1024 * 1024, min(int(cap * 0.75), 100 * 1024 * 1024))


def _pick_time_chunk(Bp, Hp, T, gx_bytes, out_bytes, w_bytes, vmem_limit):
    """Largest Tc whose double-buffered gate/output slabs fit ~80% of budget."""
    G = 4 * Hp
    fixed = 2 * Hp * G * w_bytes                    # W_hh
    fixed += 2 * G * 4 + Bp * 4                     # bias + lengths
    fixed += 4 * Bp * Hp * 4                        # h/c scratch (f32)
    fixed += 4 * 1024 * 1024                        # compiler temporaries slack
    per_t = 2 * 2 * Bp * G * gx_bytes + 2 * 2 * Bp * Hp * out_bytes
    budget = int(vmem_limit * 0.8) - fixed
    tc = budget // per_t if per_t > 0 else 1
    return int(max(1, min(tc, 128, T)))


# ------------------------------- parameters ---------------------------------
def init_stacked_brnn_params(key, input_size, hidden_size, num_layers):
    """PyTorch-style uniform(-1/sqrt(H), 1/sqrt(H)) init.  Per layer returns a
    dict with fwd/bwd stacked along a leading direction axis:
      w_ih: (2, D_in, 4H)   w_hh: (2, H, 4H)   b: (2, 4H)  (= b_ih + b_hh)
    Gate order along the 4H axis is PyTorch's i, f, g, o."""
    k = 1.0 / float(hidden_size) ** 0.5
    params = []
    for layer in range(num_layers):
        d_in = input_size if layer == 0 else 2 * hidden_size
        w_ihs, w_hhs, bs = [], [], []
        for _ in range(2):  # fwd, bwd
            key, k1, k2, k3, k4 = jax.random.split(key, 5)
            w_ih = jax.random.uniform(k1, (4 * hidden_size, d_in), jnp.float32, -k, k)
            w_hh = jax.random.uniform(k2, (4 * hidden_size, hidden_size), jnp.float32, -k, k)
            b_ih = jax.random.uniform(k3, (4 * hidden_size,), jnp.float32, -k, k)
            b_hh = jax.random.uniform(k4, (4 * hidden_size,), jnp.float32, -k, k)
            w_ihs.append(w_ih.T)
            w_hhs.append(w_hh.T)
            bs.append(b_ih + b_hh)
        params.append({"w_ih": jnp.stack(w_ihs),
                       "w_hh": jnp.stack(w_hhs),
                       "b": jnp.stack(bs)})
    return params


def _reorder_pad_gates(w, H, Hp):
    """Last axis 4H in PyTorch order (i,f,g,o) -> 4Hp in order (i,f,o,g),
    each gate block zero-padded from H to Hp."""
    i_, f_, g_, o_ = jnp.split(w, 4, axis=-1)
    pad = [(0, 0)] * (w.ndim - 1) + [(0, Hp - H)]
    return jnp.concatenate([jnp.pad(t, pad) for t in (i_, f_, o_, g_)], axis=-1)


def _prep_layer_params(p, H, Hp, cdt):
    w_ih = _reorder_pad_gates(p["w_ih"], H, Hp).astype(cdt)          # (2,d_in,4Hp)
    w_hh = jnp.pad(p["w_hh"], ((0, 0), (0, Hp - H), (0, 0)))         # pad input rows
    w_hh = _reorder_pad_gates(w_hh, H, Hp).astype(cdt)               # (2,Hp,4Hp)
    b = _reorder_pad_gates(p["b"], H, Hp).astype(jnp.float32)        # (2,4Hp)
    return w_ih, w_hh, b.reshape(2, 1, 4 * Hp)


# -------------------------------- forward -----------------------------------
def stacked_brnn_forward(x, x_mask, params, *, concat_layers=False,
                         compute_dtype=jnp.bfloat16, time_chunk=None):
    """x: (B, T, D) float32; x_mask: (B, T) {0,1}, 1 = padding (right-padded).
    Equivalent to StackedBRNN.forward in eval mode (padded path, dropout=0)."""
    B, T, D = x.shape
    H = params[0]["w_hh"].shape[-1] // 4
    cdt = jnp.dtype(compute_dtype)

    # Lane/sublane-friendly internal padding (stripped before returning).
    Hp = _round_up(max(H, 1), 128)
    Bp = _round_up(max(B, 1), 8)

    vmem_limit = _vmem_budget_bytes()
    if time_chunk is None:
        Tc = _pick_time_chunk(Bp, Hp, T, cdt.itemsize, cdt.itemsize,
                              cdt.itemsize, vmem_limit)
    else:
        Tc = max(1, min(int(time_chunk), T))
    n_chunks = int(pl.cdiv(T, Tc))
    Tc = int(pl.cdiv(T, n_chunks))        # even out chunks, minimize tail pad
    T_pad = n_chunks * Tc

    lengths = jnp.sum((x_mask == 0).astype(jnp.int32), axis=1)       # (B,)
    lengths_b1 = jnp.pad(lengths, (0, Bp - B)).reshape(Bp, 1)

    x_t = jnp.transpose(x, (1, 0, 2)).astype(jnp.float32)            # (T, B, D)
    x_t = jnp.pad(x_t, ((0, T_pad - T), (0, Bp - B), (0, 0)))        # (T_pad,Bp,D)

    outputs = []
    inp = x_t
    for layer_p in params:
        w_ih_p, w_hh_p, b_p = _prep_layer_params(layer_p, H, Hp, cdt)
        inp_c = inp.astype(cdt)
        # Hoisted input projection: one big GEMM per direction over all
        # timesteps (compute_dtype operands, f32 accumulation), stored as a
        # compute_dtype slab.  Bias is added in f32 inside the kernel.
        gx_f = jnp.einsum("tbd,dg->tbg", inp_c, w_ih_p[0],
                          preferred_element_type=jnp.float32).astype(cdt)
        gx_b = jnp.einsum("tbd,dg->tbg", inp_c, w_ih_p[1],
                          preferred_element_type=jnp.float32).astype(cdt)

        out_f, out_b = _bilstm_layer(gx_f, gx_b, w_hh_p, b_p, lengths_b1,
                                     hidden_pad=Hp, time_chunk=Tc,
                                     out_dtype=cdt,
                                     vmem_limit_bytes=vmem_limit)
        out = jnp.concatenate([out_f[..., :H], out_b[..., :H]], axis=-1)
        outputs.append(out)                                           # (T_pad,Bp,2H)
        inp = out

    output = jnp.concatenate(outputs, axis=-1) if concat_layers else outputs[-1]
    output = output[:T, :B].astype(jnp.float32)
    return jnp.transpose(output, (1, 0, 2))                           # (B, T, ·)


# ------------------------- pure-JAX reference --------------------------------
def _ref_lstm_dir(x_tbd, lengths, w_ih_t, w_hh_t, bias, reverse):
    T, B, _ = x_tbd.shape
    H = w_hh_t.shape[0]
    valid = (jnp.arange(T)[:, None] < lengths[None, :]).astype(jnp.float32)[..., None]

    def step(carry, inputs):
        h, c = carry
        x_t, v = inputs
        gates = x_t @ w_ih_t + h @ w_hh_t + bias
        i_g = jax.nn.sigmoid(gates[:, :H])
        f_g = jax.nn.sigmoid(gates[:, H:2 * H])
        g_g = jnp.tanh(gates[:, 2 * H:3 * H])
        o_g = jax.nn.sigmoid(gates[:, 3 * H:])
        c_new = f_g * c + i_g * g_g
        h_new = o_g * jnp.tanh(c_new)
        return (v * h_new + (1 - v) * h, v * c_new + (1 - v) * c), v * h_new

    xs = (x_tbd[::-1], valid[::-1]) if reverse else (x_tbd, valid)
    _, ys = lax.scan(step, (jnp.zeros((B, H)), jnp.zeros((B, H))), xs)
    return ys[::-1] if reverse else ys


def _ref_forward(x, x_mask, params, concat_layers=False):
    B, T, D = x.shape
    x_t = jnp.transpose(x, (1, 0, 2)).astype(jnp.float32)
    lengths = jnp.sum((x_mask == 0).astype(jnp.int32), axis=1)
    outputs = []
    inp = x_t
    for p in params:
        fwd = _ref_lstm_dir(inp, lengths, p["w_ih"][0], p["w_hh"][0], p["b"][0], False)
        bwd = _ref_lstm_dir(inp, lengths, p["w_ih"][1], p["w_hh"][1], p["b"][1], True)
        out = jnp.concatenate([fwd, bwd], axis=-1)
        outputs.append(out)
        inp = out
    output = jnp.concatenate(outputs, axis=-1) if concat_layers else outputs[-1]
    return jnp.transpose(output, (1, 0, 2))


if __name__ == "__main__":
    B, T, D, H, NUM_LAYERS = 2, 8, 16, 32, 2

    key = jax.random.PRNGKey(0)
    k_x, k_p = jax.random.split(key)
    x = jax.random.normal(k_x, (B, T, D), jnp.float32)
    # Right-padded mask (1 = padding): sequence lengths [8, 5].
    lens = jnp.array([8, 5])
    x_mask = (jnp.arange(T)[None, :] >= lens[:, None]).astype(jnp.int32)

    params = init_stacked_brnn_params(k_p, D, H, NUM_LAYERS)
    ref = _ref_forward(x, x_mask, params, concat_layers=False)
    ref_cat = _ref_forward(x, x_mask, params, concat_layers=True)

    # f32 compute path: must match the f32 reference tightly (kernel logic).
    fwd_f32 = jax.jit(functools.partial(stacked_brnn_forward,
                                        concat_layers=False,
                                        compute_dtype=jnp.float32))
    out_f32 = jax.block_until_ready(fwd_f32(x, x_mask, params))
    assert out_f32.shape == (B, T, 2 * H), out_f32.shape
    assert jnp.allclose(out_f32, ref, atol=1e-5, rtol=1e-5), \
        float(jnp.abs(out_f32 - ref).max())

    # concat_layers=True, f32 path.
    fwd_f32_cat = jax.jit(functools.partial(stacked_brnn_forward,
                                            concat_layers=True,
                                            compute_dtype=jnp.float32))
    out_cat = jax.block_until_ready(fwd_f32_cat(x, x_mask, params))
    assert out_cat.shape == (B, T, 2 * H * NUM_LAYERS), out_cat.shape
    assert jnp.allclose(out_cat, ref_cat, atol=1e-5, rtol=1e-5), \
        float(jnp.abs(out_cat - ref_cat).max())

    # bf16 compute path (default, MXU/DMA-fast): bf16 gate slab + bf16 outputs,
    # sanity tolerance vs the f32 reference.
    fwd_bf16 = jax.jit(functools.partial(stacked_brnn_forward,
                                         concat_layers=False,
                                         compute_dtype=jnp.bfloat16))
    out_bf16 = jax.block_until_ready(fwd_bf16(x, x_mask, params))
    assert out_bf16.shape == (B, T, 2 * H), out_bf16.shape
    assert jnp.allclose(out_bf16, ref, atol=1e-1, rtol=1e-1), \
        float(jnp.abs(out_bf16 - ref).max())

    print("KERNEL_OK")
</pallas_src>

<mosaic_0001>
module attributes {stable_mosaic.version = 11 : i64} {
  func.func @_bilstm_chunk_kernel(%arg0: i32, %arg1: memref<8x1xi32, #tpu.memory_space<vmem>>, %arg2: memref<2x1x512xf32, #tpu.memory_space<vmem>>, %arg3: memref<2x128x512xf32, #tpu.memory_space<vmem>>, %arg4: memref<8x8x512xf32, #tpu.memory_space<vmem>>, %arg5: memref<8x8x512xf32, #tpu.memory_space<vmem>>, %arg6: memref<8x8x128xf32, #tpu.memory_space<vmem>>, %arg7: memref<8x8x128xf32, #tpu.memory_space<vmem>>, %arg8: memref<8x128xf32, #tpu.memory_space<vmem>>, %arg9: memref<8x128xf32, #tpu.memory_space<vmem>>, %arg10: memref<8x128xf32, #tpu.memory_space<vmem>>, %arg11: memref<8x128xf32, #tpu.memory_space<vmem>>) attributes {dimension_semantics = [#tpu.dimension_semantics<arbitrary>], iteration_bounds = array<i64: 1>, scalar_prefetch = 0 : i64, scratch_operands = 4 : i64, tpu.core_type = #tpu.core_type<tc>, window_params = [{pipeline_mode = #tpu.pipeline_mode<synchronous>, transform_indices = @transform_0, window_bounds = array<i64: 8, 1>}, {pipeline_mode = #tpu.pipeline_mode<synchronous>, transform_indices = @transform_1, window_bounds = array<i64: 2, 1, 512>}, {pipeline_mode = #tpu.pipeline_mode<synchronous>, transform_indices = @transform_2, window_bounds = array<i64: 2, 128, 512>}, {transform_indices = @transform_3, window_bounds = array<i64: 8, 8, 512>}, {transform_indices = @transform_4, window_bounds = array<i64: 8, 8, 512>}, {transform_indices = @transform_5, window_bounds = array<i64: 8, 8, 128>}, {transform_indices = @transform_6, window_bounds = array<i64: 8, 8, 128>}]} {
    %c0_i32 = arith.constant 0 : i32
    %0 = arith.cmpi eq, %arg0, %c0_i32 : i32
    %1 = arith.extui %0 : i1 to i32
    %c0_i32_0 = arith.constant 0 : i32
    %2 = arith.cmpi ne, %1, %c0_i32_0 : i32
    scf.if %2 {
      %cst_152 = arith.constant 0.000000e+00 : f32
      %671 = vector.broadcast %cst_152 : f32 to vector<8x128xf32>
      %c0_153 = arith.constant 0 : index
      %c0_154 = arith.constant 0 : index
      %672 = vector.load %arg8[%c0_153, %c0_154] : memref<8x128xf32, #tpu.memory_space<vmem>>, vector<8x128xf32>
      tpu.vector_store %arg8[%c0_153, %c0_154], %671 {strides = array<i32>} : memref<8x128xf32, #tpu.memory_space<vmem>>, vector<8x128xf32>,
      %cst_155 = arith.constant 0.000000e+00 : f32
      %673 = vector.broadcast %cst_155 : f32 to vector<8x128xf32>
      %c0_156 = arith.constant 0 : index
      %c0_157 = arith.constant 0 : index
      %674 = vector.load %arg9[%c0_156, %c0_157] : memref<8x128xf32, #tpu.memory_space<vmem>>, vector<8x128xf32>
      tpu.vector_store %arg9[%c0_156, %c0_157], %673 {strides = array<i32>} : memref<8x128xf32, #tpu.memory_space<vmem>>, vector<8x128xf32>,
      %cst_158 = arith.constant 0.000000e+00 : f32
      %675 = vector.broadcast %cst_158 : f32 to vector<8x128xf32>
      %c0_159 = arith.constant 0 : index
      %c0_160 = arith.constant 0 : index
      %676 = vector.load %arg10[%c0_159, %c0_160] : memref<8x128xf32, #tpu.memory_space<vmem>>, vector<8x128xf32>
      tpu.vector_store %arg10[%c0_159, %c0_160], %675 {strides = array<i32>} : memref<8x128xf32, #tpu.memory_space<vmem>>, vector<8x128xf32>,
      %cst_161 = arith.constant 0.000000e+00 : f32
      %677 = vector.broadcast %cst_161 : f32 to vector<8x128xf32>
      %c0_162 = arith.constant 0 : index
      %c0_163 = arith.constant 0 : index
      %678 = vector.load %arg11[%c0_162, %c0_163] : memref<8x128xf32, #tpu.memory_space<vmem>>, vector<8x128xf32>
      tpu.vector_store %arg11[%c0_162, %c0_163], %677 {strides = array<i32>} : memref<8x128xf32, #tpu.memory_space<vmem>>, vector<8x128xf32>,
    } else {
    }
    %c0 = arith.constant 0 : index
    %c0_1 = arith.constant 0 : index
    %3 = vector.load %arg1[%c0, %c0_1] : memref<8x1xi32, #tpu.memory_space<vmem>>, vector<8x1xi32>
    %c0_2 = arith.constant 0 : index
    %c0_3 = arith.constant 0 : index
    %c0_4 = arith.constant 0 : index
    %4 = vector.load %arg2[%c0_2, %c0_3, %c0_4] : memref<2x1x512xf32, #tpu.memory_space<vmem>>, vector<1x1x512xf32>
    %5 = vector.shape_cast %4 : vector<1x1x512xf32> to vector<1x512xf32>
    %c1 = arith.constant 1 : index
    %c0_5 = arith.constant 0 : index
    %c0_6 = arith.constant 0 : index
    %6 = vector.load %arg2[%c1, %c0_5, %c0_6] : memref<2x1x512xf32, #tpu.memory_space<vmem>>, vector<1x1x512xf32>
    %7 = vector.shape_cast %6 : vector<1x1x512xf32> to vector<1x512xf32>
    %c0_7 = arith.constant 0 : index
    %c0_8 = arith.constant 0 : index
    %c0_9 = arith.constant 0 : index
    %8 = vector.load %arg3[%c0_7, %c0_8, %c0_9] : memref<2x128x512xf32, #tpu.memory_space<vmem>>, vector<1x128x512xf32>
    %9 = vector.shape_cast %8 : vector<1x128x512xf32> to vector<128x512xf32>
    %c1_10 = arith.constant 1 : index
    %c0_11 = arith.constant 0 : index
    %c0_12 = arith.constant 0 : index
    %10 = vector.load %arg3[%c1_10, %c0_11, %c0_12] : memref<2x128x512xf32, #tpu.memory_space<vmem>>, vector<1x128x512xf32>
    %11 = vector.shape_cast %10 : vector<1x128x512xf32> to vector<128x512xf32>
    %c8_i32 = arith.constant 8 : i32
    %12 = arith.muli %arg0, %c8_i32 : i32
    %c0_i32_13 = arith.constant 0 : i32
    %13 = arith.subi %c0_i32_13, %arg0 : i32
    %c8_i32_14 = arith.constant 8 : i32
    %14 = arith.muli %13, %c8_i32_14 : i32
    %c0_15 = arith.constant 0 : index
    %c0_16 = arith.constant 0 : index
    %15 = vector.load %arg8[%c0_15, %c0_16] : memref<8x128xf32, #tpu.memory_space<vmem>>, vector<8x128xf32>
    %c0_17 = arith.constant 0 : index
    %c0_18 = arith.constant 0 : index
    %16 = vector.load %arg9[%c0_17, %c0_18] : memref<8x128xf32, #tpu.memory_space<vmem>>, vector<8x128xf32>
    %c0_19 = arith.constant 0 : index
    %c0_20 = arith.constant 0 : index
    %17 = vector.load %arg10[%c0_19, %c0_20] : memref<8x128xf32, #tpu.memory_space<vmem>>, vector<8x128xf32>
    %c0_21 = arith.constant 0 : index
    %c0_22 = arith.constant 0 : index
    %18 = vector.load %arg11[%c0_21, %c0_22] : memref<8x128xf32, #tpu.memory_space<vmem>>, vector<8x128xf32>
    %c0_i32_23 = arith.constant 0 : i32
    %19 = arith.index_cast %c0_i32_23 : i32 to index
    %c0_24 = arith.constant 0 : index
    %c0_25 = arith.constant 0 : index
    %20 = vector.load %arg4[%19, %c0_24, %c0_25] : memref<8x8x512xf32, #tpu.memory_space<vmem>>, vector<1x8x512xf32>
    %21 = vector.shape_cast %20 : vector<1x8x512xf32> to vector<8x512xf32>
    %22 = arith.addi %12, %c0_i32_23 : i32
    %23 = vector.broadcast %22 : i32 to vector<8x1xi32>
    %24 = arith.cmpi slt, %23, %3 : vector<8x1xi32>
    %25 = vector.broadcast %5 : vector<1x512xf32> to vector<8x512xf32>
    %26 = arith.addf %21, %25 : vector<8x512xf32>
    %cst = arith.constant dense<0.000000e+00> : vector<8x512xf32>
    %27 = tpu.matmul %15, %9, %cst {dimension_numbers = #tpu.dot_dimension_numbers<[1], [0], [0], [1], [0, 0, 1, 1], [], []>} : vector<8x128xf32>, vector<128x512xf32>, vector<8x512xf32> -> vector<8x512xf32>
    %28 = arith.addf %26, %27 : vector<8x512xf32>
    %29 = vector.extract_strided_slice %28 {offsets = [0, 0], sizes = [8, 384], strides = [1, 1]} : vector<8x512xf32> to vector<8x384xf32>
    %30 = arith.negf %29 : vector<8x384xf32>
    %31 = math.exp %30 : vector<8x384xf32>
    %cst_26 = arith.constant 1.000000e+00 : f32
    %32 = vector.broadcast %cst_26 : f32 to vector<8x384xf32>
    %33 = arith.addf %32, %31 : vector<8x384xf32>
    %34 = arith.divf %32, %33 : vector<8x384xf32>
    %35 = vector.extract_strided_slice %34 {offsets = [0, 0], sizes = [8, 128], strides = [1, 1]} : vector<8x384xf32> to vector<8x128xf32>
    %36 = vector.extract_strided_slice %34 {offsets = [0, 128], sizes = [8, 128], strides = [1, 1]} : vector<8x384xf32> to vector<8x128xf32>
    %37 = vector.extract_strided_slice %34 {offsets = [0, 256], sizes = [8, 128], strides = [1, 1]} : vector<8x384xf32> to vector<8x128xf32>
    %38 = vector.extract_strided_slice %28 {offsets = [0, 384], sizes = [8, 128], strides = [1, 1]} : vector<8x512xf32> to vector<8x128xf32>
    %39 = math.tanh %38 : vector<8x128xf32>
    %40 = arith.mulf %36, %16 : vector<8x128xf32>
    %41 = arith.mulf %35, %39 : vector<8x128xf32>
    %42 = arith.addf %40, %41 : vector<8x128xf32>
    %43 = math.tanh %42 : vector<8x128xf32>
    %44 = arith.mulf %37, %43 : vector<8x128xf32>
    %45 = vector.shape_cast %24 : vector<8x1xi1> to vector<8x1xi1>
    %46 = vector.broadcast %45 : vector<8x1xi1> to vector<8x128xi1>
    %47 = arith.select %46, %44, %15 : vector<8x128xi1>, vector<8x128xf32>
    %48 = vector.shape_cast %24 : vector<8x1xi1> to vector<8x1xi1>
    %49 = vector.broadcast %48 : vector<8x1xi1> to vector<8x128xi1>
    %50 = arith.select %49, %42, %16 : vector<8x128xi1>, vector<8x128xf32>
    %cst_27 = arith.constant 0.000000e+00 : f32
    %51 = vector.shape_cast %24 : vector<8x1xi1> to vector<8x1xi1>
    %52 = vector.broadcast %51 : vector<8x1xi1> to vector<8x128xi1>
    %53 = vector.broadcast %cst_27 : f32 to vector<8x128xf32>
    %54 = arith.select %52, %44, %53 : vector<8x128xi1>, vector<8x128xf32>
    %55 = arith.index_cast %c0_i32_23 : i32 to index
    %c0_28 = arith.constant 0 : index
    %c0_29 = arith.constant 0 : index
    %56 = vector.load %arg6[%55, %c0_28, %c0_29] : memref<8x8x128xf32, #tpu.memory_space<vmem>>, vector<1x8x128xf32>
    %57 = vector.shape_cast %56 : vector<1x8x128xf32> to vector<8x128xf32>
    %58 = vector.shape_cast %54 : vector<8x128xf32> to vector<1x8x128xf32>
    tpu.vector_store %arg6[%55, %c0_28, %c0_29], %58 {strides = array<i32>} : memref<8x8x128xf32, #tpu.memory_space<vmem>>, vector<1x8x128xf32>,
    %c7_i32 = arith.constant 7 : i32
    %59 = arith.subi %c7_i32, %c0_i32_23 : i32
    %60 = arith.index_cast %59 : i32 to index
    %c0_30 = arith.constant 0 : index
    %c0_31 = arith.constant 0 : index
    %61 = vector.load %arg5[%60, %c0_30, %c0_31] : memref<8x8x512xf32, #tpu.memory_space<vmem>>, vector<1x8x512xf32>
    %62 = vector.shape_cast %61 : vector<1x8x512xf32> to vector<8x512xf32>
    %63 = arith.addi %14, %59 : i32
    %64 = vector.broadcast %63 : i32 to vector<8x1xi32>
    %65 = arith.cmpi slt, %64, %3 : vector<8x1xi32>
    %66 = vector.broadcast %7 : vector<1x512xf32> to vector<8x512xf32>
    %67 = arith.addf %62, %66 : vector<8x512xf32>
    %cst_32 = arith.constant dense<0.000000e+00> : vector<8x512xf32>
    %68 = tpu.matmul %17, %11, %cst_32 {dimension_numbers = #tpu.dot_dimension_numbers<[1], [0], [0], [1], [0, 0, 1, 1], [], []>} : vector<8x128xf32>, vector<128x512xf32>, vector<8x512xf32> -> vector<8x512xf32>
    %69 = arith.addf %67, %68 : vector<8x512xf32>
    %70 = vector.extract_strided_slice %69 {offsets = [0, 0], sizes = [8, 384], strides = [1, 1]} : vector<8x512xf32> to vector<8x384xf32>
    %71 = arith.negf %70 : vector<8x384xf32>
    %72 = math.exp %71 : vector<8x384xf32>
    %cst_33 = arith.constant 1.000000e+00 : f32
    %73 = vector.broadcast %cst_33 : f32 to vector<8x384xf32>
    %74 = arith.addf %73, %72 : vector<8x384xf32>
    %75 = arith.divf %73, %74 : vector<8x384xf32>
    %76 = vector.extract_strided_slice %75 {offsets = [0, 0], sizes = [8, 128], strides = [1, 1]} : vector<8x384xf32> to vector<8x128xf32>
    %77 = vector.extract_strided_slice %75 {offsets = [0, 128], sizes = [8, 128], strides = [1, 1]} : vector<8x384xf32> to vector<8x128xf32>
    %78 = vector.extract_strided_slice %75 {offsets = [0, 256], sizes = [8, 128], strides = [1, 1]} : vector<8x384xf32> to vector<8x128xf32>
    %79 = vector.extract_strided_slice %69 {offsets = [0, 384], sizes = [8, 128], strides = [1, 1]} : vector<8x512xf32> to vector<8x128xf32>
    %80 = math.tanh %79 : vector<8x128xf32>
    %81 = arith.mulf %77, %18 : vector<8x128xf32>
    %82 = arith.mulf %76, %80 : vector<8x128xf32>
    %83 = arith.addf %81, %82 : vector<8x128xf32>
    %84 = math.tanh %83 : vector<8x128xf32>
    %85 = arith.mulf %78, %84 : vector<8x128xf32>
    %86 = vector.shape_cast %65 : vector<8x1xi1> to vector<8x1xi1>
    %87 = vector.broadcast %86 : vector<8x1xi1> to vector<8x128xi1>
    %88 = arith.select %87, %85, %17 : vector<8x128xi1>, vector<8x128xf32>
    %89 = vector.shape_cast %65 : vector<8x1xi1> to vector<8x1xi1>
    %90 = vector.broadcast %89 : vector<8x1xi1> to vector<8x128xi1>
    %91 = arith.select %90, %83, %18 : vector<8x128xi1>, vector<8x128xf32>
    %cst_34 = arith.constant 0.000000e+00 : f32
    %92 = vector.shape_cast %65 : vector<8x1xi1> to vector<8x1xi1>
    %93 = vector.broadcast %92 : vector<8x1xi1> to vector<8x128xi1>
    %94 = vector.broadcast %cst_34 : f32 to vector<8x128xf32>
    %95 = arith.select %93, %85, %94 : vector<8x128xi1>, vector<8x128xf32>
    %96 = arith.index_cast %59 : i32 to index
    %c0_35 = arith.constant 0 : index
    %c0_36 = arith.constant 0 : index
    %97 = vector.load %arg7[%96, %c0_35, %c0_36] : memref<8x8x128xf32, #tpu.memory_space<vmem>>, vector<1x8x128xf32>
    %98 = vector.shape_cast %97 : vector<1x8x128xf32> to vector<8x128xf32>
    %99 = vector.shape_cast %95 : vector<8x128xf32> to vector<1x8x128xf32>
    tpu.vector_store %arg7[%96, %c0_35, %c0_36], %99 {strides = array<i32>} : memref<8x8x128xf32, #tpu.memory_space<vmem>>, vector<1x8x128xf32>,
    %c1_i32 = arith.constant 1 : i32
    %100 = arith.index_cast %c1_i32 : i32 to index
    %c0_37 = arith.constant 0 : index
    %c0_38 = arith.constant 0 : index
    %101 = vector.load %arg4[%100, %c0_37, %c0_38] : memref<8x8x512xf32, #tpu.memory_space<vmem>>, vector<1x8x512xf32>
    %102 = vector.shape_cast %101 : vector<1x8x512xf32> to vector<8x512xf32>
    %103 = arith.addi %12, %c1_i32 : i32
    %104 = vector.broadcast %103 : i32 to vector<8x1xi32>
    %105 = arith.cmpi slt, %104, %3 : vector<8x1xi32>
    %106 = vector.broadcast %5 : vector<1x512xf32> to vector<8x512xf32>
    %107 = arith.addf %102, %106 : vector<8x512xf32>
    %cst_39 = arith.constant dense<0.000000e+00> : vector<8x512xf32>
    %108 = tpu.matmul %47, %9, %cst_39 {dimension_numbers = #tpu.dot_dimension_numbers<[1], [0], [0], [1], [0, 0, 1, 1], [], []>} : vector<8x128xf32>, vector<128x512xf32>, vector<8x512xf32> -> vector<8x512xf32>
    %109 = arith.addf %107, %108 : vector<8x512xf32>
    %110 = vector.extract_strided_slice %109 {offsets = [0, 0], sizes = [8, 384], strides = [1, 1]} : vector<8x512xf32> to vector<8x384xf32>
    %111 = arith.negf %110 : vector<8x384xf32>
    %112 = math.exp %111 : vector<8x384xf32>
    %cst_40 = arith.constant 1.000000e+00 : f32
    %113 = vector.broadcast %cst_40 : f32 to vector<8x384xf32>
    %114 = arith.addf %113, %112 : vector<8x384xf32>
    %115 = arith.divf %113, %114 : vector<8x384xf32>
    %116 = vector.extract_strided_slice %115 {offsets = [0, 0], sizes = [8, 128], strides = [1, 1]} : vector<8x384xf32> to vector<8x128xf32>
    %117 = vector.extract_strided_slice %115 {offsets = [0, 128], sizes = [8, 128], strides = [1, 1]} : vector<8x384xf32> to vector<8x128xf32>
    %118 = vector.extract_strided_slice %115 {offsets = [0, 256], sizes = [8, 128], strides = [1, 1]} : vector<8x384xf32> to vector<8x128xf32>
    %119 = vector.extract_strided_slice %109 {offsets = [0, 384], sizes = [8, 128], strides = [1, 1]} : vector<8x512xf32> to vector<8x128xf32>
    %120 = math.tanh %119 : vector<8x128xf32>
    %121 = arith.mulf %117, %50 : vector<8x128xf32>
    %122 = arith.mulf %116, %120 : vector<8x128xf32>
    %123 = arith.addf %121, %122 : vector<8x128xf32>
    %124 = math.tanh %123 : vector<8x128xf32>
    %125 = arith.mulf %118, %124 : vector<8x128xf32>
    %126 = vector.shape_cast %105 : vector<8x1xi1> to vector<8x1xi1>
    %127 = vector.broadcast %126 : vector<8x1xi1> to vector<8x128xi1>
    %128 = arith.select %127, %125, %47 : vector<8x128xi1>, vector<8x128xf32>
    %129 = vector.shape_cast %105 : vector<8x1xi1> to vector<8x1xi1>
    %130 = vector.broadcast %129 : vector<8x1xi1> to vector<8x128xi1>
    %131 = arith.select %130, %123, %50 : vector<8x128xi1>, vector<8x128xf32>
    %cst_41 = arith.constant 0.000000e+00 : f32
    %132 = vector.shape_cast %105 : vector<8x1xi1> to vector<8x1xi1>
    %133 = vector.broadcast %132 : vector<8x1xi1> to vector<8x128xi1>
    %134 = vector.broadcast %cst_41 : f32 to vector<8x128xf32>
    %135 = arith.select %133, %125, %134 : vector<8x128xi1>, vector<8x128xf32>
    %136 = arith.index_cast %c1_i32 : i32 to index
    %c0_42 = arith.constant 0 : index
    %c0_43 = arith.constant 0 : index
    %137 = vector.load %arg6[%136, %c0_42, %c0_43] : memref<8x8x128xf32, #tpu.memory_space<vmem>>, vector<1x8x128xf32>
    %138 = vector.shape_cast %137 : vector<1x8x128xf32> to vector<8x128xf32>
    %139 = vector.shape_cast %135 : vector<8x128xf32> to vector<1x8x128xf32>
    tpu.vector_store %arg6[%136, %c0_42, %c0_43], %139 {strides = array<i32>} : memref<8x8x128xf32, #tpu.memory_space<vmem>>, vector<1x8x128xf32>,
    %c7_i32_44 = arith.constant 7 : i32
    %140 = arith.subi %c7_i32_44, %c1_i32 : i32
    %141 = arith.index_cast %140 : i32 to index
    %c0_45 = arith.constant 0 : index
    %c0_46 = arith.constant 0 : index
    %142 = vector.load %arg5[%141, %c0_45, %c0_46] : memref<8x8x512xf32, #tpu.memory_space<vmem>>, vector<1x8x512xf32>
    %143 = vector.shape_cast %142 : vector<1x8x512xf32> to vector<8x512xf32>
    %144 = arith.addi %14, %140 : i32
    %145 = vector.broadcast %144 : i32 to vector<8x1xi32>
    %146 = arith.cmpi slt, %145, %3 : vector<8x1xi32>
    %147 = vector.broadcast %7 : vector<1x512xf32> to vector<8x512xf32>
    %148 = arith.addf %143, %147 : vector<8x512xf32>
    %cst_47 = arith.constant dense<0.000000e+00> : vector<8x512xf32>
    %149 = tpu.matmul %88, %11, %cst_47 {dimension_numbers = #tpu.dot_dimension_numbers<[1], [0], [0], [1], [0, 0, 1, 1], [], []>} : vector<8x128xf32>, vector<128x512xf32>, vector<8x512xf32> -> vector<8x512xf32>
    %150 = arith.addf %148, %149 : vector<8x512xf32>
    %151 = vector.extract_strided_slice %150 {offsets = [0, 0], sizes = [8, 384], strides = [1, 1]} : vector<8x512xf32> to vector<8x384xf32>
    %152 = arith.negf %151 : vector<8x384xf32>
    %153 = math.exp %152 : vector<8x384xf32>
    %cst_48 = arith.constant 1.000000e+00 : f32
    %154 = vector.broadcast %cst_48 : f32 to vector<8x384xf32>
    %155 = arith.addf %154, %153 : vector<8x384xf32>
    %156 = arith.divf %154, %155 : vector<8x384xf32>
    %157 = vector.extract_strided_slice %156 {offsets = [0, 0], sizes = [8, 128], strides = [1, 1]} : vector<8x384xf32> to vector<8x128xf32>
    %158 = vector.extract_strided_slice %156 {offsets = [0, 128], sizes = [8, 128], strides = [1, 1]} : vector<8x384xf32> to vector<8x128xf32>
    %159 = vector.extract_strided_slice %156 {offsets = [0, 256], sizes = [8, 128], strides = [1, 1]} : vector<8x384xf32> to vector<8x128xf32>
    %160 = vector.extract_strided_slice %150 {offsets = [0, 384], sizes = [8, 128], strides = [1, 1]} : vector<8x512xf32> to vector<8x128xf32>
    %161 = math.tanh %160 : vector<8x128xf32>
    %162 = arith.mulf %158, %91 : vector<8x128xf32>
    %163 = arith.mulf %157, %161 : vector<8x128xf32>
    %164 = arith.addf %162, %163 : vector<8x128xf32>
    %165 = math.tanh %164 : vector<8x128xf32>
    %166 = arith.mulf %159, %165 : vector<8x128xf32>
    %167 = vector.shape_cast %146 : vector<8x1xi1> to vector<8x1xi1>
    %168 = vector.broadcast %167 : vector<8x1xi1> to vector<8x128xi1>
    %169 = arith.select %168, %166, %88 : vector<8x128xi1>, vector<8x128xf32>
    %170 = vector.shape_cast %146 : vector<8x1xi1> to vector<8x1xi1>
    %171 = vector.broadcast %170 : vector<8x1xi1> to vector<8x128xi1>
    %172 = arith.select %171, %164, %91 : vector<8x128xi1>, vector<8x128xf32>
    %cst_49 = arith.constant 0.000000e+00 : f32
    %173 = vector.shape_cast %146 : vector<8x1xi1> to vector<8x1xi1>
    %174 = vector.broadcast %173 : vector<8x1xi1> to vector<8x128xi1>
    %175 = vector.broadcast %cst_49 : f32 to vector<8x128xf32>
    %176 = arith.select %174, %166, %175 : vector<8x128xi1>, vector<8x128xf32>
    %177 = arith.index_cast %140 : i32 to index
    %c0_50 = arith.constant 0 : index
    %c0_51 = arith.constant 0 : index
    %178 = vector.load %arg7[%177, %c0_50, %c0_51] : memref<8x8x128xf32, #tpu.memory_space<vmem>>, vector<1x8x128xf32>
    %179 = vector.shape_cast %178 : vector<1x8x128xf32> to vector<8x128xf32>
    %180 = vector.shape_cast %176 : vector<8x128xf32> to vector<1x8x128xf32>
    tpu.vector_store %arg7[%177, %c0_50, %c0_51], %180 {strides = array<i32>} : memref<8x8x128xf32, #tpu.memory_space<vmem>>, vector<1x8x128xf32>,
    %c2_i32 = arith.constant 2 : i32
    %181 = arith.index_cast %c2_i32 : i32 to index
    %c0_52 = arith.constant 0 : index
    %c0_53 = arith.constant 0 : index
    %182 = vector.load %arg4[%181, %c0_52, %c0_53] : memref<8x8x512xf32, #tpu.memory_space<vmem>>, vector<1x8x512xf32>
    %183 = vector.shape_cast %182 : vector<1x8x512xf32> to vector<8x512xf32>
    %184 = arith.addi %12, %c2_i32 : i32
    %185 = vector.broadcast %184 : i32 to vector<8x1xi32>
    %186 = arith.cmpi slt, %185, %3 : vector<8x1xi32>
    %187 = vector.broadcast %5 : vector<1x512xf32> to vector<8x512xf32>
    %188 = arith.addf %183, %187 : vector<8x512xf32>
    %cst_54 = arith.constant dense<0.000000e+00> : vector<8x512xf32>
    %189 = tpu.matmul %128, %9, %cst_54 {dimension_numbers = #tpu.dot_dimension_numbers<[1], [0], [0], [1], [0, 0, 1, 1], [], []>} : vector<8x128xf32>, vector<128x512xf32>, vector<8x512xf32> -> vector<8x512xf32>
    %190 = arith.addf %188, %189 : vector<8x512xf32>
    %191 = vector.extract_strided_slice %190 {offsets = [0, 0], sizes = [8, 384], strides = [1, 1]} : vector<8x512xf32> to vector<8x384xf32>
    %192 = arith.negf %191 : vector<8x384xf32>
    %193 = math.exp %192 : vector<8x384xf32>
    %cst_55 = arith.constant 1.000000e+00 : f32
    %194 = vector.broadcast %cst_55 : f32 to vector<8x384xf32>
    %195 = arith.addf %194, %193 : vector<8x384xf32>
    %196 = arith.divf %194, %195 : vector<8x384xf32>
    %197 = vector.extract_strided_slice %196 {offsets = [0, 0], sizes = [8, 128], strides = [1, 1]} : vector<8x384xf32> to vector<8x128xf32>
    %198 = vector.extract_strided_slice %196 {offsets = [0, 128], sizes = [8, 128], strides = [1, 1]} : vector<8x384xf32> to vector<8x128xf32>
    %199 = vector.extract_strided_slice %196 {offsets = [0, 256], sizes = [8, 128], strides = [1, 1]} : vector<8x384xf32> to vector<8x128xf32>
    %200 = vector.extract_strided_slice %190 {offsets = [0, 384], sizes = [8, 128], strides = [1, 1]} : vector<8x512xf32> to vector<8x128xf32>
    %201 = math.tanh %200 : vector<8x128xf32>
    %202 = arith.mulf %198, %131 : vector<8x128xf32>
    %203 = arith.mulf %197, %201 : vector<8x128xf32>
    %204 = arith.addf %202, %203 : vector<8x128xf32>
    %205 = math.tanh %204 : vector<8x128xf32>
    %206 = arith.mulf %199, %205 : vector<8x128xf32>
    %207 = vector.shape_cast %186 : vector<8x1xi1> to vector<8x1xi1>
    %208 = vector.broadcast %207 : vector<8x1xi1> to vector<8x128xi1>
    %209 = arith.select %208, %206, %128 : vector<8x128xi1>, vector<8x128xf32>
    %210 = vector.shape_cast %186 : vector<8x1xi1> to vector<8x1xi1>
    %211 = vector.broadcast %210 : vector<8x1xi1> to vector<8x128xi1>
    %212 = arith.select %211, %204, %131 : vector<8x128xi1>, vector<8x128xf32>
    %cst_56 = arith.constant 0.000000e+00 : f32
    %213 = vector.shape_cast %186 : vector<8x1xi1> to vector<8x1xi1>
    %214 = vector.broadcast %213 : vector<8x1xi1> to vector<8x128xi1>
    %215 = vector.broadcast %cst_56 : f32 to vector<8x128xf32>
    %216 = arith.select %214, %206, %215 : vector<8x128xi1>, vector<8x128xf32>
    %217 = arith.index_cast %c2_i32 : i32 to index
    %c0_57 = arith.constant 0 : index
    %c0_58 = arith.constant 0 : index
    %218 = vector.load %arg6[%217, %c0_57, %c0_58] : memref<8x8x128xf32, #tpu.memory_space<vmem>>, vector<1x8x128xf32>
    %219 = vector.shape_cast %218 : vector<1x8x128xf32> to vector<8x128xf32>
    %220 = vector.shape_cast %216 : vector<8x128xf32> to vector<1x8x128xf32>
    tpu.vector_store %arg6[%217, %c0_57, %c0_58], %220 {strides = array<i32>} : memref<8x8x128xf32, #tpu.memory_space<vmem>>, vector<1x8x128xf32>,
    %c7_i32_59 = arith.constant 7 : i32
    %221 = arith.subi %c7_i32_59, %c2_i32 : i32
    %222 = arith.index_cast %221 : i32 to index
    %c0_60 = arith.constant 0 : index
    %c0_61 = arith.constant 0 : index
    %223 = vector.load %arg5[%222, %c0_60, %c0_61] : memref<8x8x512xf32, #tpu.memory_space<vmem>>, vector<1x8x512xf32>
    %224 = vector.shape_cast %223 : vector<1x8x512xf32> to vector<8x512xf32>
    %225 = arith.addi %14, %221 : i32
    %226 = vector.broadcast %225 : i32 to vector<8x1xi32>
    %227 = arith.cmpi slt, %226, %3 : vector<8x1xi32>
    %228 = vector.broadcast %7 : vector<1x512xf32> to vector<8x512xf32>
    %229 = arith.addf %224, %228 : vector<8x512xf32>
    %cst_62 = arith.constant dense<0.000000e+00> : vector<8x512xf32>
    %230 = tpu.matmul %169, %11, %cst_62 {dimension_numbers = #tpu.dot_dimension_numbers<[1], [0], [0], [1], [0, 0, 1, 1], [], []>} : vector<8x128xf32>, vector<128x512xf32>, vector<8x512xf32> -> vector<8x512xf32>
    %231 = arith.addf %229, %230 : vector<8x512xf32>
    %232 = vector.extract_strided_slice %231 {offsets = [0, 0], sizes = [8, 384], strides = [1, 1]} : vector<8x512xf32> to vector<8x384xf32>
    %233 = arith.negf %232 : vector<8x384xf32>
    %234 = math.exp %233 : vector<8x384xf32>
    %cst_63 = arith.constant 1.000000e+00 : f32
    %235 = vector.broadcast %cst_63 : f32 to vector<8x384xf32>
    %236 = arith.addf %235, %234 : vector<8x384xf32>
    %237 = arith.divf %235, %236 : vector<8x384xf32>
    %238 = vector.extract_strided_slice %237 {offsets = [0, 0], sizes = [8, 128], strides = [1, 1]} : vector<8x384xf32> to vector<8x128xf32>
    %239 = vector.extract_strided_slice %237 {offsets = [0, 128], sizes = [8, 128], strides = [1, 1]} : vector<8x384xf32> to vector<8x128xf32>
    %240 = vector.extract_strided_slice %237 {offsets = [0, 256], sizes = [8, 128], strides = [1, 1]} : vector<8x384xf32> to vector<8x128xf32>
    %241 = vector.extract_strided_slice %231 {offsets = [0, 384], sizes = [8, 128], strides = [1, 1]} : vector<8x512xf32> to vector<8x128xf32>
    %242 = math.tanh %241 : vector<8x128xf32>
    %243 = arith.mulf %239, %172 : vector<8x128xf32>
    %244 = arith.mulf %238, %242 : vector<8x128xf32>
    %245 = arith.addf %243, %244 : vector<8x128xf32>
    %246 = math.tanh %245 : vector<8x128xf32>
    %247 = arith.mulf %240, %246 : vector<8x128xf32>
    %248 = vector.shape_cast %227 : vector<8x1xi1> to vector<8x1xi1>
    %249 = vector.broadcast %248 : vector<8x1xi1> to vector<8x128xi1>
    %250 = arith.select %249, %247, %169 : vector<8x128xi1>, vector<8x128xf32>
    %251 = vector.shape_cast %227 : vector<8x1xi1> to vector<8x1xi1>
    %252 = vector.broadcast %251 : vector<8x1xi1> to vector<8x128xi1>
    %253 = arith.select %252, %245, %172 : vector<8x128xi1>, vector<8x128xf32>
    %cst_64 = arith.constant 0.000000e+00 : f32
    %254 = vector.shape_cast %227 : vector<8x1xi1> to vector<8x1xi1>
    %255 = vector.broadcast %254 : vector<8x1xi1> to vector<8x128xi1>
    %256 = vector.broadcast %cst_64 : f32 to vector<8x128xf32>
    %257 = arith.select %255, %247, %256 : vector<8x128xi1>, vector<8x128xf32>
    %258 = arith.index_cast %221 : i32 to index
    %c0_65 = arith.constant 0 : index
    %c0_66 = arith.constant 0 : index
    %259 = vector.load %arg7[%258, %c0_65, %c0_66] : memref<8x8x128xf32, #tpu.memory_space<vmem>>, vector<1x8x128xf32>
    %260 = vector.shape_cast %259 : vector<1x8x128xf32> to vector<8x128xf32>
    %261 = vector.shape_cast %257 : vector<8x128xf32> to vector<1x8x128xf32>
    tpu.vector_store %arg7[%258, %c0_65, %c0_66], %261 {strides = array<i32>} : memref<8x8x128xf32, #tpu.memory_space<vmem>>, vector<1x8x128xf32>,
    %c3_i32 = arith.constant 3 : i32
    %262 = arith.index_cast %c3_i32 : i32 to index
    %c0_67 = arith.constant 0 : index
    %c0_68 = arith.constant 0 : index
    %263 = vector.load %arg4[%262, %c0_67, %c0_68] : memref<8x8x512xf32, #tpu.memory_space<vmem>>, vector<1x8x512xf32>
    %264 = vector.shape_cast %263 : vector<1x8x512xf32> to vector<8x512xf32>
    %265 = arith.addi %12, %c3_i32 : i32
    %266 = vector.broadcast %265 : i32 to vector<8x1xi32>
    %267 = arith.cmpi slt, %266, %3 : vector<8x1xi32>
    %268 = vector.broadcast %5 : vector<1x512xf32> to vector<8x512xf32>
    %269 = arith.addf %264, %268 : vector<8x512xf32>
    %cst_69 = arith.constant dense<0.000000e+00> : vector<8x512xf32>
    %270 = tpu.matmul %209, %9, %cst_69 {dimension_numbers = #tpu.dot_dimension_numbers<[1], [0], [0], [1], [0, 0, 1, 1], [], []>} : vector<8x128xf32>, vector<128x512xf32>, vector<8x512xf32> -> vector<8x512xf32>
    %271 = arith.addf %269, %270 : vector<8x512xf32>
    %272 = vector.extract_strided_slice %271 {offsets = [0, 0], sizes = [8, 384], strides = [1, 1]} : vector<8x512xf32> to vector<8x384xf32>
    %273 = arith.negf %272 : vector<8x384xf32>
    %274 = math.exp %273 : vector<8x384xf32>
    %cst_70 = arith.constant 1.000000e+00 : f32
    %275 = vector.broadcast %cst_70 : f32 to vector<8x384xf32>
    %276 = arith.addf %275, %274 : vector<8x384xf32>
    %277 = arith.divf %275, %276 : vector<8x384xf32>
    %278 = vector.extract_strided_slice %277 {offsets = [0, 0], sizes = [8, 128], strides = [1, 1]} : vector<8x384xf32> to vector<8x128xf32>
    %279 = vector.extract_strided_slice %277 {offsets = [0, 128], sizes = [8, 128], strides = [1, 1]} : vector<8x384xf32> to vector<8x128xf32>
    %280 = vector.extract_strided_slice %277 {offsets = [0, 256], sizes = [8, 128], strides = [1, 1]} : vector<8x384xf32> to vector<8x128xf32>
    %281 = vector.extract_strided_slice %271 {offsets = [0, 384], sizes = [8, 128], strides = [1, 1]} : vector<8x512xf32> to vector<8x128xf32>
    %282 = math.tanh %281 : vector<8x128xf32>
    %283 = arith.mulf %279, %212 : vector<8x128xf32>
    %284 = arith.mulf %278, %282 : vector<8x128xf32>
    %285 = arith.addf %283, %284 : vector<8x128xf32>
    %286 = math.tanh %285 : vector<8x128xf32>
    %287 = arith.mulf %280, %286 : vector<8x128xf32>
    %288 = vector.shape_cast %267 : vector<8x1xi1> to vector<8x1xi1>
    %289 = vector.broadcast %288 : vector<8x1xi1> to vector<8x128xi1>
    %290 = arith.select %289, %287, %209 : vector<8x128xi1>, vector<8x128xf32>
    %291 = vector.shape_cast %267 : vector<8x1xi1> to vector<8x1xi1>
    %292 = vector.broadcast %291 : vector<8x1xi1> to vector<8x128xi1>
    %293 = arith.select %292, %285, %212 : vector<8x128xi1>, vector<8x128xf32>
    %cst_71 = arith.constant 0.000000e+00 : f32
    %294 = vector.shape_cast %267 : vector<8x1xi1> to vector<8x1xi1>
    %295 = vector.broadcast %294 : vector<8x1xi1> to vector<8x128xi1>
    %296 = vector.broadcast %cst_71 : f32 to vector<8x128xf32>
    %297 = arith.select %295, %287, %296 : vector<8x128xi1>, vector<8x128xf32>
    %298 = arith.index_cast %c3_i32 : i32 to index
    %c0_72 = arith.constant 0 : index
    %c0_73 = arith.constant 0 : index
    %299 = vector.load %arg6[%298, %c0_72, %c0_73] : memref<8x8x128xf32, #tpu.memory_space<vmem>>, vector<1x8x128xf32>
    %300 = vector.shape_cast %299 : vector<1x8x128xf32> to vector<8x128xf32>
    %301 = vector.shape_cast %297 : vector<8x128xf32> to vector<1x8x128xf32>
    tpu.vector_store %arg6[%298, %c0_72, %c0_73], %301 {strides = array<i32>} : memref<8x8x128xf32, #tpu.memory_space<vmem>>, vector<1x8x128xf32>,
    %c7_i32_74 = arith.constant 7 : i32
    %302 = arith.subi %c7_i32_74, %c3_i32 : i32
    %303 = arith.index_cast %302 : i32 to index
    %c0_75 = arith.constant 0 : index
    %c0_76 = arith.constant 0 : index
    %304 = vector.load %arg5[%303, %c0_75, %c0_76] : memref<8x8x512xf32, #tpu.memory_space<vmem>>, vector<1x8x512xf32>
    %305 = vector.shape_cast %304 : vector<1x8x512xf32> to vector<8x512xf32>
    %306 = arith.addi %14, %302 : i32
    %307 = vector.broadcast %306 : i32 to vector<8x1xi32>
    %308 = arith.cmpi slt, %307, %3 : vector<8x1xi32>
    %309 = vector.broadcast %7 : vector<1x512xf32> to vector<8x512xf32>
    %310 = arith.addf %305, %309 : vector<8x512xf32>
    %cst_77 = arith.constant dense<0.000000e+00> : vector<8x512xf32>
    %311 = tpu.matmul %250, %11, %cst_77 {dimension_numbers = #tpu.dot_dimension_numbers<[1], [0], [0], [1], [0, 0, 1, 1], [], []>} : vector<8x128xf32>, vector<128x512xf32>, vector<8x512xf32> -> vector<8x512xf32>
    %312 = arith.addf %310, %311 : vector<8x512xf32>
    %313 = vector.extract_strided_slice %312 {offsets = [0, 0], sizes = [8, 384], strides = [1, 1]} : vector<8x512xf32> to vector<8x384xf32>
    %314 = arith.negf %313 : vector<8x384xf32>
    %315 = math.exp %314 : vector<8x384xf32>
    %cst_78 = arith.constant 1.000000e+00 : f32
    %316 = vector.broadcast %cst_78 : f32 to vector<8x384xf32>
    %317 = arith.addf %316, %315 : vector<8x384xf32>
    %318 = arith.divf %316, %317 : vector<8x384xf32>
    %319 = vector.extract_strided_slice %318 {offsets = [0, 0], sizes = [8, 128], strides = [1, 1]} : vector<8x384xf32> to vector<8x128xf32>
    %320 = vector.extract_strided_slice %318 {offsets = [0, 128], sizes = [8, 128], strides = [1, 1]} : vector<8x384xf32> to vector<8x128xf32>
    %321 = vector.extract_strided_slice %318 {offsets = [0, 256], sizes = [8, 128], strides = [1, 1]} : vector<8x384xf32> to vector<8x128xf32>
    %322 = vector.extract_strided_slice %312 {offsets = [0, 384], sizes = [8, 128], strides = [1, 1]} : vector<8x512xf32> to vector<8x128xf32>
    %323 = math.tanh %322 : vector<8x128xf32>
    %324 = arith.mulf %320, %253 : vector<8x128xf32>
    %325 = arith.mulf %319, %323 : vector<8x128xf32>
    %326 = arith.addf %324, %325 : vector<8x128xf32>
    %327 = math.tanh %326 : vector<8x128xf32>
    %328 = arith.mulf %321, %327 : vector<8x128xf32>
    %329 = vector.shape_cast %308 : vector<8x1xi1> to vector<8x1xi1>
    %330 = vector.broadcast %329 : vector<8x1xi1> to vector<8x128xi1>
    %331 = arith.select %330, %328, %250 : vector<8x128xi1>, vector<8x128xf32>
    %332 = vector.shape_cast %308 : vector<8x1xi1> to vector<8x1xi1>
    %333 = vector.broadcast %332 : vector<8x1xi1> to vector<8x128xi1>
    %334 = arith.select %333, %326, %253 : vector<8x128xi1>, vector<8x128xf32>
    %cst_79 = arith.constant 0.000000e+00 : f32
    %335 = vector.shape_cast %308 : vector<8x1xi1> to vector<8x1xi1>
    %336 = vector.broadcast %335 : vector<8x1xi1> to vector<8x128xi1>
    %337 = vector.broadcast %cst_79 : f32 to vector<8x128xf32>
    %338 = arith.select %336, %328, %337 : vector<8x128xi1>, vector<8x128xf32>
    %339 = arith.index_cast %302 : i32 to index
    %c0_80 = arith.constant 0 : index
    %c0_81 = arith.constant 0 : index
    %340 = vector.load %arg7[%339, %c0_80, %c0_81] : memref<8x8x128xf32, #tpu.memory_space<vmem>>, vector<1x8x128xf32>
    %341 = vector.shape_cast %340 : vector<1x8x128xf32> to vector<8x128xf32>
    %342 = vector.shape_cast %338 : vector<8x128xf32> to vector<1x8x128xf32>
    tpu.vector_store %arg7[%339, %c0_80, %c0_81], %342 {strides = array<i32>} : memref<8x8x128xf32, #tpu.memory_space<vmem>>, vector<1x8x128xf32>,
    %c4_i32 = arith.constant 4 : i32
    %343 = arith.index_cast %c4_i32 : i32 to index
    %c0_82 = arith.constant 0 : index
    %c0_83 = arith.constant 0 : index
    %344 = vector.load %arg4[%343, %c0_82, %c0_83] : memref<8x8x512xf32, #tpu.memory_space<vmem>>, vector<1x8x512xf32>
    %345 = vector.shape_cast %344 : vector<1x8x512xf32> to vector<8x512xf32>
    %346 = arith.addi %12, %c4_i32 : i32
    %347 = vector.broadcast %346 : i32 to vector<8x1xi32>
    %348 = arith.cmpi slt, %347, %3 : vector<8x1xi32>
    %349 = vector.broadcast %5 : vector<1x512xf32> to vector<8x512xf32>
    %350 = arith.addf %345, %349 : vector<8x512xf32>
    %cst_84 = arith.constant dense<0.000000e+00> : vector<8x512xf32>
    %351 = tpu.matmul %290, %9, %cst_84 {dimension_numbers = #tpu.dot_dimension_numbers<[1], [0], [0], [1], [0, 0, 1, 1], [], []>} : vector<8x128xf32>, vector<128x512xf32>, vector<8x512xf32> -> vector<8x512xf32>
    %352 = arith.addf %350, %351 : vector<8x512xf32>
    %353 = vector.extract_strided_slice %352 {offsets = [0, 0], sizes = [8, 384], strides = [1, 1]} : vector<8x512xf32> to vector<8x384xf32>
    %354 = arith.negf %353 : vector<8x384xf32>
    %355 = math.exp %354 : vector<8x384xf32>
    %cst_85 = arith.constant 1.000000e+00 : f32
    %356 = vector.broadcast %cst_85 : f32 to vector<8x384xf32>
    %357 = arith.addf %356, %355 : vector<8x384xf32>
    %358 = arith.divf %356, %357 : vector<8x384xf32>
    %359 = vector.extract_strided_slice %358 {offsets = [0, 0], sizes = [8, 128], strides = [1, 1]} : vector<8x384xf32> to vector<8x128xf32>
    %360 = vector.extract_strided_slice %358 {offsets = [0, 128], sizes = [8, 128], strides = [1, 1]} : vector<8x384xf32> to vector<8x128xf32>
    %361 = vector.extract_strided_slice %358 {offsets = [0, 256], sizes = [8, 128], strides = [1, 1]} : vector<8x384xf32> to vector<8x128xf32>
    %362 = vector.extract_strided_slice %352 {offsets = [0, 384], sizes = [8, 128], strides = [1, 1]} : vector<8x512xf32> to vector<8x128xf32>
    %363 = math.tanh %362 : vector<8x128xf32>
    %364 = arith.mulf %360, %293 : vector<8x128xf32>
    %365 = arith.mulf %359, %363 : vector<8x128xf32>
    %366 = arith.addf %364, %365 : vector<8x128xf32>
    %367 = math.tanh %366 : vector<8x128xf32>
    %368 = arith.mulf %361, %367 : vector<8x128xf32>
    %369 = vector.shape_cast %348 : vector<8x1xi1> to vector<8x1xi1>
    %370 = vector.broadcast %369 : vector<8x1xi1> to vector<8x128xi1>
    %371 = arith.select %370, %368, %290 : vector<8x128xi1>, vector<8x128xf32>
    %372 = vector.shape_cast %348 : vector<8x1xi1> to vector<8x1xi1>
    %373 = vector.broadcast %372 : vector<8x1xi1> to vector<8x128xi1>
    %374 = arith.select %373, %366, %293 : vector<8x128xi1>, vector<8x128xf32>
    %cst_86 = arith.constant 0.000000e+00 : f32
    %375 = vector.shape_cast %348 : vector<8x1xi1> to vector<8x1xi1>
    %376 = vector.broadcast %375 : vector<8x1xi1> to vector<8x128xi1>
    %377 = vector.broadcast %cst_86 : f32 to vector<8x128xf32>
    %378 = arith.select %376, %368, %377 : vector<8x128xi1>, vector<8x128xf32>
    %379 = arith.index_cast %c4_i32 : i32 to index
    %c0_87 = arith.constant 0 : index
    %c0_88 = arith.constant 0 : index
    %380 = vector.load %arg6[%379, %c0_87, %c0_88] : memref<8x8x128xf32, #tpu.memory_space<vmem>>, vector<1x8x128xf32>
    %381 = vector.shape_cast %380 : vector<1x8x128xf32> to vector<8x128xf32>
    %382 = vector.shape_cast %378 : vector<8x128xf32> to vector<1x8x128xf32>
    tpu.vector_store %arg6[%379, %c0_87, %c0_88], %382 {strides = array<i32>} : memref<8x8x128xf32, #tpu.memory_space<vmem>>, vector<1x8x128xf32>,
    %c7_i32_89 = arith.constant 7 : i32
    %383 = arith.subi %c7_i32_89, %c4_i32 : i32
    %384 = arith.index_cast %383 : i32 to index
    %c0_90 = arith.constant 0 : index
    %c0_91 = arith.constant 0 : index
    %385 = vector.load %arg5[%384, %c0_90, %c0_91] : memref<8x8x512xf32, #tpu.memory_space<vmem>>, vector<1x8x512xf32>
    %386 = vector.shape_cast %385 : vector<1x8x512xf32> to vector<8x512xf32>
    %387 = arith.addi %14, %383 : i32
    %388 = vector.broadcast %387 : i32 to vector<8x1xi32>
    %389 = arith.cmpi slt, %388, %3 : vector<8x1xi32>
    %390 = vector.broadcast %7 : vector<1x512xf32> to vector<8x512xf32>
    %391 = arith.addf %386, %390 : vector<8x512xf32>
    %cst_92 = arith.constant dense<0.000000e+00> : vector<8x512xf32>
    %392 = tpu.matmul %331, %11, %cst_92 {dimension_numbers = #tpu.dot_dimension_numbers<[1], [0], [0], [1], [0, 0, 1, 1], [], []>} : vector<8x128xf32>, vector<128x512xf32>, vector<8x512xf32> -> vector<8x512xf32>
    %393 = arith.addf %391, %392 : vector<8x512xf32>
    %394 = vector.extract_strided_slice %393 {offsets = [0, 0], sizes = [8, 384], strides = [1, 1]} : vector<8x512xf32> to vector<8x384xf32>
    %395 = arith.negf %394 : vector<8x384xf32>
    %396 = math.exp %395 : vector<8x384xf32>
    %cst_93 = arith.constant 1.000000e+00 : f32
    %397 = vector.broadcast %cst_93 : f32 to vector<8x384xf32>
    %398 = arith.addf %397, %396 : vector<8x384xf32>
    %399 = arith.divf %397, %398 : vector<8x384xf32>
    %400 = vector.extract_strided_slice %399 {offsets = [0, 0], sizes = [8, 128], strides = [1, 1]} : vector<8x384xf32> to vector<8x128xf32>
    %401 = vector.extract_strided_slice %399 {offsets = [0, 128], sizes = [8, 128], strides = [1, 1]} : vector<8x384xf32> to vector<8x128xf32>
    %402 = vector.extract_strided_slice %399 {offsets = [0, 256], sizes = [8, 128], strides = [1, 1]} : vector<8x384xf32> to vector<8x128xf32>
    %403 = vector.extract_strided_slice %393 {offsets = [0, 384], sizes = [8, 128], strides = [1, 1]} : vector<8x512xf32> to vector<8x128xf32>
    %404 = math.tanh %403 : vector<8x128xf32>
    %405 = arith.mulf %401, %334 : vector<8x128xf32>
    %406 = arith.mulf %400, %404 : vector<8x128xf32>
    %407 = arith.addf %405, %406 : vector<8x128xf32>
    %408 = math.tanh %407 : vector<8x128xf32>
    %409 = arith.mulf %402, %408 : vector<8x128xf32>
    %410 = vector.shape_cast %389 : vector<8x1xi1> to vector<8x1xi1>
    %411 = vector.broadcast %410 : vector<8x1xi1> to vector<8x128xi1>
    %412 = arith.select %411, %409, %331 : vector<8x128xi1>, vector<8x128xf32>
    %413 = vector.shape_cast %389 : vector<8x1xi1> to vector<8x1xi1>
    %414 = vector.broadcast %413 : vector<8x1xi1> to vector<8x128xi1>
    %415 = arith.select %414, %407, %334 : vector<8x128xi1>, vector<8x128xf32>
    %cst_94 = arith.constant 0.000000e+00 : f32
    %416 = vector.shape_cast %389 : vector<8x1xi1> to vector<8x1xi1>
    %417 = vector.broadcast %416 : vector<8x1xi1> to vector<8x128xi1>
    %418 = vector.broadcast %cst_94 : f32 to vector<8x128xf32>
    %419 = arith.select %417, %409, %418 : vector<8x128xi1>, vector<8x128xf32>
    %420 = arith.index_cast %383 : i32 to index
    %c0_95 = arith.constant 0 : index
    %c0_96 = arith.constant 0 : index
    %421 = vector.load %arg7[%420, %c0_95, %c0_96] : memref<8x8x128xf32, #tpu.memory_space<vmem>>, vector<1x8x128xf32>
    %422 = vector.shape_cast %421 : vector<1x8x128xf32> to vector<8x128xf32>
    %423 = vector.shape_cast %419 : vector<8x128xf32> to vector<1x8x128xf32>
    tpu.vector_store %arg7[%420, %c0_95, %c0_96], %423 {strides = array<i32>} : memref<8x8x128xf32, #tpu.memory_space<vmem>>, vector<1x8x128xf32>,
    %c5_i32 = arith.constant 5 : i32
    %424 = arith.index_cast %c5_i32 : i32 to index
    %c0_97 = arith.constant 0 : index
    %c0_98 = arith.constant 0 : index
    %425 = vector.load %arg4[%424, %c0_97, %c0_98] : memref<8x8x512xf32, #tpu.memory_space<vmem>>, vector<1x8x512xf32>
    %426 = vector.shape_cast %425 : vector<1x8x512xf32> to vector<8x512xf32>
    %427 = arith.addi %12, %c5_i32 : i32
    %428 = vector.broadcast %427 : i32 to vector<8x1xi32>
    %429 = arith.cmpi slt, %428, %3 : vector<8x1xi32>
    %430 = vector.broadcast %5 : vector<1x512xf32> to vector<8x512xf32>
    %431 = arith.addf %426, %430 : vector<8x512xf32>
    %cst_99 = arith.constant dense<0.000000e+00> : vector<8x512xf32>
    %432 = tpu.matmul %371, %9, %cst_99 {dimension_numbers = #tpu.dot_dimension_numbers<[1], [0], [0], [1], [0, 0, 1, 1], [], []>} : vector<8x128xf32>, vector<128x512xf32>, vector<8x512xf32> -> vector<8x512xf32>
    %433 = arith.addf %431, %432 : vector<8x512xf32>
    %434 = vector.extract_strided_slice %433 {offsets = [0, 0], sizes = [8, 384], strides = [1, 1]} : vector<8x512xf32> to vector<8x384xf32>
    %435 = arith.negf %434 : vector<8x384xf32>
    %436 = math.exp %435 : vector<8x384xf32>
    %cst_100 = arith.constant 1.000000e+00 : f32
    %437 = vector.broadcast %cst_100 : f32 to vector<8x384xf32>
    %438 = arith.addf %437, %436 : vector<8x384xf32>
    %439 = arith.divf %437, %438 : vector<8x384xf32>
    %440 = vector.extract_strided_slice %439 {offsets = [0, 0], sizes = [8, 128], strides = [1, 1]} : vector<8x384xf32> to vector<8x128xf32>
    %441 = vector.extract_strided_slice %439 {offsets = [0, 128], sizes = [8, 128], strides = [1, 1]} : vector<8x384xf32> to vector<8x128xf32>
    %442 = vector.extract_strided_slice %439 {offsets = [0, 256], sizes = [8, 128], strides = [1, 1]} : vector<8x384xf32> to vector<8x128xf32>
    %443 = vector.extract_strided_slice %433 {offsets = [0, 384], sizes = [8, 128], strides = [1, 1]} : vector<8x512xf32> to vector<8x128xf32>
    %444 = math.tanh %443 : vector<8x128xf32>
    %445 = arith.mulf %441, %374 : vector<8x128xf32>
    %446 = arith.mulf %440, %444 : vector<8x128xf32>
    %447 = arith.addf %445, %446 : vector<8x128xf32>
    %448 = math.tanh %447 : vector<8x128xf32>
    %449 = arith.mulf %442, %448 : vector<8x128xf32>
    %450 = vector.shape_cast %429 : vector<8x1xi1> to vector<8x1xi1>
    %451 = vector.broadcast %450 : vector<8x1xi1> to vector<8x128xi1>
    %452 = arith.select %451, %449, %371 : vector<8x128xi1>, vector<8x128xf32>
    %453 = vector.shape_cast %429 : vector<8x1xi1> to vector<8x1xi1>
    %454 = vector.broadcast %453 : vector<8x1xi1> to vector<8x128xi1>
    %455 = arith.select %454, %447, %374 : vector<8x128xi1>, vector<8x128xf32>
    %cst_101 = arith.constant 0.000000e+00 : f32
    %456 = vector.shape_cast %429 : vector<8x1xi1> to vector<8x1xi1>
    %457 = vector.broadcast %456 : vector<8x1xi1> to vector<8x128xi1>
    %458 = vector.broadcast %cst_101 : f32 to vector<8x128xf32>
    %459 = arith.select %457, %449, %458 : vector<8x128xi1>, vector<8x128xf32>
    %460 = arith.index_cast %c5_i32 : i32 to index
    %c0_102 = arith.constant 0 : index
    %c0_103 = arith.constant 0 : index
    %461 = vector.load %arg6[%460, %c0_102, %c0_103] : memref<8x8x128xf32, #tpu.memory_space<vmem>>, vector<1x8x128xf32>
    %462 = vector.shape_cast %461 : vector<1x8x128xf32> to vector<8x128xf32>
    %463 = vector.shape_cast %459 : vector<8x128xf32> to vector<1x8x128xf32>
    tpu.vector_store %arg6[%460, %c0_102, %c0_103], %463 {strides = array<i32>} : memref<8x8x128xf32, #tpu.memory_space<vmem>>, vector<1x8x128xf32>,
    %c7_i32_104 = arith.constant 7 : i32
    %464 = arith.subi %c7_i32_104, %c5_i32 : i32
    %465 = arith.index_cast %464 : i32 to index
    %c0_105 = arith.constant 0 : index
    %c0_106 = arith.constant 0 : index
    %466 = vector.load %arg5[%465, %c0_105, %c0_106] : memref<8x8x512xf32, #tpu.memory_space<vmem>>, vector<1x8x512xf32>
    %467 = vector.shape_cast %466 : vector<1x8x512xf32> to vector<8x512xf32>
    %468 = arith.addi %14, %464 : i32
    %469 = vector.broadcast %468 : i32 to vector<8x1xi32>
    %470 = arith.cmpi slt, %469, %3 : vector<8x1xi32>
    %471 = vector.broadcast %7 : vector<1x512xf32> to vector<8x512xf32>
    %472 = arith.addf %467, %471 : vector<8x512xf32>
    %cst_107 = arith.constant dense<0.000000e+00> : vector<8x512xf32>
    %473 = tpu.matmul %412, %11, %cst_107 {dimension_numbers = #tpu.dot_dimension_numbers<[1], [0], [0], [1], [0, 0, 1, 1], [], []>} : vector<8x128xf32>, vector<128x512xf32>, vector<8x512xf32> -> vector<8x512xf32>
    %474 = arith.addf %472, %473 : vector<8x512xf32>
    %475 = vector.extract_strided_slice %474 {offsets = [0, 0], sizes = [8, 384], strides = [1, 1]} : vector<8x512xf32> to vector<8x384xf32>
    %476 = arith.negf %475 : vector<8x384xf32>
    %477 = math.exp %476 : vector<8x384xf32>
    %cst_108 = arith.constant 1.000000e+00 : f32
    %478 = vector.broadcast %cst_108 : f32 to vector<8x384xf32>
    %479 = arith.addf %478, %477 : vector<8x384xf32>
    %480 = arith.divf %478, %479 : vector<8x384xf32>
    %481 = vector.extract_strided_slice %480 {offsets = [0, 0], sizes = [8, 128], strides = [1, 1]} : vector<8x384xf32> to vector<8x128xf32>
    %482 = vector.extract_strided_slice %480 {offsets = [0, 128], sizes = [8, 128], strides = [1, 1]} : vector<8x384xf32> to vector<8x128xf32>
    %483 = vector.extract_strided_slice %480 {offsets = [0, 256], sizes = [8, 128], strides = [1, 1]} : vector<8x384xf32> to vector<8x128xf32>
    %484 = vector.extract_strided_slice %474 {offsets = [0, 384], sizes = [8, 128], strides = [1, 1]} : vector<8x512xf32> to vector<8x128xf32>
    %485 = math.tanh %484 : vector<8x128xf32>
    %486 = arith.mulf %482, %415 : vector<8x128xf32>
    %487 = arith.mulf %481, %485 : vector<8x128xf32>
    %488 = arith.addf %486, %487 : vector<8x128xf32>
    %489 = math.tanh %488 : vector<8x128xf32>
    %490 = arith.mulf %483, %489 : vector<8x128xf32>
    %491 = vector.shape_cast %470 : vector<8x1xi1> to vector<8x1xi1>
    %492 = vector.broadcast %491 : vector<8x1xi1> to vector<8x128xi1>
    %493 = arith.select %492, %490, %412 : vector<8x128xi1>, vector<8x128xf32>
    %494 = vector.shape_cast %470 : vector<8x1xi1> to vector<8x1xi1>
    %495 = vector.broadcast %494 : vector<8x1xi1> to vector<8x128xi1>
    %496 = arith.select %495, %488, %415 : vector<8x128xi1>, vector<8x128xf32>
    %cst_109 = arith.constant 0.000000e+00 : f32
    %497 = vector.shape_cast %470 : vector<8x1xi1> to vector<8x1xi1>
    %498 = vector.broadcast %497 : vector<8x1xi1> to vector<8x128xi1>
    %499 = vector.broadcast %cst_109 : f32 to vector<8x128xf32>
    %500 = arith.select %498, %490, %499 : vector<8x128xi1>, vector<8x128xf32>
    %501 = arith.index_cast %464 : i32 to index
    %c0_110 = arith.constant 0 : index
    %c0_111 = arith.constant 0 : index
    %502 = vector.load %arg7[%501, %c0_110, %c0_111] : memref<8x8x128xf32, #tpu.memory_space<vmem>>, vector<1x8x128xf32>
    %503 = vector.shape_cast %502 : vector<1x8x128xf32> to vector<8x128xf32>
    %504 = vector.shape_cast %500 : vector<8x128xf32> to vector<1x8x128xf32>
    tpu.vector_store %arg7[%501, %c0_110, %c0_111], %504 {strides = array<i32>} : memref<8x8x128xf32, #tpu.memory_space<vmem>>, vector<1x8x128xf32>,
    %c6_i32 = arith.constant 6 : i32
    %505 = arith.index_cast %c6_i32 : i32 to index
    %c0_112 = arith.constant 0 : index
    %c0_113 = arith.constant 0 : index
    %506 = vector.load %arg4[%505, %c0_112, %c0_113] : memref<8x8x512xf32, #tpu.memory_space<vmem>>, vector<1x8x512xf32>
    %507 = vector.shape_cast %506 : vector<1x8x512xf32> to vector<8x512xf32>
    %508 = arith.addi %12, %c6_i32 : i32
    %509 = vector.broadcast %508 : i32 to vector<8x1xi32>
    %510 = arith.cmpi slt, %509, %3 : vector<8x1xi32>
    %511 = vector.broadcast %5 : vector<1x512xf32> to vector<8x512xf32>
    %512 = arith.addf %507, %511 : vector<8x512xf32>
    %cst_114 = arith.constant dense<0.000000e+00> : vector<8x512xf32>
    %513 = tpu.matmul %452, %9, %cst_114 {dimension_numbers = #tpu.dot_dimension_numbers<[1], [0], [0], [1], [0, 0, 1, 1], [], []>} : vector<8x128xf32>, vector<128x512xf32>, vector<8x512xf32> -> vector<8x512xf32>
    %514 = arith.addf %512, %513 : vector<8x512xf32>
    %515 = vector.extract_strided_slice %514 {offsets = [0, 0], sizes = [8, 384], strides = [1, 1]} : vector<8x512xf32> to vector<8x384xf32>
    %516 = arith.negf %515 : vector<8x384xf32>
    %517 = math.exp %516 : vector<8x384xf32>
    %cst_115 = arith.constant 1.000000e+00 : f32
    %518 = vector.broadcast %cst_115 : f32 to vector<8x384xf32>
    %519 = arith.addf %518, %517 : vector<8x384xf32>
    %520 = arith.divf %518, %519 : vector<8x384xf32>
    %521 = vector.extract_strided_slice %520 {offsets = [0, 0], sizes = [8, 128], strides = [1, 1]} : vector<8x384xf32> to vector<8x128xf32>
    %522 = vector.extract_strided_slice %520 {offsets = [0, 128], sizes = [8, 128], strides = [1, 1]} : vector<8x384xf32> to vector<8x128xf32>
    %523 = vector.extract_strided_slice %520 {offsets = [0, 256], sizes = [8, 128], strides = [1, 1]} : vector<8x384xf32> to vector<8x128xf32>
    %524 = vector.extract_strided_slice %514 {offsets = [0, 384], sizes = [8, 128], strides = [1, 1]} : vector<8x512xf32> to vector<8x128xf32>
    %525 = math.tanh %524 : vector<8x128xf32>
    %526 = arith.mulf %522, %455 : vector<8x128xf32>
    %527 = arith.mulf %521, %525 : vector<8x128xf32>
    %528 = arith.addf %526, %527 : vector<8x128xf32>
    %529 = math.tanh %528 : vector<8x128xf32>
    %530 = arith.mulf %523, %529 : vector<8x128xf32>
    %531 = vector.shape_cast %510 : vector<8x1xi1> to vector<8x1xi1>
    %532 = vector.broadcast %531 : vector<8x1xi1> to vector<8x128xi1>
    %533 = arith.select %532, %530, %452 : vector<8x128xi1>, vector<8x128xf32>
    %534 = vector.shape_cast %510 : vector<8x1xi1> to vector<8x1xi1>
    %535 = vector.broadcast %534 : vector<8x1xi1> to vector<8x128xi1>
    %536 = arith.select %535, %528, %455 : vector<8x128xi1>, vector<8x128xf32>
    %cst_116 = arith.constant 0.000000e+00 : f32
    %537 = vector.shape_cast %510 : vector<8x1xi1> to vector<8x1xi1>
    %538 = vector.broadcast %537 : vector<8x1xi1> to vector<8x128xi1>
    %539 = vector.broadcast %cst_116 : f32 to vector<8x128xf32>
    %540 = arith.select %538, %530, %539 : vector<8x128xi1>, vector<8x128xf32>
    %541 = arith.index_cast %c6_i32 : i32 to index
    %c0_117 = arith.constant 0 : index
    %c0_118 = arith.constant 0 : index
    %542 = vector.load %arg6[%541, %c0_117, %c0_118] : memref<8x8x128xf32, #tpu.memory_space<vmem>>, vector<1x8x128xf32>
    %543 = vector.shape_cast %542 : vector<1x8x128xf32> to vector<8x128xf32>
    %544 = vector.shape_cast %540 : vector<8x128xf32> to vector<1x8x128xf32>
    tpu.vector_store %arg6[%541, %c0_117, %c0_118], %544 {strides = array<i32>} : memref<8x8x128xf32, #tpu.memory_space<vmem>>, vector<1x8x128xf32>,
    %c7_i32_119 = arith.constant 7 : i32
    %545 = arith.subi %c7_i32_119, %c6_i32 : i32
    %546 = arith.index_cast %545 : i32 to index
    %c0_120 = arith.constant 0 : index
    %c0_121 = arith.constant 0 : index
    %547 = vector.load %arg5[%546, %c0_120, %c0_121] : memref<8x8x512xf32, #tpu.memory_space<vmem>>, vector<1x8x512xf32>
    %548 = vector.shape_cast %547 : vector<1x8x512xf32> to vector<8x512xf32>
    %549 = arith.addi %14, %545 : i32
    %550 = vector.broadcast %549 : i32 to vector<8x1xi32>
    %551 = arith.cmpi slt, %550, %3 : vector<8x1xi32>
    %552 = vector.broadcast %7 : vector<1x512xf32> to vector<8x512xf32>
    %553 = arith.addf %548, %552 : vector<8x512xf32>
    %cst_122 = arith.constant dense<0.000000e+00> : vector<8x512xf32>
    %554 = tpu.matmul %493, %11, %cst_122 {dimension_numbers = #tpu.dot_dimension_numbers<[1], [0], [0], [1], [0, 0, 1, 1], [], []>} : vector<8x128xf32>, vector<128x512xf32>, vector<8x512xf32> -> vector<8x512xf32>
    %555 = arith.addf %553, %554 : vector<8x512xf32>
    %556 = vector.extract_strided_slice %555 {offsets = [0, 0], sizes = [8, 384], strides = [1, 1]} : vector<8x512xf32> to vector<8x384xf32>
    %557 = arith.negf %556 : vector<8x384xf32>
    %558 = math.exp %557 : vector<8x384xf32>
    %cst_123 = arith.constant 1.000000e+00 : f32
    %559 = vector.broadcast %cst_123 : f32 to vector<8x384xf32>
    %560 = arith.addf %559, %558 : vector<8x384xf32>
    %561 = arith.divf %559, %560 : vector<8x384xf32>
    %562 = vector.extract_strided_slice %561 {offsets = [0, 0], sizes = [8, 128], strides = [1, 1]} : vector<8x384xf32> to vector<8x128xf32>
    %563 = vector.extract_strided_slice %561 {offsets = [0, 128], sizes = [8, 128], strides = [1, 1]} : vector<8x384xf32> to vector<8x128xf32>
    %564 = vector.extract_strided_slice %561 {offsets = [0, 256], sizes = [8, 128], strides = [1, 1]} : vector<8x384xf32> to vector<8x128xf32>
    %565 = vector.extract_strided_slice %555 {offsets = [0, 384], sizes = [8, 128], strides = [1, 1]} : vector<8x512xf32> to vector<8x128xf32>
    %566 = math.tanh %565 : vector<8x128xf32>
    %567 = arith.mulf %563, %496 : vector<8x128xf32>
    %568 = arith.mulf %562, %566 : vector<8x128xf32>
    %569 = arith.addf %567, %568 : vector<8x128xf32>
    %570 = math.tanh %569 : vector<8x128xf32>
    %571 = arith.mulf %564, %570 : vector<8x128xf32>
    %572 = vector.shape_cast %551 : vector<8x1xi1> to vector<8x1xi1>
    %573 = vector.broadcast %572 : vector<8x1xi1> to vector<8x128xi1>
    %574 = arith.select %573, %571, %493 : vector<8x128xi1>, vector<8x128xf32>
    %575 = vector.shape_cast %551 : vector<8x1xi1> to vector<8x1xi1>
    %576 = vector.broadcast %575 : vector<8x1xi1> to vector<8x128xi1>
    %577 = arith.select %576, %569, %496 : vector<8x128xi1>, vector<8x128xf32>
    %cst_124 = arith.constant 0.000000e+00 : f32
    %578 = vector.shape_cast %551 : vector<8x1xi1> to vector<8x1xi1>
    %579 = vector.broadcast %578 : vector<8x1xi1> to vector<8x128xi1>
    %580 = vector.broadcast %cst_124 : f32 to vector<8x128xf32>
    %581 = arith.select %579, %571, %580 : vector<8x128xi1>, vector<8x128xf32>
    %582 = arith.index_cast %545 : i32 to index
    %c0_125 = arith.constant 0 : index
    %c0_126 = arith.constant 0 : index
    %583 = vector.load %arg7[%582, %c0_125, %c0_126] : memref<8x8x128xf32, #tpu.memory_space<vmem>>, vector<1x8x128xf32>
    %584 = vector.shape_cast %583 : vector<1x8x128xf32> to vector<8x128xf32>
    %585 = vector.shape_cast %581 : vector<8x128xf32> to vector<1x8x128xf32>
    tpu.vector_store %arg7[%582, %c0_125, %c0_126], %585 {strides = array<i32>} : memref<8x8x128xf32, #tpu.memory_space<vmem>>, vector<1x8x128xf32>,
    %c7_i32_127 = arith.constant 7 : i32
    %586 = arith.index_cast %c7_i32_127 : i32 to index
    %c0_128 = arith.constant 0 : index
    %c0_129 = arith.constant 0 : index
    %587 = vector.load %arg4[%586, %c0_128, %c0_129] : memref<8x8x512xf32, #tpu.memory_space<vmem>>, vector<1x8x512xf32>
    %588 = vector.shape_cast %587 : vector<1x8x512xf32> to vector<8x512xf32>
    %589 = arith.addi %12, %c7_i32_127 : i32
    %590 = vector.broadcast %589 : i32 to vector<8x1xi32>
    %591 = arith.cmpi slt, %590, %3 : vector<8x1xi32>
    %592 = vector.broadcast %5 : vector<1x512xf32> to vector<8x512xf32>
    %593 = arith.addf %588, %592 : vector<8x512xf32>
    %cst_130 = arith.constant dense<0.000000e+00> : vector<8x512xf32>
    %594 = tpu.matmul %533, %9, %cst_130 {dimension_numbers = #tpu.dot_dimension_numbers<[1], [0], [0], [1], [0, 0, 1, 1], [], []>} : vector<8x128xf32>, vector<128x512xf32>, vector<8x512xf32> -> vector<8x512xf32>
    %595 = arith.addf %593, %594 : vector<8x512xf32>
    %596 = vector.extract_strided_slice %595 {offsets = [0, 0], sizes = [8, 384], strides = [1, 1]} : vector<8x512xf32> to vector<8x384xf32>
    %597 = arith.negf %596 : vector<8x384xf32>
    %598 = math.exp %597 : vector<8x384xf32>
    %cst_131 = arith.constant 1.000000e+00 : f32
    %599 = vector.broadcast %cst_131 : f32 to vector<8x384xf32>
    %600 = arith.addf %599, %598 : vector<8x384xf32>
    %601 = arith.divf %599, %600 : vector<8x384xf32>
    %602 = vector.extract_strided_slice %601 {offsets = [0, 0], sizes = [8, 128], strides = [1, 1]} : vector<8x384xf32> to vector<8x128xf32>
    %603 = vector.extract_strided_slice %601 {offsets = [0, 128], sizes = [8, 128], strides = [1, 1]} : vector<8x384xf32> to vector<8x128xf32>
    %604 = vector.extract_strided_slice %601 {offsets = [0, 256], sizes = [8, 128], strides = [1, 1]} : vector<8x384xf32> to vector<8x128xf32>
    %605 = vector.extract_strided_slice %595 {offsets = [0, 384], sizes = [8, 128], strides = [1, 1]} : vector<8x512xf32> to vector<8x128xf32>
    %606 = math.tanh %605 : vector<8x128xf32>
    %607 = arith.mulf %603, %536 : vector<8x128xf32>
    %608 = arith.mulf %602, %606 : vector<8x128xf32>
    %609 = arith.addf %607, %608 : vector<8x128xf32>
    %610 = math.tanh %609 : vector<8x128xf32>
    %611 = arith.mulf %604, %610 : vector<8x128xf32>
    %612 = vector.shape_cast %591 : vector<8x1xi1> to vector<8x1xi1>
    %613 = vector.broadcast %612 : vector<8x1xi1> to vector<8x128xi1>
    %614 = arith.select %613, %611, %533 : vector<8x128xi1>, vector<8x128xf32>
    %615 = vector.shape_cast %591 : vector<8x1xi1> to vector<8x1xi1>
    %616 = vector.broadcast %615 : vector<8x1xi1> to vector<8x128xi1>
    %617 = arith.select %616, %609, %536 : vector<8x128xi1>, vector<8x128xf32>
    %cst_132 = arith.constant 0.000000e+00 : f32
    %618 = vector.shape_cast %591 : vector<8x1xi1> to vector<8x1xi1>
    %619 = vector.broadcast %618 : vector<8x1xi1> to vector<8x128xi1>
    %620 = vector.broadcast %cst_132 : f32 to vector<8x128xf32>
    %621 = arith.select %619, %611, %620 : vector<8x128xi1>, vector<8x128xf32>
    %622 = arith.index_cast %c7_i32_127 : i32 to index
    %c0_133 = arith.constant 0 : index
    %c0_134 = arith.constant 0 : index
    %623 = vector.load %arg6[%622, %c0_133, %c0_134] : memref<8x8x128xf32, #tpu.memory_space<vmem>>, vector<1x8x128xf32>
    %624 = vector.shape_cast %623 : vector<1x8x128xf32> to vector<8x128xf32>
    %625 = vector.shape_cast %621 : vector<8x128xf32> to vector<1x8x128xf32>
    tpu.vector_store %arg6[%622, %c0_133, %c0_134], %625 {strides = array<i32>} : memref<8x8x128xf32, #tpu.memory_space<vmem>>, vector<1x8x128xf32>,
    %c7_i32_135 = arith.constant 7 : i32
    %626 = arith.subi %c7_i32_135, %c7_i32_127 : i32
    %627 = arith.index_cast %626 : i32 to index
    %c0_136 = arith.constant 0 : index
    %c0_137 = arith.constant 0 : index
    %628 = vector.load %arg5[%627, %c0_136, %c0_137] : memref<8x8x512xf32, #tpu.memory_space<vmem>>, vector<1x8x512xf32>
    %629 = vector.shape_cast %628 : vector<1x8x512xf32> to vector<8x512xf32>
    %630 = arith.addi %14, %626 : i32
    %631 = vector.broadcast %630 : i32 to vector<8x1xi32>
    %632 = arith.cmpi slt, %631, %3 : vector<8x1xi32>
    %633 = vector.broadcast %7 : vector<1x512xf32> to vector<8x512xf32>
    %634 = arith.addf %629, %633 : vector<8x512xf32>
    %cst_138 = arith.constant dense<0.000000e+00> : vector<8x512xf32>
    %635 = tpu.matmul %574, %11, %cst_138 {dimension_numbers = #tpu.dot_dimension_numbers<[1], [0], [0], [1], [0, 0, 1, 1], [], []>} : vector<8x128xf32>, vector<128x512xf32>, vector<8x512xf32> -> vector<8x512xf32>
    %636 = arith.addf %634, %635 : vector<8x512xf32>
    %637 = vector.extract_strided_slice %636 {offsets = [0, 0], sizes = [8, 384], strides = [1, 1]} : vector<8x512xf32> to vector<8x384xf32>
    %638 = arith.negf %637 : vector<8x384xf32>
    %639 = math.exp %638 : vector<8x384xf32>
    %cst_139 = arith.constant 1.000000e+00 : f32
    %640 = vector.broadcast %cst_139 : f32 to vector<8x384xf32>
    %641 = arith.addf %640, %639 : vector<8x384xf32>
    %642 = arith.divf %640, %641 : vector<8x384xf32>
    %643 = vector.extract_strided_slice %642 {offsets = [0, 0], sizes = [8, 128], strides = [1, 1]} : vector<8x384xf32> to vector<8x128xf32>
    %644 = vector.extract_strided_slice %642 {offsets = [0, 128], sizes = [8, 128], strides = [1, 1]} : vector<8x384xf32> to vector<8x128xf32>
    %645 = vector.extract_strided_slice %642 {offsets = [0, 256], sizes = [8, 128], strides = [1, 1]} : vector<8x384xf32> to vector<8x128xf32>
    %646 = vector.extract_strided_slice %636 {offsets = [0, 384], sizes = [8, 128], strides = [1, 1]} : vector<8x512xf32> to vector<8x128xf32>
    %647 = math.tanh %646 : vector<8x128xf32>
    %648 = arith.mulf %644, %577 : vector<8x128xf32>
    %649 = arith.mulf %643, %647 : vector<8x128xf32>
    %650 = arith.addf %648, %649 : vector<8x128xf32>
    %651 = math.tanh %650 : vector<8x128xf32>
    %652 = arith.mulf %645, %651 : vector<8x128xf32>
    %653 = vector.shape_cast %632 : vector<8x1xi1> to vector<8x1xi1>
    %654 = vector.broadcast %653 : vector<8x1xi1> to vector<8x128xi1>
    %655 = arith.select %654, %652, %574 : vector<8x128xi1>, vector<8x128xf32>
    %656 = vector.shape_cast %632 : vector<8x1xi1> to vector<8x1xi1>
    %657 = vector.broadcast %656 : vector<8x1xi1> to vector<8x128xi1>
    %658 = arith.select %657, %650, %577 : vector<8x128xi1>, vector<8x128xf32>
    %cst_140 = arith.constant 0.000000e+00 : f32
    %659 = vector.shape_cast %632 : vector<8x1xi1> to vector<8x1xi1>
    %660 = vector.broadcast %659 : vector<8x1xi1> to vector<8x128xi1>
    %661 = vector.broadcast %cst_140 : f32 to vector<8x128xf32>
    %662 = arith.select %660, %652, %661 : vector<8x128xi1>, vector<8x128xf32>
    %663 = arith.index_cast %626 : i32 to index
    %c0_141 = arith.constant 0 : index
    %c0_142 = arith.constant 0 : index
    %664 = vector.load %arg7[%663, %c0_141, %c0_142] : memref<8x8x128xf32, #tpu.memory_space<vmem>>, vector<1x8x128xf32>
    %665 = vector.shape_cast %664 : vector<1x8x128xf32> to vector<8x128xf32>
    %666 = vector.shape_cast %662 : vector<8x128xf32> to vector<1x8x128xf32>
    tpu.vector_store %arg7[%663, %c0_141, %c0_142], %666 {strides = array<i32>} : memref<8x8x128xf32, #tpu.memory_space<vmem>>, vector<1x8x128xf32>,
    %c8_i32_143 = arith.constant 8 : i32
    %c0_144 = arith.constant 0 : index
    %c0_145 = arith.constant 0 : index
    %667 = vector.load %arg8[%c0_144, %c0_145] : memref<8x128xf32, #tpu.memory_space<vmem>>, vector<8x128xf32>
    tpu.vector_store %arg8[%c0_144, %c0_145], %614 {strides = array<i32>} : memref<8x128xf32, #tpu.memory_space<vmem>>, vector<8x128xf32>,
    %c0_146 = arith.constant 0 : index
    %c0_147 = arith.constant 0 : index
    %668 = vector.load %arg9[%c0_146, %c0_147] : memref<8x128xf32, #tpu.memory_space<vmem>>, vector<8x128xf32>
    tpu.vector_store %arg9[%c0_146, %c0_147], %617 {strides = array<i32>} : memref<8x128xf32, #tpu.memory_space<vmem>>, vector<8x128xf32>,
    %c0_148 = arith.constant 0 : index
    %c0_149 = arith.constant 0 : index
    %669 = vector.load %arg10[%c0_148, %c0_149] : memref<8x128xf32, #tpu.memory_space<vmem>>, vector<8x128xf32>
    tpu.vector_store %arg10[%c0_148, %c0_149], %655 {strides = array<i32>} : memref<8x128xf32, #tpu.memory_space<vmem>>, vector<8x128xf32>,
    %c0_150 = arith.constant 0 : index
    %c0_151 = arith.constant 0 : index
    %670 = vector.load %arg11[%c0_150, %c0_151] : memref<8x128xf32, #tpu.memory_space<vmem>>, vector<8x128xf32>
    tpu.vector_store %arg11[%c0_150, %c0_151], %658 {strides = array<i32>} : memref<8x128xf32, #tpu.memory_space<vmem>>, vector<8x128xf32>,
    return
  }
  func.func @transform_0(%arg0: i32) -> (i32, i32) {
    %c0_i32 = arith.constant 0 : i32
    %c0_i32_0 = arith.constant 0 : i32
    %c0_i32_1 = arith.constant 0 : i32
    return %c0_i32, %c0_i32_0 : i32, i32
  }
  func.func @transform_1(%arg0: i32) -> (i32, i32, i32) {
    %c0_i32 = arith.constant 0 : i32
    %c0_i32_0 = arith.constant 0 : i32
    %c0_i32_1 = arith.constant 0 : i32
    %c0_i32_2 = arith.constant 0 : i32
    return %c0_i32, %c0_i32_0, %c0_i32_1 : i32, i32, i32
  }
  func.func @transform_2(%arg0: i32) -> (i32, i32, i32) {
    %c0_i32 = arith.constant 0 : i32
    %c0_i32_0 = arith.constant 0 : i32
    %c0_i32_1 = arith.constant 0 : i32
    %c0_i32_2 = arith.constant 0 : i32
    return %c0_i32, %c0_i32_0, %c0_i32_1 : i32, i32, i32
  }
  func.func @transform_3(%arg0: i32) -> (i32, i32, i32) {
    %c0_i32 = arith.constant 0 : i32
    %c0_i32_0 = arith.constant 0 : i32
    %c0_i32_1 = arith.constant 0 : i32
    return %arg0, %c0_i32, %c0_i32_0 : i32, i32, i32
  }
  func.func @transform_4(%arg0: i32) -> (i32, i32, i32) {
    %c0_i32 = arith.constant 0 : i32
    %0 = arith.subi %c0_i32, %arg0 : i32
    %c0_i32_0 = arith.constant 0 : i32
    %c0_i32_1 = arith.constant 0 : i32
    %c0_i32_2 = arith.constant 0 : i32
    return %0, %c0_i32_0, %c0_i32_1 : i32, i32, i32
  }
  func.func @transform_5(%arg0: i32) -> (i32, i32, i32) {
    %c0_i32 = arith.constant 0 : i32
    %c0_i32_0 = arith.constant 0 : i32
    %c0_i32_1 = arith.constant 0 : i32
    return %arg0, %c0_i32, %c0_i32_0 : i32, i32, i32
  }
  func.func @transform_6(%arg0: i32) -> (i32, i32, i32) {
    %c0_i32 = arith.constant 0 : i32
    %0 = arith.subi %c0_i32, %arg0 : i32
    %c0_i32_0 = arith.constant 0 : i32
    %c0_i32_1 = arith.constant 0 : i32
    %c0_i32_2 = arith.constant 0 : i32
    return %0, %c0_i32_0, %c0_i32_1 : i32, i32, i32
  }
}

</mosaic_0001>

<llo_original>
// kernel: stacked_brnn_forward.2
$region0: #{stacked_brnn_forward.2}
  #allocation0 [shape = 'u32[]', space=smem, size = 0x4, offset = 0x4, fixed_abs, tag = 'smem constant byte address 0x4 - core index']
  #allocation1 [shape = 'u32[144,128]{1,0:T(1,128)}', space=vmem, size = 0x12000, scoped, tag = 'internal scratch']
  #allocation2 [shape = 'f32[8,128]{1,0:T(8,128)}', space=vmem, size = 0x1000, scoped, tag = 'scratch operand']
  #allocation3 [shape = 'f32[8,128]{1,0:T(8,128)}', space=vmem, size = 0x1000, scoped, tag = 'scratch operand']
  #allocation4 [shape = 'f32[8,128]{1,0:T(8,128)}', space=vmem, size = 0x1000, scoped, tag = 'scratch operand']
  #allocation5 [shape = 'f32[8,128]{1,0:T(8,128)}', space=vmem, size = 0x1000, scoped, tag = 'scratch operand']
  %s0 = inlined_call_operand.vmem [shape: s32[8,1], index: 0, kind: input, shape index: {}]
  %s1 = inlined_call_operand.vmem [shape: f32[2,1,512], index: 1, kind: input, shape index: {}]
  %s2 = inlined_call_operand.vmem [shape: f32[2,128,512], index: 2, kind: input, shape index: {}]
  %s3 = inlined_call_operand.vmem [shape: f32[8,8,512], index: 3, kind: input, shape index: {}]
  %s4 = inlined_call_operand.vmem [shape: f32[8,8,512], index: 4, kind: input, shape index: {}]
  %s5 = inlined_call_operand.vmem [shape: f32[8,8,128], index: 5, kind: output, shape index: {0}]
  %s6 = inlined_call_operand.vmem [shape: f32[8,8,128], index: 6, kind: output, shape index: {1}]
  %7 = xla_tuple %s5, %s6
  %s8 = sld [smem:[#allocation0]]
  $region42: #{stacked_brnn_forward.2} parent=0
    _
  %s10 = ssub.s32 1, %s8
  %s11 = scalar_select 0, %s10, %s8
  // Predicated region
  $region2: #{stacked_brnn_forward.2} parent=0 // pred_check
    _
  $region3: #{stacked_brnn_forward.2} parent=0 // pred_check_branch
    %13 = sbr.rel (0) target = $region5
  $region4: #{stacked_brnn_forward.2} parent=0 // pred_region
    _
  $region5: #{stacked_brnn_forward.2} parent=0 // pred_fallthru
    _
  // Predicated region
  $region6: #{stacked_brnn_forward.2} parent=0 // pred_check
    _
  $region7: #{stacked_brnn_forward.2} parent=0 // pred_check_branch
    %15 = sbr.rel (0) target = $region9
  $region8: #{stacked_brnn_forward.2} parent=0 // pred_region
    _
  $region9: #{stacked_brnn_forward.2} parent=0 // pred_fallthru
    _
  // Predicated region
  $region10: #{stacked_brnn_forward.2} parent=0 // pred_check
    _
  $region11: #{stacked_brnn_forward.2} parent=0 // pred_check_branch
    %17 = sbr.rel (0) target = $region13
  $region12: #{stacked_brnn_forward.2} parent=0 // pred_region
    _
  $region13: #{stacked_brnn_forward.2} parent=0 // pred_fallthru
    _
  // Predicated region
  $region14: #{stacked_brnn_forward.2} parent=0 // pred_check
    _
  $region15: #{stacked_brnn_forward.2} parent=0 // pred_check_branch
    %19 = sbr.rel (0) target = $region17
  $region16: #{stacked_brnn_forward.2} parent=0 // pred_region
    _
  $region17: #{stacked_brnn_forward.2} parent=0 // pred_fallthru
    _
  // Predicated region
  $region18: #{stacked_brnn_forward.2} parent=0 // pred_check
    _
  $region19: #{stacked_brnn_forward.2} parent=0 // pred_check_branch
    %21 = sbr.rel (0) target = $region21
  $region20: #{stacked_brnn_forward.2} parent=0 // pred_region
    %s22 = ssub.s32 0, 0
    %s23 = smul.u32 8, %s22
    %p24 = scmp.lt.s32.totalorder %s23, 7
    %s25 = scalar_select %p24, %s23, 7
    %s26 = smul.addr %s25, 4
    %s27 = smul.addr %s26, 8
    %s28 = scalar_lea.vmem %s4, %s27
    %s29 = ssub.s32 0, 0
    %s30 = smul.u32 8, %s29
  $region21: #{stacked_brnn_forward.2} parent=0 // pred_fallthru
    _
  %s31 = ssub.s32 0, 0
  %s32 = smul.u32 8, %s31
  %p33 = scmp.lt.s32.totalorder %s32, 7
  %s34 = scalar_select %p33, %s32, 7
  %s35 = smul.addr %s34, 4
  %s36 = smul.addr %s35, 8
  %s37 = scalar_lea.vmem %s4, %s36
  %s38 = ssub.s32 0, 0
  %s39 = smul.u32 8, %s38
  %p40 = scmp.lt.s32.totalorder %s39, 7
  %s41 = scalar_select %p40, %s39, 7
  %s42 = smul.addr %s41, 8
  %s43 = scalar_lea.vmem %s6, %s42
  %s44 = ssub.s32 0, 0
  %s45 = smul.u32 8, %s44
  %p46 = scmp.lt.s32.totalorder %s45, 7
  %s47 = scalar_select %p46, %s45, 7
  %s48 = smul.addr %s47, 4
  %s49 = smul.addr %s48, 8
  %s50 = scalar_lea.vmem %s4, %s49
  %s51 = ssub.s32 0, 0
  %s52 = smul.u32 8, %s51
  %s53 = ssub.s32 0, 0
  %s54 = smul.u32 8, %s53
  %p55 = scmp.lt.s32.totalorder %s54, 7
  %s56 = scalar_select %p55, %s54, 7
  %s57 = smul.addr %s56, 8
  %s58 = scalar_lea.vmem %s6, %s57
  %s59 = ssub.s32 0, 0
  %s60 = smul.u32 8, %s59
  %p61 = scmp.eq.s32.totalorder 0, 0
  // Predicated region
  $region22: #{stacked_brnn_forward.2} parent=0 // pred_check
    %p62 = pneg %p61
  $region23: #{stacked_brnn_forward.2} parent=0 // pred_check_branch
    %64 = sbr.rel (%p62) target = $region25
  $region24: #{stacked_brnn_forward.2} parent=0 // pred_region
    %65 = vst [vmem:[#allocation2] sm:$0xff] 0.0
    %66 = vst [vmem:[#allocation3] sm:$0xff] 0.0
    %67 = vst [vmem:[#allocation4] sm:$0xff] 0.0
    %68 = vst [vmem:[#allocation5] sm:$0xff] 0.0
  $region25: #{stacked_brnn_forward.2} parent=0 // pred_fallthru
    _
  %v69 = vld [vmem:[%s0] sm:$0xff]
  %v70 = vld [vmem:[%s1] sm:$0xf]
  %s71 = scalar_lea.vmem %s1, 4
  %v72 = vld [vmem:[%s71] sm:$0xf]
  %v73 = vld [vmem:[%s2] sm:$0xff]
  %v74 = vld [vmem:[%s2 + $0x8] sm:$0xff]
  %v75 = vld [vmem:[%s2 + $0x10] sm:$0xff]
  %v76 = vld [vmem:[%s2 + $0x18] sm:$0xff]
  %v77 = vld [vmem:[%s2 + $0x20] sm:$0xff]
  %v78 = vld [vmem:[%s2 + $0x28] sm:$0xff]
  %v79 = vld [vmem:[%s2 + $0x30] sm:$0xff]
  %v80 = vld [vmem:[%s2 + $0x38] sm:$0xff]
  %v81 = vld [vmem:[%s2 + $0x40] sm:$0xff]
  %v82 = vld [vmem:[%s2 + $0x48] sm:$0xff]
  %v83 = vld [vmem:[%s2 + $0x50] sm:$0xff]
  %v84 = vld [vmem:[%s2 + $0x58] sm:$0xff]
  %v85 = vld [vmem:[%s2 + $0x60] sm:$0xff]
  %v86 = vld [vmem:[%s2 + $0x68] sm:$0xff]
  %v87 = vld [vmem:[%s2 + $0x70] sm:$0xff]
  %v88 = vld [vmem:[%s2 + $0x78] sm:$0xff]
  %v89 = vld [vmem:[%s2 + $0x80] sm:$0xff]
  %v90 = vld [vmem:[%s2 + $0x88] sm:$0xff]
  %v91 = vld [vmem:[%s2 + $0x90] sm:$0xff]
  %v92 = vld [vmem:[%s2 + $0x98] sm:$0xff]
  %v93 = vld [vmem:[%s2 + $0xa0] sm:$0xff]
  %v94 = vld [vmem:[%s2 + $0xa8] sm:$0xff]
  %v95 = vld [vmem:[%s2 + $0xb0] sm:$0xff]
  %v96 = vld [vmem:[%s2 + $0xb8] sm:$0xff]
  %v97 = vld [vmem:[%s2 + $0xc0] sm:$0xff]
  %v98 = vld [vmem:[%s2 + $0xc8] sm:$0xff]
  %v99 = vld [vmem:[%s2 + $0xd0] sm:$0xff]
  %v100 = vld [vmem:[%s2 + $0xd8] sm:$0xff]
  %v101 = vld [vmem:[%s2 + $0xe0] sm:$0xff]
  %v102 = vld [vmem:[%s2 + $0xe8] sm:$0xff]
  %v103 = vld [vmem:[%s2 + $0xf0] sm:$0xff]
  %v104 = vld [vmem:[%s2 + $0xf8] sm:$0xff]
  %v105 = vld [vmem:[%s2 + $0x100] sm:$0xff]
  %v106 = vld [vmem:[%s2 + $0x108] sm:$0xff]
  %v107 = vld [vmem:[%s2 + $0x110] sm:$0xff]
  %v108 = vld [vmem:[%s2 + $0x118] sm:$0xff]
  %v109 = vld [vmem:[%s2 + $0x120] sm:$0xff]
  %v110 = vld [vmem:[%s2 + $0x128] sm:$0xff]
  %v111 = vld [vmem:[%s2 + $0x130] sm:$0xff]
  %v112 = vld [vmem:[%s2 + $0x138] sm:$0xff]
  %v113 = vld [vmem:[%s2 + $0x140] sm:$0xff]
  %v114 = vld [vmem:[%s2 + $0x148] sm:$0xff]
  %v115 = vld [vmem:[%s2 + $0x150] sm:$0xff]
  %v116 = vld [vmem:[%s2 + $0x158] sm:$0xff]
  %v117 = vld [vmem:[%s2 + $0x160] sm:$0xff]
  %v118 = vld [vmem:[%s2 + $0x168] sm:$0xff]
  %v119 = vld [vmem:[%s2 + $0x170] sm:$0xff]
  %v120 = vld [vmem:[%s2 + $0x178] sm:$0xff]
  %v121 = vld [vmem:[%s2 + $0x180] sm:$0xff]
  %v122 = vld [vmem:[%s2 + $0x188] sm:$0xff]
  %v123 = vld [vmem:[%s2 + $0x190] sm:$0xff]
  %v124 = vld [vmem:[%s2 + $0x198] sm:$0xff]
  %v125 = vld [vmem:[%s2 + $0x1a0] sm:$0xff]
  %v126 = vld [vmem:[%s2 + $0x1a8] sm:$0xff]
  %v127 = vld [vmem:[%s2 + $0x1b0] sm:$0xff]
  %v128 = vld [vmem:[%s2 + $0x1b8] sm:$0xff]
  %v129 = vld [vmem:[%s2 + $0x1c0] sm:$0xff]
  %v130 = vld [vmem:[%s2 + $0x1c8] sm:$0xff]
  %v131 = vld [vmem:[%s2 + $0x1d0] sm:$0xff]
  %v132 = vld [vmem:[%s2 + $0x1d8] sm:$0xff]
  %v133 = vld [vmem:[%s2 + $0x1e0] sm:$0xff]
  %v134 = vld [vmem:[%s2 + $0x1e8] sm:$0xff]
  %v135 = vld [vmem:[%s2 + $0x1f0] sm:$0xff]
  %v136 = vld [vmem:[%s2 + $0x1f8] sm:$0xff]
  %s137 = scalar_lea.vmem %s2, 512
  %v138 = vld [vmem:[%s137] sm:$0xff]
  %v139 = vld [vmem:[%s137 + $0x8] sm:$0xff]
  %v140 = vld [vmem:[%s137 + $0x10] sm:$0xff]
  %v141 = vld [vmem:[%s137 + $0x18] sm:$0xff]
  %v142 = vld [vmem:[%s137 + $0x20] sm:$0xff]
  %v143 = vld [vmem:[%s137 + $0x28] sm:$0xff]
  %v144 = vld [vmem:[%s137 + $0x30] sm:$0xff]
  %v145 = vld [vmem:[%s137 + $0x38] sm:$0xff]
  %v146 = vld [vmem:[%s137 + $0x40] sm:$0xff]
  %v147 = vld [vmem:[%s137 + $0x48] sm:$0xff]
  %v148 = vld [vmem:[%s137 + $0x50] sm:$0xff]
  %v149 = vld [vmem:[%s137 + $0x58] sm:$0xff]
  %v150 = vld [vmem:[%s137 + $0x60] sm:$0xff]
  %v151 = vld [vmem:[%s137 + $0x68] sm:$0xff]
  %v152 = vld [vmem:[%s137 + $0x70] sm:$0xff]
  %v153 = vld [vmem:[%s137 + $0x78] sm:$0xff]
  %v154 = vld [vmem:[%s137 + $0x80] sm:$0xff]
  %v155 = vld [vmem:[%s137 + $0x88] sm:$0xff]
  %v156 = vld [vmem:[%s137 + $0x90] sm:$0xff]
  %v157 = vld [vmem:[%s137 + $0x98] sm:$0xff]
  %v158 = vld [vmem:[%s137 + $0xa0] sm:$0xff]
  %v159 = vld [vmem:[%s137 + $0xa8] sm:$0xff]
  %v160 = vld [vmem:[%s137 + $0xb0] sm:$0xff]
  %v161 = vld [vmem:[%s137 + $0xb8] sm:$0xff]
  %v162 = vld [vmem:[%s137 + $0xc0] sm:$0xff]
  %v163 = vld [vmem:[%s137 + $0xc8] sm:$0xff]
  %v164 = vld [vmem:[%s137 + $0xd0] sm:$0xff]
  %v165 = vld [vmem:[%s137 + $0xd8] sm:$0xff]
  %v166 = vld [vmem:[%s137 + $0xe0] sm:$0xff]
  %v167 = vld [vmem:[%s137 + $0xe8] sm:$0xff]
  %v168 = vld [vmem:[%s137 + $0xf0] sm:$0xff]
  %v169 = vld [vmem:[%s137 + $0xf8] sm:$0xff]
  %v170 = vld [vmem:[%s137 + $0x100] sm:$0xff]
  %v171 = vld [vmem:[%s137 + $0x108] sm:$0xff]
  %v172 = vld [vmem:[%s137 + $0x110] sm:$0xff]
  %v173 = vld [vmem:[%s137 + $0x118] sm:$0xff]
  %v174 = vld [vmem:[%s137 + $0x120] sm:$0xff]
  %v175 = vld [vmem:[%s137 + $0x128] sm:$0xff]
  %v176 = vld [vmem:[%s137 + $0x130] sm:$0xff]
  %v177 = vld [vmem:[%s137 + $0x138] sm:$0xff]
  %v178 = vld [vmem:[%s137 + $0x140] sm:$0xff]
  %v179 = vld [vmem:[%s137 + $0x148] sm:$0xff]
  %v180 = vld [vmem:[%s137 + $0x150] sm:$0xff]
  %v181 = vld [vmem:[%s137 + $0x158] sm:$0xff]
  %v182 = vld [vmem:[%s137 + $0x160] sm:$0xff]
  %v183 = vld [vmem:[%s137 + $0x168] sm:$0xff]
  %v184 = vld [vmem:[%s137 + $0x170] sm:$0xff]
  %v185 = vld [vmem:[%s137 + $0x178] sm:$0xff]
  %v186 = vld [vmem:[%s137 + $0x180] sm:$0xff]
  %v187 = vld [vmem:[%s137 + $0x188] sm:$0xff]
  %v188 = vld [vmem:[%s137 + $0x190] sm:$0xff]
  %v189 = vld [vmem:[%s137 + $0x198] sm:$0xff]
  %v190 = vld [vmem:[%s137 + $0x1a0] sm:$0xff]
  %v191 = vld [vmem:[%s137 + $0x1a8] sm:$0xff]
  %v192 = vld [vmem:[%s137 + $0x1b0] sm:$0xff]
  %v193 = vld [vmem:[%s137 + $0x1b8] sm:$0xff]
  %v194 = vld [vmem:[%s137 + $0x1c0] sm:$0xff]
  %v195 = vld [vmem:[%s137 + $0x1c8] sm:$0xff]
  %v196 = vld [vmem:[%s137 + $0x1d0] sm:$0xff]
  %v197 = vld [vmem:[%s137 + $0x1d8] sm:$0xff]
  %v198 = vld [vmem:[%s137 + $0x1e0] sm:$0xff]
  %v199 = vld [vmem:[%s137 + $0x1e8] sm:$0xff]
  %v200 = vld [vmem:[%s137 + $0x1f0] sm:$0xff]
  %v201 = vld [vmem:[%s137 + $0x1f8] sm:$0xff]
  %s202 = smul.u32 0, 8
  %s203 = ssub.s32 0, 0
  %s204 = smul.u32 %s203, 8
  %v205 = vld [vmem:[#allocation2] sm:$0xff]
  %v206 = vld [vmem:[#allocation3] sm:$0xff]
  %v207 = vld [vmem:[#allocation4] sm:$0xff]
  %v208 = vld [vmem:[#allocation5] sm:$0xff]
  %v209 = vld [vmem:[%s3] sm:$0xff]
  %v210 = vld [vmem:[%s3 + $0x8] sm:$0xff]
  %v211 = vld [vmem:[%s3 + $0x10] sm:$0xff]
  %v212 = vld [vmem:[%s3 + $0x18] sm:$0xff]
  %v213 = vstv %s202
  %vm214 = vcmp.lt.s32.totalorder %v213, %v69
  %v216 = vlaneseq
  %v217 = vshrl.u32 %v216, 7
  %v218 = vsub.s32 0, %v217
  %v219 = vrot.slane %v70, %v218
  %v220 = vlaneseq
  %v221 = vshrl.u32 %v220, 7
  %v222 = vsub.s32 1, %v221
  %v223 = vrot.slane %v70, %v222
  %v224 = vlaneseq
  %v225 = vshrl.u32 %v224, 7
  %v226 = vsub.s32 2, %v225
  %v227 = vrot.slane %v70, %v226
  %v228 = vlaneseq
  %v229 = vshrl.u32 %v228, 7
  %v230 = vsub.s32 3, %v229
  %v231 = vrot.slane %v70, %v230
  %v236 = vadd.f32 %v209, %v219
  %v237 = vadd.f32 %v210, %v223
  %v238 = vadd.f32 %v211, %v227
  %v239 = vadd.f32 %v212, %v231
  %240 = vmatprep.subr.mxu0 %v74
  %241 = vmatpush1.msra.mxu0 %v73
  %242 = vmatprep.subr.mxu0 %v78
  %243 = vmatpush1.msra.mxu0 %v77
  %244 = vmatprep.subr.mxu0 %v82
  %245 = vmatpush1.msra.mxu0 %v81
  %246 = vmatprep.subr.mxu0 %v86
  %247 = vmatpush1.msra.mxu0 %v85
  %248 = vmatprep.subr.mxu0 %v90
  %249 = vmatpush1.msra.mxu0 %v89
  %250 = vmatprep.subr.mxu0 %v94
  %251 = vmatpush1.msra.mxu0 %v93
  %252 = vmatprep.subr.mxu0 %v98
  %253 = vmatpush1.msra.mxu0 %v97
  %254 = vmatprep.subr.mxu0 %v102
  %255 = vmatpush1.msra.mxu0 %v101
  %256 = vmatprep.subr.mxu0 %v106
  %257 = vmatpush1.msra.mxu0 %v105
  %258 = vmatprep.subr.mxu0 %v110
  %259 = vmatpush1.msra.mxu0 %v109
  %260 = vmatprep.subr.mxu0 %v114
  %261 = vmatpush1.msra.mxu0 %v113
  %262 = vmatprep.subr.mxu0 %v118
  %263 = vmatpush1.msra.mxu0 %v117
  %264 = vmatprep.subr.mxu0 %v122
  %265 = vmatpush1.msra.mxu0 %v121
  %266 = vmatprep.subr.mxu0 %v126
  %267 = vmatpush1.msra.mxu0 %v125
  %268 = vmatprep.subr.mxu0 %v130
  %269 = vmatpush1.msra.mxu0 %v129
  %270 = vmatprep.subr.mxu0 %v134
  %271 = vmatpush1.msra.mxu0 %v133
  %272 = vmatprep.subr.mxu0 0.0
  %273 = vmatpush1.msra.mxu0 0.0
  %274 = vmatprep.subr.mxu0 0.0
  %275 = vmatpush1.msra.mxu0 0.0
  %276 = vmatprep.subr.mxu0 0.0
  %277 = vmatpush1.msra.mxu0 0.0
  %278 = vmatprep.subr.mxu0 0.0
  %279 = vmatpush1.msra.mxu0 0.0
  %280 = vmatprep.subr.mxu0 0.0
  %281 = vmatpush1.msra.mxu0 0.0
  %282 = vmatprep.subr.mxu0 0.0
  %283 = vmatpush1.msra.mxu0 0.0
  %284 = vmatprep.subr.mxu0 0.0
  %285 = vmatpush1.msra.mxu0 0.0
  %286 = vmatprep.subr.mxu0 0.0
  %287 = vmatpush1.msra.mxu0 0.0
  %288 = vmatprep.subr.mxu0 0.0
  %289 = vmatpush1.msra.mxu0 0.0
  %290 = vmatprep.subr.mxu0 0.0
  %291 = vmatpush1.msra.mxu0 0.0
  %292 = vmatprep.subr.mxu0 0.0
  %293 = vmatpush1.msra.mxu0 0.0
  %294 = vmatprep.subr.mxu0 0.0
  %295 = vmatpush1.msra.mxu0 0.0
  %296 = vmatprep.subr.mxu0 0.0
  %297 = vmatpush1.msra.mxu0 0.0
  %298 = vmatprep.subr.mxu0 0.0
  %299 = vmatpush1.msra.mxu0 0.0
  %300 = vmatprep.subr.mxu0 0.0
  %301 = vmatpush1.msra.mxu0 0.0
  %302 = vmatprep.subr.mxu0 0.0
  %303 = vmatpush1.msra.mxu0 0.0
  %304 = vmatprep.mubr.f32.mxu0 0.0
  %305 = vmatmul.mubr.f32.gmra.mrb[0].mxu0 %v205
  %v306 = vpop.f32.mrb[0].mxu0
  %v307 = vadd.f32 0.0, %v306
  %v308 = vpop.f32.mrb[0].mxu0
  %v309 = vadd.f32 0.0, %v308
  %310 = vdwg.mxu0
  %311 = vmatprep.subr.mxu0 %v76
  %312 = vmatpush1.msra.mxu0 %v75
  %313 = vmatprep.subr.mxu0 %v80
  %314 = vmatpush1.msra.mxu0 %v79
  %315 = vmatprep.subr.mxu0 %v84
  %316 = vmatpush1.msra.mxu0 %v83
  %317 = vmatprep.subr.mxu0 %v88
  %318 = vmatpush1.msra.mxu0 %v87
  %319 = vmatprep.subr.mxu0 %v92
  %320 = vmatpush1.msra.mxu0 %v91
  %321 = vmatprep.subr.mxu0 %v96
  %322 = vmatpush1.msra.mxu0 %v95
  %323 = vmatprep.subr.mxu0 %v100
  %324 = vmatpush1.msra.mxu0 %v99
  %325 = vmatprep.subr.mxu0 %v104
  %326 = vmatpush1.msra.mxu0 %v103
  %327 = vmatprep.subr.mxu0 %v108
  %328 = vmatpush1.msra.mxu0 %v107
  %329 = vmatprep.subr.mxu0 %v112
  %330 = vmatpush1.msra.mxu0 %v111
  %331 = vmatprep.subr.mxu0 %v116
  %332 = vmatpush1.msra.mxu0 %v115
  %333 = vmatprep.subr.mxu0 %v120
  %334 = vmatpush1.msra.mxu0 %v119
  %335 = vmatprep.subr.mxu0 %v124
  %336 = vmatpush1.msra.mxu0 %v123
  %337 = vmatprep.subr.mxu0 %v128
  %338 = vmatpush1.msra.mxu0 %v127
  %339 = vmatprep.subr.mxu0 %v132
  %340 = vmatpush1.msra.mxu0 %v131
  %341 = vmatprep.subr.mxu0 %v136
  %342 = vmatpush1.msra.mxu0 %v135
  %343 = vmatprep.subr.mxu0 0.0
  %344 = vmatpush1.msra.mxu0 0.0
  %345 = vmatprep.subr.mxu0 0.0
  %346 = vmatpush1.msra.mxu0 0.0
  %347 = vmatprep.subr.mxu0 0.0
  %348 = vmatpush1.msra.mxu0 0.0
  %349 = vmatprep.subr.mxu0 0.0
  %350 = vmatpush1.msra.mxu0 0.0
  %351 = vmatprep.subr.mxu0 0.0
  %352 = vmatpush1.msra.mxu0 0.0
  %353 = vmatprep.subr.mxu0 0.0
  %354 = vmatpush1.msra.mxu0 0.0
  %355 = vmatprep.subr.mxu0 0.0
  %356 = vmatpush1.msra.mxu0 0.0
  %357 = vmatprep.subr.mxu0 0.0
  %358 = vmatpush1.msra.mxu0 0.0
  %359 = vmatprep.subr.mxu0 0.0
  %360 = vmatpush1.msra.mxu0 0.0
  %361 = vmatprep.subr.mxu0 0.0
  %362 = vmatpush1.msra.mxu0 0.0
  %363 = vmatprep.subr.mxu0 0.0
  %364 = vmatpush1.msra.mxu0 0.0
  %365 = vmatprep.subr.mxu0 0.0
  %366 = vmatpush1.msra.mxu0 0.0
  %367 = vmatprep.subr.mxu0 0.0
  %368 = vmatpush1.msra.mxu0 0.0
  %369 = vmatprep.subr.mxu0 0.0
  %370 = vmatpush1.msra.mxu0 0.0
  %371 = vmatprep.subr.mxu0 0.0
  %372 = vmatpush1.msra.mxu0 0.0
  %373 = vmatprep.subr.mxu0 0.0
  %374 = vmatpush1.msra.mxu0 0.0
  %375 = vmatprep.mubr.f32.mxu0 0.0
  %376 = vmatmul.mubr.f32.gmra.mrb[0].mxu0 %v205
  %v377 = vpop.f32.mrb[0].mxu0
  %v378 = vadd.f32 0.0, %v377
  %v379 = vpop.f32.mrb[0].mxu0
  %v380 = vadd.f32 0.0, %v379
  %381 = vdwg.mxu0
  %v382 = vadd.f32 %v236, %v307
  %v383 = vadd.f32 %v237, %v309
  %v384 = vadd.f32 %v238, %v378
  %v385 = vadd.f32 %v239, %v380
  %v386 = vxor.u32 %v382, 2147483648
  %v387 = vxor.u32 %v383, 2147483648
  %v388 = vxor.u32 %v384, 2147483648
  %v389 = vmul.f32 %v386, 1.442695
  %v390 = vpow.pop %v389
  %v391 = vmul.f32 %v387, 1.442695
  %v392 = vpow.pop %v391
  %v393 = vmul.f32 %v388, 1.442695
  %v394 = vpow.pop %v393
  %v395 = vadd.f32 %v390, 1.0
  %v396 = vadd.f32 %v392, 1.0
  %v397 = vadd.f32 %v394, 1.0
  %v398 = vrcp.pop %v395
  %v399 = vmul.f32 1.0, %v398
  %v400 = vrcp.pop %v396
  %v401 = vmul.f32 1.0, %v400
  %v402 = vrcp.pop %v397
  %v403 = vmul.f32 1.0, %v402
  %v404 = vtanh.pop %v385
  %v405 = vmul.f32 %v401, %v206
  %v406 = vmul.f32 %v399, %v404
  %v407 = vadd.f32 %v405, %v406
  %v408 = vtanh.pop %v407
  %v409 = vmul.f32 %v403, %v408
  %v410 = vsel %vm214, 1, 0
  %411 = vset.pattern.permute.xlu0 0
  %412 = vperm.xlu0 %411, %v410
  %v413 = vpop.permute.xlu0 %412
  %vm414 = vcmp.eq.s32.totalorder %v413, 1
  %v415 = vsel %vm414, %v409, %v205
  %v416 = vsel %vm414, %v407, %v206
  %v417 = vsel %vm414, %v409, 0.0
  %418 = vst [vmem:[%s5] sm:$0xff] %v417
  %s419 = scalar_lea.vmem %s50, 224
  %v420 = vld [vmem:[%s419] sm:$0xff]
  %v421 = vld [vmem:[%s419 + $0x8] sm:$0xff]
  %v422 = vld [vmem:[%s419 + $0x10] sm:$0xff]
  %v423 = vld [vmem:[%s419 + $0x18] sm:$0xff]
  %s424 = sadd.s32 %s204, 7
  %v425 = vstv %s424
  %vm426 = vcmp.lt.s32.totalorder %v425, %v69
  %v428 = vlaneseq
  %v429 = vshrl.u32 %v428, 7
  %v430 = vsub.s32 0, %v429
  %v431 = vrot.slane %v72, %v430
  %v432 = vlaneseq
  %v433 = vshrl.u32 %v432, 7
  %v434 = vsub.s32 1, %v433
  %v435 = vrot.slane %v72, %v434
  %v436 = vlaneseq
  %v437 = vshrl.u32 %v436, 7
  %v438 = vsub.s32 2, %v437
  %v439 = vrot.slane %v72, %v438
  %v440 = vlaneseq
  %v441 = vshrl.u32 %v440, 7
  %v442 = vsub.s32 3, %v441
  %v443 = vrot.slane %v72, %v442
  %v448 = vadd.f32 %v420, %v431
  %v449 = vadd.f32 %v421, %v435
  %v450 = vadd.f32 %v422, %v439
  %v451 = vadd.f32 %v423, %v443
  %452 = vmatprep.subr.mxu0 %v139
  %453 = vmatpush1.msra.mxu0 %v138
  %454 = vmatprep.subr.mxu0 %v143
  %455 = vmatpush1.msra.mxu0 %v142
  %456 = vmatprep.subr.mxu0 %v147
  %457 = vmatpush1.msra.mxu0 %v146
  %458 = vmatprep.subr.mxu0 %v151
  %459 = vmatpush1.msra.mxu0 %v150
  %460 = vmatprep.subr.mxu0 %v155
  %461 = vmatpush1.msra.mxu0 %v154
  %462 = vmatprep.subr.mxu0 %v159
  %463 = vmatpush1.msra.mxu0 %v158
  %464 = vmatprep.subr.mxu0 %v163
  %465 = vmatpush1.msra.mxu0 %v162
  %466 = vmatprep.subr.mxu0 %v167
  %467 = vmatpush1.msra.mxu0 %v166
  %468 = vmatprep.subr.mxu0 %v171
  %469 = vmatpush1.msra.mxu0 %v170
  %470 = vmatprep.subr.mxu0 %v175
  %471 = vmatpush1.msra.mxu0 %v174
  %472 = vmatprep.subr.mxu0 %v179
  %473 = vmatpush1.msra.mxu0 %v178
  %474 = vmatprep.subr.mxu0 %v183
  %475 = vmatpush1.msra.mxu0 %v182
  %476 = vmatprep.subr.mxu0 %v187
  %477 = vmatpush1.msra.mxu0 %v186
  %478 = vmatprep.subr.mxu0 %v191
  %479 = vmatpush1.msra.mxu0 %v190
  %480 = vmatprep.subr.mxu0 %v195
  %481 = vmatpush1.msra.mxu0 %v194
  %482 = vmatprep.subr.mxu0 %v199
  %483 = vmatpush1.msra.mxu0 %v198
  %484 = vmatprep.subr.mxu0 0.0
  %485 = vmatpush1.msra.mxu0 0.0
  %486 = vmatprep.subr.mxu0 0.0
  %487 = vmatpush1.msra.mxu0 0.0
  %488 = vmatprep.subr.mxu0 0.0
  %489 = vmatpush1.msra.mxu0 0.0
  %490 = vmatprep.subr.mxu0 0.0
  %491 = vmatpush1.msra.mxu0 0.0
  %492 = vmatprep.subr.mxu0 0.0
  %493 = vmatpush1.msra.mxu0 0.0
  %494 = vmatprep.subr.mxu0 0.0
  %495 = vmatpush1.msra.mxu0 0.0
  %496 = vmatprep.subr.mxu0 0.0
  %497 = vmatpush1.msra.mxu0 0.0
  %498 = vmatprep.subr.mxu0 0.0
  %499 = vmatpush1.msra.mxu0 0.0
  %500 = vmatprep.subr.mxu0 0.0
  %501 = vmatpush1.msra.mxu0 0.0
  %502 = vmatprep.subr.mxu0 0.0
  %503 = vmatpush1.msra.mxu0 0.0
  %504 = vmatprep.subr.mxu0 0.0
  %505 = vmatpush1.msra.mxu0 0.0
  %506 = vmatprep.subr.mxu0 0.0
  %507 = vmatpush1.msra.mxu0 0.0
  %508 = vmatprep.subr.mxu0 0.0
  %509 = vmatpush1.msra.mxu0 0.0
  %510 = vmatprep.subr.mxu0 0.0
  %511 = vmatpush1.msra.mxu0 0.0
  %512 = vmatprep.subr.mxu0 0.0
  %513 = vmatpush1.msra.mxu0 0.0
  %514 = vmatprep.subr.mxu0 0.0
  %515 = vmatpush1.msra.mxu0 0.0
  %516 = vmatprep.mubr.f32.mxu0 0.0
  %517 = vmatmul.mubr.f32.gmra.mrb[0].mxu0 %v207
  %v518 = vpop.f32.mrb[0].mxu0
  %v519 = vadd.f32 0.0, %v518
  %v520 = vpop.f32.mrb[0].mxu0
  %v521 = vadd.f32 0.0, %v520
  %522 = vdwg.mxu0
  %523 = vmatprep.subr.mxu0 %v141
  %524 = vmatpush1.msra.mxu0 %v140
  %525 = vmatprep.subr.mxu0 %v145
  %526 = vmatpush1.msra.mxu0 %v144
  %527 = vmatprep.subr.mxu0 %v149
  %528 = vmatpush1.msra.mxu0 %v148
  %529 = vmatprep.subr.mxu0 %v153
  %530 = vmatpush1.msra.mxu0 %v152
  %531 = vmatprep.subr.mxu0 %v157
  %532 = vmatpush1.msra.mxu0 %v156
  %533 = vmatprep.subr.mxu0 %v161
  %534 = vmatpush1.msra.mxu0 %v160
  %535 = vmatprep.subr.mxu0 %v165
  %536 = vmatpush1.msra.mxu0 %v164
  %537 = vmatprep.subr.mxu0 %v169
  %538 = vmatpush1.msra.mxu0 %v168
  %539 = vmatprep.subr.mxu0 %v173
  %540 = vmatpush1.msra.mxu0 %v172
  %541 = vmatprep.subr.mxu0 %v177
  %542 = vmatpush1.msra.mxu0 %v176
  %543 = vmatprep.subr.mxu0 %v181
  %544 = vmatpush1.msra.mxu0 %v180
  %545 = vmatprep.subr.mxu0 %v185
  %546 = vmatpush1.msra.mxu0 %v184
  %547 = vmatprep.subr.mxu0 %v189
  %548 = vmatpush1.msra.mxu0 %v188
  %549 = vmatprep.subr.mxu0 %v193
  %550 = vmatpush1.msra.mxu0 %v192
  %551 = vmatprep.subr.mxu0 %v197
  %552 = vmatpush1.msra.mxu0 %v196
  %553 = vmatprep.subr.mxu0 %v201
  %554 = vmatpush1.msra.mxu0 %v200
  %555 = vmatprep.subr.mxu0 0.0
  %556 = vmatpush1.msra.mxu0 0.0
  %557 = vmatprep.subr.mxu0 0.0
  %558 = vmatpush1.msra.mxu0 0.0
  %559 = vmatprep.subr.mxu0 0.0
  %560 = vmatpush1.msra.mxu0 0.0
  %561 = vmatprep.subr.mxu0 0.0
  %562 = vmatpush1.msra.mxu0 0.0
  %563 = vmatprep.subr.mxu0 0.0
  %564 = vmatpush1.msra.mxu0 0.0
  %565 = vmatprep.subr.mxu0 0.0
  %566 = vmatpush1.msra.mxu0 0.0
  %567 = vmatprep.subr.mxu0 0.0
  %568 = vmatpush1.msra.mxu0 0.0
  %569 = vmatprep.subr.mxu0 0.0
  %570 = vmatpush1.msra.mxu0 0.0
  %571 = vmatprep.subr.mxu0 0.0
  %572 = vmatpush1.msra.mxu0 0.0
  %573 = vmatprep.subr.mxu0 0.0
  %574 = vmatpush1.msra.mxu0 0.0
  %575 = vmatprep.subr.mxu0 0.0
  %576 = vmatpush1.msra.mxu0 0.0
  %577 = vmatprep.subr.mxu0 0.0
  %578 = vmatpush1.msra.mxu0 0.0
  %579 = vmatprep.subr.mxu0 0.0
  %580 = vmatpush1.msra.mxu0 0.0
  %581 = vmatprep.subr.mxu0 0.0
  %582 = vmatpush1.msra.mxu0 0.0
  %583 = vmatprep.subr.mxu0 0.0
  %584 = vmatpush1.msra.mxu0 0.0
  %585 = vmatprep.subr.mxu0 0.0
  %586 = vmatpush1.msra.mxu0 0.0
  %587 = vmatprep.mubr.f32.mxu0 0.0
  %588 = vmatmul.mubr.f32.gmra.mrb[0].mxu0 %v207
  %v589 = vpop.f32.mrb[0].mxu0
  %v590 = vadd.f32 0.0, %v589
  %v591 = vpop.f32.mrb[0].mxu0
  %v592 = vadd.f32 0.0, %v591
  %593 = vdwg.mxu0
  %v594 = vadd.f32 %v448, %v519
  %v595 = vadd.f32 %v449, %v521
  %v596 = vadd.f32 %v450, %v590
  %v597 = vadd.f32 %v451, %v592
  %v598 = vxor.u32 %v594, 2147483648
  %v599 = vxor.u32 %v595, 2147483648
  %v600 = vxor.u32 %v596, 2147483648
  %v601 = vmul.f32 %v598, 1.442695
  %v602 = vpow.pop %v601
  %v603 = vmul.f32 %v599, 1.442695
  %v604 = vpow.pop %v603
  %v605 = vmul.f32 %v600, 1.442695
  %v606 = vpow.pop %v605
  %v607 = vadd.f32 %v602, 1.0
  %v608 = vadd.f32 %v604, 1.0
  %v609 = vadd.f32 %v606, 1.0
  %v610 = vrcp.pop %v607
  %v611 = vmul.f32 1.0, %v610
  %v612 = vrcp.pop %v608
  %v613 = vmul.f32 1.0, %v612
  %v614 = vrcp.pop %v609
  %v615 = vmul.f32 1.0, %v614
  %v616 = vtanh.pop %v597
  %v617 = vmul.f32 %v613, %v208
  %v618 = vmul.f32 %v611, %v616
  %v619 = vadd.f32 %v617, %v618
  %v620 = vtanh.pop %v619
  %v621 = vmul.f32 %v615, %v620
  %v622 = vsel %vm426, 1, 0
  %623 = vset.pattern.permute.xlu0 0
  %624 = vperm.xlu0 %623, %v622
  %v625 = vpop.permute.xlu0 %624
  %vm626 = vcmp.eq.s32.totalorder %v625, 1
  %v627 = vsel %vm626, %v621, %v207
  %v628 = vsel %vm626, %v619, %v208
  %v629 = vsel %vm626, %v621, 0.0
  %s630 = scalar_lea.vmem %s58, 56
  %631 = vst [vmem:[%s630] sm:$0xff] %v629
  %s632 = scalar_lea.vmem %s3, 32
  %v633 = vld [vmem:[%s632] sm:$0xff]
  %v634 = vld [vmem:[%s632 + $0x8] sm:$0xff]
  %v635 = vld [vmem:[%s632 + $0x10] sm:$0xff]
  %v636 = vld [vmem:[%s632 + $0x18] sm:$0xff]
  %s637 = sadd.s32 %s202, 1
  %v638 = vstv %s637
  %vm639 = vcmp.lt.s32.totalorder %v638, %v69
  %v640 = vadd.f32 %v633, %v219
  %v641 = vadd.f32 %v634, %v223
  %v642 = vadd.f32 %v635, %v227
  %v643 = vadd.f32 %v636, %v231
  %644 = vmatprep.subr.mxu0 %v74
  %645 = vmatpush1.msra.mxu0 %v73
  %646 = vmatprep.subr.mxu0 %v78
  %647 = vmatpush1.msra.mxu0 %v77
  %648 = vmatprep.subr.mxu0 %v82
  %649 = vmatpush1.msra.mxu0 %v81
  %650 = vmatprep.subr.mxu0 %v86
  %651 = vmatpush1.msra.mxu0 %v85
  %652 = vmatprep.subr.mxu0 %v90
  %653 = vmatpush1.msra.mxu0 %v89
  %654 = vmatprep.subr.mxu0 %v94
  %655 = vmatpush1.msra.mxu0 %v93
  %656 = vmatprep.subr.mxu0 %v98
  %657 = vmatpush1.msra.mxu0 %v97
  %658 = vmatprep.subr.mxu0 %v102
  %659 = vmatpush1.msra.mxu0 %v101
  %660 = vmatprep.subr.mxu0 %v106
  %661 = vmatpush1.msra.mxu0 %v105
  %662 = vmatprep.subr.mxu0 %v110
  %663 = vmatpush1.msra.mxu0 %v109
  %664 = vmatprep.subr.mxu0 %v114
  %665 = vmatpush1.msra.mxu0 %v113
  %666 = vmatprep.subr.mxu0 %v118
  %667 = vmatpush1.msra.mxu0 %v117
  %668 = vmatprep.subr.mxu0 %v122
  %669 = vmatpush1.msra.mxu0 %v121
  %670 = vmatprep.subr.mxu0 %v126
  %671 = vmatpush1.msra.mxu0 %v125
  %672 = vmatprep.subr.mxu0 %v130
  %673 = vmatpush1.msra.mxu0 %v129
  %674 = vmatprep.subr.mxu0 %v134
  %675 = vmatpush1.msra.mxu0 %v133
  %676 = vmatprep.subr.mxu0 0.0
  %677 = vmatpush1.msra.mxu0 0.0
  %678 = vmatprep.subr.mxu0 0.0
  %679 = vmatpush1.msra.mxu0 0.0
  %680 = vmatprep.subr.mxu0 0.0
  %681 = vmatpush1.msra.mxu0 0.0
  %682 = vmatprep.subr.mxu0 0.0
  %683 = vmatpush1.msra.mxu0 0.0
  %684 = vmatprep.subr.mxu0 0.0
  %685 = vmatpush1.msra.mxu0 0.0
  %686 = vmatprep.subr.mxu0 0.0
  %687 = vmatpush1.msra.mxu0 0.0
  %688 = vmatprep.subr.mxu0 0.0
  %689 = vmatpush1.msra.mxu0 0.0
  %690 = vmatprep.subr.mxu0 0.0
  %691 = vmatpush1.msra.mxu0 0.0
  %692 = vmatprep.subr.mxu0 0.0
  %693 = vmatpush1.msra.mxu0 0.0
  %694 = vmatprep.subr.mxu0 0.0
  %695 = vmatpush1.msra.mxu0 0.0
  %696 = vmatprep.subr.mxu0 0.0
  %697 = vmatpush1.msra.mxu0 0.0
  %698 = vmatprep.subr.mxu0 0.0
  %699 = vmatpush1.msra.mxu0 0.0
  %700 = vmatprep.subr.mxu0 0.0
  %701 = vmatpush1.msra.mxu0 0.0
  %702 = vmatprep.subr.mxu0 0.0
  %703 = vmatpush1.msra.mxu0 0.0
  %704 = vmatprep.subr.mxu0 0.0
  %705 = vmatpush1.msra.mxu0 0.0
  %706 = vmatprep.subr.mxu0 0.0
  %707 = vmatpush1.msra.mxu0 0.0
  %708 = vmatprep.mubr.f32.mxu0 0.0
  %709 = vmatmul.mubr.f32.gmra.mrb[0].mxu0 %v415
  %v710 = vpop.f32.mrb[0].mxu0
  %v711 = vadd.f32 0.0, %v710
  %v712 = vpop.f32.mrb[0].mxu0
  %v713 = vadd.f32 0.0, %v712
  %714 = vdwg.mxu0
  %715 = vmatprep.subr.mxu0 %v76
  %716 = vmatpush1.msra.mxu0 %v75
  %717 = vmatprep.subr.mxu0 %v80
  %718 = vmatpush1.msra.mxu0 %v79
  %719 = vmatprep.subr.mxu0 %v84
  %720 = vmatpush1.msra.mxu0 %v83
  %721 = vmatprep.subr.mxu0 %v88
  %722 = vmatpush1.msra.mxu0 %v87
  %723 = vmatprep.subr.mxu0 %v92
  %724 = vmatpush1.msra.mxu0 %v91
  %725 = vmatprep.subr.mxu0 %v96
  %726 = vmatpush1.msra.mxu0 %v95
  %727 = vmatprep.subr.mxu0 %v100
  %728 = vmatpush1.msra.mxu0 %v99
  %729 = vmatprep.subr.mxu0 %v104
  %730 = vmatpush1.msra.mxu0 %v103
  %731 = vmatprep.subr.mxu0 %v108
  %732 = vmatpush1.msra.mxu0 %v107
  %733 = vmatprep.subr.mxu0 %v112
  %734 = vmatpush1.msra.mxu0 %v111
  %735 = vmatprep.subr.mxu0 %v116
  %736 = vmatpush1.msra.mxu0 %v115
  %737 = vmatprep.subr.mxu0 %v120
  %738 = vmatpush1.msra.mxu0 %v119
  %739 = vmatprep.subr.mxu0 %v124
  %740 = vmatpush1.msra.mxu0 %v123
  %741 = vmatprep.subr.mxu0 %v128
  %742 = vmatpush1.msra.mxu0 %v127
  %743 = vmatprep.subr.mxu0 %v132
  %744 = vmatpush1.msra.mxu0 %v131
  %745 = vmatprep.subr.mxu0 %v136
  %746 = vmatpush1.msra.mxu0 %v135
  %747 = vmatprep.subr.mxu0 0.0
  %748 = vmatpush1.msra.mxu0 0.0
  %749 = vmatprep.subr.mxu0 0.0
  %750 = vmatpush1.msra.mxu0 0.0
  %751 = vmatprep.subr.mxu0 0.0
  %752 = vmatpush1.msra.mxu0 0.0
  %753 = vmatprep.subr.mxu0 0.0
  %754 = vmatpush1.msra.mxu0 0.0
  %755 = vmatprep.subr.mxu0 0.0
  %756 = vmatpush1.msra.mxu0 0.0
  %757 = vmatprep.subr.mxu0 0.0
  %758 = vmatpush1.msra.mxu0 0.0
  %759 = vmatprep.subr.mxu0 0.0
  %760 = vmatpush1.msra.mxu0 0.0
  %761 = vmatprep.subr.mxu0 0.0
  %762 = vmatpush1.msra.mxu0 0.0
  %763 = vmatprep.subr.mxu0 0.0
  %764 = vmatpush1.msra.mxu0 0.0
  %765 = vmatprep.subr.mxu0 0.0
  %766 = vmatpush1.msra.mxu0 0.0
  %767 = vmatprep.subr.mxu0 0.0
  %768 = vmatpush1.msra.mxu0 0.0
  %769 = vmatprep.subr.mxu0 0.0
  %770 = vmatpush1.msra.mxu0 0.0
  %771 = vmatprep.subr.mxu0 0.0
  %772 = vmatpush1.msra.mxu0 0.0
  %773 = vmatprep.subr.mxu0 0.0
  %774 = vmatpush1.msra.mxu0 0.0
  %775 = vmatprep.subr.mxu0 0.0
  %776 = vmatpush1.msra.mxu0 0.0
  %777 = vmatprep.subr.mxu0 0.0
  %778 = vmatpush1.msra.mxu0 0.0
  %779 = vmatprep.mubr.f32.mxu0 0.0
  %780 = vmatmul.mubr.f32.gmra.mrb[0].mxu0 %v415
  %v781 = vpop.f32.mrb[0].mxu0
  %v782 = vadd.f32 0.0, %v781
  %v783 = vpop.f32.mrb[0].mxu0
  %v784 = vadd.f32 0.0, %v783
  %785 = vdwg.mxu0
  %v786 = vadd.f32 %v640, %v711
  %v787 = vadd.f32 %v641, %v713
  %v788 = vadd.f32 %v642, %v782
  %v789 = vadd.f32 %v643, %v784
  %v790 = vxor.u32 %v786, 2147483648
  %v791 = vxor.u32 %v787, 2147483648
  %v792 = vxor.u32 %v788, 2147483648
  %v793 = vmul.f32 %v790, 1.442695
  %v794 = vpow.pop %v793
  %v795 = vmul.f32 %v791, 1.442695
  %v796 = vpow.pop %v795
  %v797 = vmul.f32 %v792, 1.442695
  %v798 = vpow.pop %v797
  %v799 = vadd.f32 %v794, 1.0
  %v800 = vadd.f32 %v796, 1.0
  %v801 = vadd.f32 %v798, 1.0
  %v802 = vrcp.pop %v799
  %v803 = vmul.f32 1.0, %v802
  %v804 = vrcp.pop %v800
  %v805 = vmul.f32 1.0, %v804
  %v806 = vrcp.pop %v801
  %v807 = vmul.f32 1.0, %v806
  %v808 = vtanh.pop %v789
  %v809 = vmul.f32 %v805, %v416
  %v810 = vmul.f32 %v803, %v808
  %v811 = vadd.f32 %v809, %v810
  %v812 = vtanh.pop %v811
  %v813 = vmul.f32 %v807, %v812
  %v814 = vsel %vm639, 1, 0
  %815 = vset.pattern.permute.xlu0 0
  %816 = vperm.xlu0 %815, %v814
  %v817 = vpop.permute.xlu0 %816
  %vm818 = vcmp.eq.s32.totalorder %v817, 1
  %v819 = vsel %vm818, %v813, %v415
  %v820 = vsel %vm818, %v811, %v416
  %v821 = vsel %vm818, %v813, 0.0
  %s822 = scalar_lea.vmem %s5, 8
  %823 = vst [vmem:[%s822] sm:$0xff] %v821
  %s824 = scalar_lea.vmem %s50, 192
  %v825 = vld [vmem:[%s824] sm:$0xff]
  %v826 = vld [vmem:[%s824 + $0x8] sm:$0xff]
  %v827 = vld [vmem:[%s824 + $0x10] sm:$0xff]
  %v828 = vld [vmem:[%s824 + $0x18] sm:$0xff]
  %s829 = sadd.s32 %s204, 6
  %v830 = vstv %s829
  %vm831 = vcmp.lt.s32.totalorder %v830, %v69
  %v832 = vadd.f32 %v825, %v431
  %v833 = vadd.f32 %v826, %v435
  %v834 = vadd.f32 %v827, %v439
  %v835 = vadd.f32 %v828, %v443
  %836 = vmatprep.subr.mxu0 %v139
  %837 = vmatpush1.msra.mxu0 %v138
  %838 = vmatprep.subr.mxu0 %v143
  %839 = vmatpush1.msra.mxu0 %v142
  %840 = vmatprep.subr.mxu0 %v147
  %841 = vmatpush1.msra.mxu0 %v146
  %842 = vmatprep.subr.mxu0 %v151
  %843 = vmatpush1.msra.mxu0 %v150
  %844 = vmatprep.subr.mxu0 %v155
  %845 = vmatpush1.msra.mxu0 %v154
  %846 = vmatprep.subr.mxu0 %v159
  %847 = vmatpush1.msra.mxu0 %v158
  %848 = vmatprep.subr.mxu0 %v163
  %849 = vmatpush1.msra.mxu0 %v162
  %850 = vmatprep.subr.mxu0 %v167
  %851 = vmatpush1.msra.mxu0 %v166
  %852 = vmatprep.subr.mxu0 %v171
  %853 = vmatpush1.msra.mxu0 %v170
  %854 = vmatprep.subr.mxu0 %v175
  %855 = vmatpush1.msra.mxu0 %v174
  %856 = vmatprep.subr.mxu0 %v179
  %857 = vmatpush1.msra.mxu0 %v178
  %858 = vmatprep.subr.mxu0 %v183
  %859 = vmatpush1.msra.mxu0 %v182
  %860 = vmatprep.subr.mxu0 %v187
  %861 = vmatpush1.msra.mxu0 %v186
  %862 = vmatprep.subr.mxu0 %v191
  %863 = vmatpush1.msra.mxu0 %v190
  %864 = vmatprep.subr.mxu0 %v195
  %865 = vmatpush1.msra.mxu0 %v194
  %866 = vmatprep.subr.mxu0 %v199
  %867 = vmatpush1.msra.mxu0 %v198
  %868 = vmatprep.subr.mxu0 0.0
  %869 = vmatpush1.msra.mxu0 0.0
  %870 = vmatprep.subr.mxu0 0.0
  %871 = vmatpush1.msra.mxu0 0.0
  %872 = vmatprep.subr.mxu0 0.0
  %873 = vmatpush1.msra.mxu0 0.0
  %874 = vmatprep.subr.mxu0 0.0
  %875 = vmatpush1.msra.mxu0 0.0
  %876 = vmatprep.subr.mxu0 0.0
  %877 = vmatpush1.msra.mxu0 0.0
  %878 = vmatprep.subr.mxu0 0.0
  %879 = vmatpush1.msra.mxu0 0.0
  %880 = vmatprep.subr.mxu0 0.0
  %881 = vmatpush1.msra.mxu0 0.0
  %882 = vmatprep.subr.mxu0 0.0
  %883 = vmatpush1.msra.mxu0 0.0
  %884 = vmatprep.subr.mxu0 0.0
  %885 = vmatpush1.msra.mxu0 0.0
  %886 = vmatprep.subr.mxu0 0.0
  %887 = vmatpush1.msra.mxu0 0.0
  %888 = vmatprep.subr.mxu0 0.0
  %889 = vmatpush1.msra.mxu0 0.0
  %890 = vmatprep.subr.mxu0 0.0
  %891 = vmatpush1.msra.mxu0 0.0
  %892 = vmatprep.subr.mxu0 0.0
  %893 = vmatpush1.msra.mxu0 0.0
  %894 = vmatprep.subr.mxu0 0.0
  %895 = vmatpush1.msra.mxu0 0.0
  %896 = vmatprep.subr.mxu0 0.0
  %897 = vmatpush1.msra.mxu0 0.0
  %898 = vmatprep.subr.mxu0 0.0
  %899 = vmatpush1.msra.mxu0 0.0
  %900 = vmatprep.mubr.f32.mxu0 0.0
  %901 = vmatmul.mubr.f32.gmra.mrb[0].mxu0 %v627
  %v902 = vpop.f32.mrb[0].mxu0
  %v903 = vadd.f32 0.0, %v902
  %v904 = vpop.f32.mrb[0].mxu0
  %v905 = vadd.f32 0.0, %v904
  %906 = vdwg.mxu0
  %907 = vmatprep.subr.mxu0 %v141
  %908 = vmatpush1.msra.mxu0 %v140
  %909 = vmatprep.subr.mxu0 %v145
  %910 = vmatpush1.msra.mxu0 %v144
  %911 = vmatprep.subr.mxu0 %v149
  %912 = vmatpush1.msra.mxu0 %v148
  %913 = vmatprep.subr.mxu0 %v153
  %914 = vmatpush1.msra.mxu0 %v152
  %915 = vmatprep.subr.mxu0 %v157
  %916 = vmatpush1.msra.mxu0 %v156
  %917 = vmatprep.subr.mxu0 %v161
  %918 = vmatpush1.msra.mxu0 %v160
  %919 = vmatprep.subr.mxu0 %v165
  %920 = vmatpush1.msra.mxu0 %v164
  %921 = vmatprep.subr.mxu0 %v169
  %922 = vmatpush1.msra.mxu0 %v168
  %923 = vmatprep.subr.mxu0 %v173
  %924 = vmatpush1.msra.mxu0 %v172
  %925 = vmatprep.subr.mxu0 %v177
  %926 = vmatpush1.msra.mxu0 %v176
  %927 = vmatprep.subr.mxu0 %v181
  %928 = vmatpush1.msra.mxu0 %v180
  %929 = vmatprep.subr.mxu0 %v185
  %930 = vmatpush1.msra.mxu0 %v184
  %931 = vmatprep.subr.mxu0 %v189
  %932 = vmatpush1.msra.mxu0 %v188
  %933 = vmatprep.subr.mxu0 %v193
  %934 = vmatpush1.msra.mxu0 %v192
  %935 = vmatprep.subr.mxu0 %v197
  %936 = vmatpush1.msra.mxu0 %v196
  %937 = vmatprep.subr.mxu0 %v201
  %938 = vmatpush1.msra.mxu0 %v200
  %939 = vmatprep.subr.mxu0 0.0
  %940 = vmatpush1.msra.mxu0 0.0
  %941 = vmatprep.subr.mxu0 0.0
  %942 = vmatpush1.msra.mxu0 0.0
  %943 = vmatprep.subr.mxu0 0.0
  %944 = vmatpush1.msra.mxu0 0.0
  %945 = vmatprep.subr.mxu0 0.0
  %946 = vmatpush1.msra.mxu0 0.0
  %947 = vmatprep.subr.mxu0 0.0
  %948 = vmatpush1.msra.mxu0 0.0
  %949 = vmatprep.subr.mxu0 0.0
  %950 = vmatpush1.msra.mxu0 0.0
  %951 = vmatprep.subr.mxu0 0.0
  %952 = vmatpush1.msra.mxu0 0.0
  %953 = vmatprep.subr.mxu0 0.0
  %954 = vmatpush1.msra.mxu0 0.0
  %955 = vmatprep.subr.mxu0 0.0
  %956 = vmatpush1.msra.mxu0 0.0
  %957 = vmatprep.subr.mxu0 0.0
  %958 = vmatpush1.msra.mxu0 0.0
  %959 = vmatprep.subr.mxu0 0.0
  %960 = vmatpush1.msra.mxu0 0.0
  %961 = vmatprep.subr.mxu0 0.0
  %962 = vmatpush1.msra.mxu0 0.0
  %963 = vmatprep.subr.mxu0 0.0
  %964 = vmatpush1.msra.mxu0 0.0
  %965 = vmatprep.subr.mxu0 0.0
  %966 = vmatpush1.msra.mxu0 0.0
  %967 = vmatprep.subr.mxu0 0.0
  %968 = vmatpush1.msra.mxu0 0.0
  %969 = vmatprep.subr.mxu0 0.0
  %970 = vmatpush1.msra.mxu0 0.0
  %971 = vmatprep.mubr.f32.mxu0 0.0
  %972 = vmatmul.mubr.f32.gmra.mrb[0].mxu0 %v627
  %v973 = vpop.f32.mrb[0].mxu0
  %v974 = vadd.f32 0.0, %v973
  %v975 = vpop.f32.mrb[0].mxu0
  %v976 = vadd.f32 0.0, %v975
  %977 = vdwg.mxu0
  %v978 = vadd.f32 %v832, %v903
  %v979 = vadd.f32 %v833, %v905
  %v980 = vadd.f32 %v834, %v974
  %v981 = vadd.f32 %v835, %v976
  %v982 = vxor.u32 %v978, 2147483648
  %v983 = vxor.u32 %v979, 2147483648
  %v984 = vxor.u32 %v980, 2147483648
  %v985 = vmul.f32 %v982, 1.442695
  %v986 = vpow.pop %v985
  %v987 = vmul.f32 %v983, 1.442695
  %v988 = vpow.pop %v987
  %v989 = vmul.f32 %v984, 1.442695
  %v990 = vpow.pop %v989
  %v991 = vadd.f32 %v986, 1.0
  %v992 = vadd.f32 %v988, 1.0
  %v993 = vadd.f32 %v990, 1.0
  %v994 = vrcp.pop %v991
  %v995 = vmul.f32 1.0, %v994
  %v996 = vrcp.pop %v992
  %v997 = vmul.f32 1.0, %v996
  %v998 = vrcp.pop %v993
  %v999 = vmul.f32 1.0, %v998
  %v1000 = vtanh.pop %v981
  %v1001 = vmul.f32 %v997, %v628
  %v1002 = vmul.f32 %v995, %v1000
  %v1003 = vadd.f32 %v1001, %v1002
  %v1004 = vtanh.pop %v1003
  %v1005 = vmul.f32 %v999, %v1004
  %v1006 = vsel %vm831, 1, 0
  %1007 = vset.pattern.permute.xlu0 0
  %1008 = vperm.xlu0 %1007, %v1006
  %v1009 = vpop.permute.xlu0 %1008
  %vm1010 = vcmp.eq.s32.totalorder %v1009, 1
  %v1011 = vsel %vm1010, %v1005, %v627
  %v1012 = vsel %vm1010, %v1003, %v628
  %v1013 = vsel %vm1010, %v1005, 0.0
  %s1014 = scalar_lea.vmem %s58, 48
  %1015 = vst [vmem:[%s1014] sm:$0xff] %v1013
  %s1016 = scalar_lea.vmem %s3, 64
  %v1017 = vld [vmem:[%s1016] sm:$0xff]
  %v1018 = vld [vmem:[%s1016 + $0x8] sm:$0xff]
  %v1019 = vld [vmem:[%s1016 + $0x10] sm:$0xff]
  %v1020 = vld [vmem:[%s1016 + $0x18] sm:$0xff]
  %s1021 = sadd.s32 %s202, 2
  %v1022 = vstv %s1021
  %vm1023 = vcmp.lt.s32.totalorder %v1022, %v69
  %v1024 = vadd.f32 %v1017, %v219
  %v1025 = vadd.f32 %v1018, %v223
  %v1026 = vadd.f32 %v1019, %v227
  %v1027 = vadd.f32 %v1020, %v231
  %1028 = vmatprep.subr.mxu0 %v74
  %1029 = vmatpush1.msra.mxu0 %v73
  %1030 = vmatprep.subr.mxu0 %v78
  %1031 = vmatpush1.msra.mxu0 %v77
  %1032 = vmatprep.subr.mxu0 %v82
  %1033 = vmatpush1.msra.mxu0 %v81
  %1034 = vmatprep.subr.mxu0 %v86
  %1035 = vmatpush1.msra.mxu0 %v85
  %1036 = vmatprep.subr.mxu0 %v90
  %1037 = vmatpush1.msra.mxu0 %v89
  %1038 = vmatprep.subr.mxu0 %v94
  %1039 = vmatpush1.msra.mxu0 %v93
  %1040 = vmatprep.subr.mxu0 %v98
  %1041 = vmatpush1.msra.mxu0 %v97
  %1042 = vmatprep.subr.mxu0 %v102
  %1043 = vmatpush1.msra.mxu0 %v101
  %1044 = vmatprep.subr.mxu0 %v106
  %1045 = vmatpush1.msra.mxu0 %v105
  %1046 = vmatprep.subr.mxu0 %v110
  %1047 = vmatpush1.msra.mxu0 %v109
  %1048 = vmatprep.subr.mxu0 %v114
  %1049 = vmatpush1.msra.mxu0 %v113
  %1050 = vmatprep.subr.mxu0 %v118
  %1051 = vmatpush1.msra.mxu0 %v117
  %1052 = vmatprep.subr.mxu0 %v122
  %1053 = vmatpush1.msra.mxu0 %v121
  %1054 = vmatprep.subr.mxu0 %v126
  %1055 = vmatpush1.msra.mxu0 %v125
  %1056 = vmatprep.subr.mxu0 %v130
  %1057 = vmatpush1.msra.mxu0 %v129
  %1058 = vmatprep.subr.mxu0 %v134
  %1059 = vmatpush1.msra.mxu0 %v133
  %1060 = vmatprep.subr.mxu0 0.0
  %1061 = vmatpush1.msra.mxu0 0.0
  %1062 = vmatprep.subr.mxu0 0.0
  %1063 = vmatpush1.msra.mxu0 0.0
  %1064 = vmatprep.subr.mxu0 0.0
  %1065 = vmatpush1.msra.mxu0 0.0
  %1066 = vmatprep.subr.mxu0 0.0
  %1067 = vmatpush1.msra.mxu0 0.0
  %1068 = vmatprep.subr.mxu0 0.0
  %1069 = vmatpush1.msra.mxu0 0.0
  %1070 = vmatprep.subr.mxu0 0.0
  %1071 = vmatpush1.msra.mxu0 0.0
  %1072 = vmatprep.subr.mxu0 0.0
  %1073 = vmatpush1.msra.mxu0 0.0
  %1074 = vmatprep.subr.mxu0 0.0
  %1075 = vmatpush1.msra.mxu0 0.0
  %1076 = vmatprep.subr.mxu0 0.0
  %1077 = vmatpush1.msra.mxu0 0.0
  %1078 = vmatprep.subr.mxu0 0.0
  %1079 = vmatpush1.msra.mxu0 0.0
  %1080 = vmatprep.subr.mxu0 0.0
  %1081 = vmatpush1.msra.mxu0 0.0
  %1082 = vmatprep.subr.mxu0 0.0
  %1083 = vmatpush1.msra.mxu0 0.0
  %1084 = vmatprep.subr.mxu0 0.0
  %1085 = vmatpush1.msra.mxu0 0.0
  %1086 = vmatprep.subr.mxu0 0.0
  %1087 = vmatpush1.msra.mxu0 0.0
  %1088 = vmatprep.subr.mxu0 0.0
  %1089 = vmatpush1.msra.mxu0 0.0
  %1090 = vmatprep.subr.mxu0 0.0
  %1091 = vmatpush1.msra.mxu0 0.0
  %1092 = vmatprep.mubr.f32.mxu0 0.0
  %1093 = vmatmul.mubr.f32.gmra.mrb[0].mxu0 %v819
  %v1094 = vpop.f32.mrb[0].mxu0
  %v1095 = vadd.f32 0.0, %v1094
  %v1096 = vpop.f32.mrb[0].mxu0
  %v1097 = vadd.f32 0.0, %v1096
  %1098 = vdwg.mxu0
  %1099 = vmatprep.subr.mxu0 %v76
  %1100 = vmatpush1.msra.mxu0 %v75
  %1101 = vmatprep.subr.mxu0 %v80
  %1102 = vmatpush1.msra.mxu0 %v79
  %1103 = vmatprep.subr.mxu0 %v84
  %1104 = vmatpush1.msra.mxu0 %v83
  %1105 = vmatprep.subr.mxu0 %v88
  %1106 = vmatpush1.msra.mxu0 %v87
  %1107 = vmatprep.subr.mxu0 %v92
  %1108 = vmatpush1.msra.mxu0 %v91
  %1109 = vmatprep.subr.mxu0 %v96
  %1110 = vmatpush1.msra.mxu0 %v95
  %1111 = vmatprep.subr.mxu0 %v100
  %1112 = vmatpush1.msra.mxu0 %v99
  %1113 = vmatprep.subr.mxu0 %v104
  %1114 = vmatpush1.msra.mxu0 %v103
  %1115 = vmatprep.subr.mxu0 %v108
  %1116 = vmatpush1.msra.mxu0 %v107
  %1117 = vmatprep.subr.mxu0 %v112
  %1118 = vmatpush1.msra.mxu0 %v111
  %1119 = vmatprep.subr.mxu0 %v116
  %1120 = vmatpush1.msra.mxu0 %v115
  %1121 = vmatprep.subr.mxu0 %v120
  %1122 = vmatpush1.msra.mxu0 %v119
  %1123 = vmatprep.subr.mxu0 %v124
  %1124 = vmatpush1.msra.mxu0 %v123
  %1125 = vmatprep.subr.mxu0 %v128
  %1126 = vmatpush1.msra.mxu0 %v127
  %1127 = vmatprep.subr.mxu0 %v132
  %1128 = vmatpush1.msra.mxu0 %v131
  %1129 = vmatprep.subr.mxu0 %v136
  %1130 = vmatpush1.msra.mxu0 %v135
  %1131 = vmatprep.subr.mxu0 0.0
  %1132 = vmatpush1.msra.mxu0 0.0
  %1133 = vmatprep.subr.mxu0 0.0
  %1134 = vmatpush1.msra.mxu0 0.0
  %1135 = vmatprep.subr.mxu0 0.0
  %1136 = vmatpush1.msra.mxu0 0.0
  %1137 = vmatprep.subr.mxu0 0.0
  %1138 = vmatpush1.msra.mxu0 0.0
  %1139 = vmatprep.subr.mxu0 0.0
  %1140 = vmatpush1.msra.mxu0 0.0
  %1141 = vmatprep.subr.mxu0 0.0
  %1142 = vmatpush1.msra.mxu0 0.0
  %1143 = vmatprep.subr.mxu0 0.0
  %1144 = vmatpush1.msra.mxu0 0.0
  %1145 = vmatprep.subr.mxu0 0.0
  %1146 = vmatpush1.msra.mxu0 0.0
  %1147 = vmatprep.subr.mxu0 0.0
  %1148 = vmatpush1.msra.mxu0 0.0
  %1149 = vmatprep.subr.mxu0 0.0
  %1150 = vmatpush1.msra.mxu0 0.0
  %1151 = vmatprep.subr.mxu0 0.0
  %1152 = vmatpush1.msra.mxu0 0.0
  %1153 = vmatprep.subr.mxu0 0.0
  %1154 = vmatpush1.msra.mxu0 0.0
  %1155 = vmatprep.subr.mxu0 0.0
  %1156 = vmatpush1.msra.mxu0 0.0
  %1157 = vmatprep.subr.mxu0 0.0
  %1158 = vmatpush1.msra.mxu0 0.0
  %1159 = vmatprep.subr.mxu0 0.0
  %1160 = vmatpush1.msra.mxu0 0.0
  %1161 = vmatprep.subr.mxu0 0.0
  %1162 = vmatpush1.msra.mxu0 0.0
  %1163 = vmatprep.mubr.f32.mxu0 0.0
  %1164 = vmatmul.mubr.f32.gmra.mrb[0].mxu0 %v819
  %v1165 = vpop.f32.mrb[0].mxu0
  %v1166 = vadd.f32 0.0, %v1165
  %v1167 = vpop.f32.mrb[0].mxu0
  %v1168 = vadd.f32 0.0, %v1167
  %1169 = vdwg.mxu0
  %v1170 = vadd.f32 %v1024, %v1095
  %v1171 = vadd.f32 %v1025, %v1097
  %v1172 = vadd.f32 %v1026, %v1166
  %v1173 = vadd.f32 %v1027, %v1168
  %v1174 = vxor.u32 %v1170, 2147483648
  %v1175 = vxor.u32 %v1171, 2147483648
  %v1176 = vxor.u32 %v1172, 2147483648
  %v1177 = vmul.f32 %v1174, 1.442695
  %v1178 = vpow.pop %v1177
  %v1179 = vmul.f32 %v1175, 1.442695
  %v1180 = vpow.pop %v1179
  %v1181 = vmul.f32 %v1176, 1.442695
  %v1182 = vpow.pop %v1181
  %v1183 = vadd.f32 %v1178, 1.0
  %v1184 = vadd.f32 %v1180, 1.0
  %v1185 = vadd.f32 %v1182, 1.0
  %v1186 = vrcp.pop %v1183
  %v1187 = vmul.f32 1.0, %v1186
  %v1188 = vrcp.pop %v1184
  %v1189 = vmul.f32 1.0, %v1188
  %v1190 = vrcp.pop %v1185
  %v1191 = vmul.f32 1.0, %v1190
  %v1192 = vtanh.pop %v1173
  %v1193 = vmul.f32 %v1189, %v820
  %v1194 = vmul.f32 %v1187, %v1192
  %v1195 = vadd.f32 %v1193, %v1194
  %v1196 = vtanh.pop %v1195
  %v1197 = vmul.f32 %v1191, %v1196
  %v1198 = vsel %vm1023, 1, 0
  %1199 = vset.pattern.permute.xlu0 0
  %1200 = vperm.xlu0 %1199, %v1198
  %v1201 = vpop.permute.xlu0 %1200
  %vm1202 = vcmp.eq.s32.totalorder %v1201, 1
  %v1203 = vsel %vm1202, %v1197, %v819
  %v1204 = vsel %vm1202, %v1195, %v820
  %v1205 = vsel %vm1202, %v1197, 0.0
  %s1206 = scalar_lea.vmem %s5, 16
  %1207 = vst [vmem:[%s1206] sm:$0xff] %v1205
  %s1208 = scalar_lea.vmem %s50, 160
  %v1209 = vld [vmem:[%s1208] sm:$0xff]
  %v1210 = vld [vmem:[%s1208 + $0x8] sm:$0xff]
  %v1211 = vld [vmem:[%s1208 + $0x10] sm:$0xff]
  %v1212 = vld [vmem:[%s1208 + $0x18] sm:$0xff]
  %s1213 = sadd.s32 %s204, 5
  %v1214 = vstv %s1213
  %vm1215 = vcmp.lt.s32.totalorder %v1214, %v69
  %v1216 = vadd.f32 %v1209, %v431
  %v1217 = vadd.f32 %v1210, %v435
  %v1218 = vadd.f32 %v1211, %v439
  %v1219 = vadd.f32 %v1212, %v443
  %1220 = vmatprep.subr.mxu0 %v139
  %1221 = vmatpush1.msra.mxu0 %v138
  %1222 = vmatprep.subr.mxu0 %v143
  %1223 = vmatpush1.msra.mxu0 %v142
  %1224 = vmatprep.subr.mxu0 %v147
  %1225 = vmatpush1.msra.mxu0 %v146
  %1226 = vmatprep.subr.mxu0 %v151
  %1227 = vmatpush1.msra.mxu0 %v150
  %1228 = vmatprep.subr.mxu0 %v155
  %1229 = vmatpush1.msra.mxu0 %v154
  %1230 = vmatprep.subr.mxu0 %v159
  %1231 = vmatpush1.msra.mxu0 %v158
  %1232 = vmatprep.subr.mxu0 %v163
  %1233 = vmatpush1.msra.mxu0 %v162
  %1234 = vmatprep.subr.mxu0 %v167
  %1235 = vmatpush1.msra.mxu0 %v166
  %1236 = vmatprep.subr.mxu0 %v171
  %1237 = vmatpush1.msra.mxu0 %v170
  %1238 = vmatprep.subr.mxu0 %v175
  %1239 = vmatpush1.msra.mxu0 %v174
  %1240 = vmatprep.subr.mxu0 %v179
  %1241 = vmatpush1.msra.mxu0 %v178
  %1242 = vmatprep.subr.mxu0 %v183
  %1243 = vmatpush1.msra.mxu0 %v182
  %1244 = vmatprep.subr.mxu0 %v187
  %1245 = vmatpush1.msra.mxu0 %v186
  %1246 = vmatprep.subr.mxu0 %v191
  %1247 = vmatpush1.msra.mxu0 %v190
  %1248 = vmatprep.subr.mxu0 %v195
  %1249 = vmatpush1.msra.mxu0 %v194
  %1250 = vmatprep.subr.mxu0 %v199
  %1251 = vmatpush1.msra.mxu0 %v198
  %1252 = vmatprep.subr.mxu0 0.0
  %1253 = vmatpush1.msra.mxu0 0.0
  %1254 = vmatprep.subr.mxu0 0.0
  %1255 = vmatpush1.msra.mxu0 0.0
  %1256 = vmatprep.subr.mxu0 0.0
  %1257 = vmatpush1.msra.mxu0 0.0
  %1258 = vmatprep.subr.mxu0 0.0
  %1259 = vmatpush1.msra.mxu0 0.0
  %1260 = vmatprep.subr.mxu0 0.0
  %1261 = vmatpush1.msra.mxu0 0.0
  %1262 = vmatprep.subr.mxu0 0.0
  %1263 = vmatpush1.msra.mxu0 0.0
  %1264 = vmatprep.subr.mxu0 0.0
  %1265 = vmatpush1.msra.mxu0 0.0
  %1266 = vmatprep.subr.mxu0 0.0
  %1267 = vmatpush1.msra.mxu0 0.0
  %1268 = vmatprep.subr.mxu0 0.0
  %1269 = vmatpush1.msra.mxu0 0.0
  %1270 = vmatprep.subr.mxu0 0.0
  %1271 = vmatpush1.msra.mxu0 0.0
  %1272 = vmatprep.subr.mxu0 0.0
  %1273 = vmatpush1.msra.mxu0 0.0
  %1274 = vmatprep.subr.mxu0 0.0
  %1275 = vmatpush1.msra.mxu0 0.0
  %1276 = vmatprep.subr.mxu0 0.0
  %1277 = vmatpush1.msra.mxu0 0.0
  %1278 = vmatprep.subr.mxu0 0.0
  %1279 = vmatpush1.msra.mxu0 0.0
  %1280 = vmatprep.subr.mxu0 0.0
  %1281 = vmatpush1.msra.mxu0 0.0
  %1282 = vmatprep.subr.mxu0 0.0
  %1283 = vmatpush1.msra.mxu0 0.0
  %1284 = vmatprep.mubr.f32.mxu0 0.0
  %1285 = vmatmul.mubr.f32.gmra.mrb[0].mxu0 %v1011
  %v1286 = vpop.f32.mrb[0].mxu0
  %v1287 = vadd.f32 0.0, %v1286
  %v1288 = vpop.f32.mrb[0].mxu0
  %v1289 = vadd.f32 0.0, %v1288
  %1290 = vdwg.mxu0
  %1291 = vmatprep.subr.mxu0 %v141
  %1292 = vmatpush1.msra.mxu0 %v140
  %1293 = vmatprep.subr.mxu0 %v145
  %1294 = vmatpush1.msra.mxu0 %v144
  %1295 = vmatprep.subr.mxu0 %v149
  %1296 = vmatpush1.msra.mxu0 %v148
  %1297 = vmatprep.subr.mxu0 %v153
  %1298 = vmatpush1.msra.mxu0 %v152
  %1299 = vmatprep.subr.mxu0 %v157
  %1300 = vmatpush1.msra.mxu0 %v156
  %1301 = vmatprep.subr.mxu0 %v161
  %1302 = vmatpush1.msra.mxu0 %v160
  %1303 = vmatprep.subr.mxu0 %v165
  %1304 = vmatpush1.msra.mxu0 %v164
  %1305 = vmatprep.subr.mxu0 %v169
  %1306 = vmatpush1.msra.mxu0 %v168
  %1307 = vmatprep.subr.mxu0 %v173
  %1308 = vmatpush1.msra.mxu0 %v172
  %1309 = vmatprep.subr.mxu0 %v177
  %1310 = vmatpush1.msra.mxu0 %v176
  %1311 = vmatprep.subr.mxu0 %v181
  %1312 = vmatpush1.msra.mxu0 %v180
  %1313 = vmatprep.subr.mxu0 %v185
  %1314 = vmatpush1.msra.mxu0 %v184
  %1315 = vmatprep.subr.mxu0 %v189
  %1316 = vmatpush1.msra.mxu0 %v188
  %1317 = vmatprep.subr.mxu0 %v193
  %1318 = vmatpush1.msra.mxu0 %v192
  %1319 = vmatprep.subr.mxu0 %v197
  %1320 = vmatpush1.msra.mxu0 %v196
  %1321 = vmatprep.subr.mxu0 %v201
  %1322 = vmatpush1.msra.mxu0 %v200
  %1323 = vmatprep.subr.mxu0 0.0
  %1324 = vmatpush1.msra.mxu0 0.0
  %1325 = vmatprep.subr.mxu0 0.0
  %1326 = vmatpush1.msra.mxu0 0.0
  %1327 = vmatprep.subr.mxu0 0.0
  %1328 = vmatpush1.msra.mxu0 0.0
  %1329 = vmatprep.subr.mxu0 0.0
  %1330 = vmatpush1.msra.mxu0 0.0
  %1331 = vmatprep.subr.mxu0 0.0
  %1332 = vmatpush1.msra.mxu0 0.0
  %1333 = vmatprep.subr.mxu0 0.0
  %1334 = vmatpush1.msra.mxu0 0.0
  %1335 = vmatprep.subr.mxu0 0.0
  %1336 = vmatpush1.msra.mxu0 0.0
  %1337 = vmatprep.subr.mxu0 0.0
  %1338 = vmatpush1.msra.mxu0 0.0
  %1339 = vmatprep.subr.mxu0 0.0
  %1340 = vmatpush1.msra.mxu0 0.0
  %1341 = vmatprep.subr.mxu0 0.0
  %1342 = vmatpush1.msra.mxu0 0.0
  %1343 = vmatprep.subr.mxu0 0.0
  %1344 = vmatpush1.msra.mxu0 0.0
  %1345 = vmatprep.subr.mxu0 0.0
  %1346 = vmatpush1.msra.mxu0 0.0
  %1347 = vmatprep.subr.mxu0 0.0
  %1348 = vmatpush1.msra.mxu0 0.0
  %1349 = vmatprep.subr.mxu0 0.0
  %1350 = vmatpush1.msra.mxu0 0.0
  %1351 = vmatprep.subr.mxu0 0.0
  %1352 = vmatpush1.msra.mxu0 0.0
  %1353 = vmatprep.subr.mxu0 0.0
  %1354 = vmatpush1.msra.mxu0 0.0
  %1355 = vmatprep.mubr.f32.mxu0 0.0
  %1356 = vmatmul.mubr.f32.gmra.mrb[0].mxu0 %v1011
  %v1357 = vpop.f32.mrb[0].mxu0
  %v1358 = vadd.f32 0.0, %v1357
  %v1359 = vpop.f32.mrb[0].mxu0
  %v1360 = vadd.f32 0.0, %v1359
  %1361 = vdwg.mxu0
  %v1362 = vadd.f32 %v1216, %v1287
  %v1363 = vadd.f32 %v1217, %v1289
  %v1364 = vadd.f32 %v1218, %v1358
  %v1365 = vadd.f32 %v1219, %v1360
  %v1366 = vxor.u32 %v1362, 2147483648
  %v1367 = vxor.u32 %v1363, 2147483648
  %v1368 = vxor.u32 %v1364, 2147483648
  %v1369 = vmul.f32 %v1366, 1.442695
  %v1370 = vpow.pop %v1369
  %v1371 = vmul.f32 %v1367, 1.442695
  %v1372 = vpow.pop %v1371
  %v1373 = vmul.f32 %v1368, 1.442695
  %v1374 = vpow.pop %v1373
  %v1375 = vadd.f32 %v1370, 1.0
  %v1376 = vadd.f32 %v1372, 1.0
  %v1377 = vadd.f32 %v1374, 1.0
  %v1378 = vrcp.pop %v1375
  %v1379 = vmul.f32 1.0, %v1378
  %v1380 = vrcp.pop %v1376
  %v1381 = vmul.f32 1.0, %v1380
  %v1382 = vrcp.pop %v1377
  %v1383 = vmul.f32 1.0, %v1382
  %v1384 = vtanh.pop %v1365
  %v1385 = vmul.f32 %v1381, %v1012
  %v1386 = vmul.f32 %v1379, %v1384
  %v1387 = vadd.f32 %v1385, %v1386
  %v1388 = vtanh.pop %v1387
  %v1389 = vmul.f32 %v1383, %v1388
  %v1390 = vsel %vm1215, 1, 0
  %1391 = vset.pattern.permute.xlu0 0
  %1392 = vperm.xlu0 %1391, %v1390
  %v1393 = vpop.permute.xlu0 %1392
  %vm1394 = vcmp.eq.s32.totalorder %v1393, 1
  %v1395 = vsel %vm1394, %v1389, %v1011
  %v1396 = vsel %vm1394, %v1387, %v1012
  %v1397 = vsel %vm1394, %v1389, 0.0
  %s1398 = scalar_lea.vmem %s58, 40
  %1399 = vst [vmem:[%s1398] sm:$0xff] %v1397
  %s1400 = scalar_lea.vmem %s3, 96
  %v1401 = vld [vmem:[%s1400] sm:$0xff]
  %v1402 = vld [vmem:[%s1400 + $0x8] sm:$0xff]
  %v1403 = vld [vmem:[%s1400 + $0x10] sm:$0xff]
  %v1404 = vld [vmem:[%s1400 + $0x18] sm:$0xff]
  %s1405 = sadd.s32 %s202, 3
  %v1406 = vstv %s1405
  %vm1407 = vcmp.lt.s32.totalorder %v1406, %v69
  %v1408 = vadd.f32 %v1401, %v219
  %v1409 = vadd.f32 %v1402, %v223
  %v1410 = vadd.f32 %v1403, %v227
  %v1411 = vadd.f32 %v1404, %v231
  %1412 = vmatprep.subr.mxu0 %v74
  %1413 = vmatpush1.msra.mxu0 %v73
  %1414 = vmatprep.subr.mxu0 %v78
  %1415 = vmatpush1.msra.mxu0 %v77
  %1416 = vmatprep.subr.mxu0 %v82
  %1417 = vmatpush1.msra.mxu0 %v81
  %1418 = vmatprep.subr.mxu0 %v86
  %1419 = vmatpush1.msra.mxu0 %v85
  %1420 = vmatprep.subr.mxu0 %v90
  %1421 = vmatpush1.msra.mxu0 %v89
  %1422 = vmatprep.subr.mxu0 %v94
  %1423 = vmatpush1.msra.mxu0 %v93
  %1424 = vmatprep.subr.mxu0 %v98
  %1425 = vmatpush1.msra.mxu0 %v97
  %1426 = vmatprep.subr.mxu0 %v102
  %1427 = vmatpush1.msra.mxu0 %v101
  %1428 = vmatprep.subr.mxu0 %v106
  %1429 = vmatpush1.msra.mxu0 %v105
  %1430 = vmatprep.subr.mxu0 %v110
  %1431 = vmatpush1.msra.mxu0 %v109
  %1432 = vmatprep.subr.mxu0 %v114
  %1433 = vmatpush1.msra.mxu0 %v113
  %1434 = vmatprep.subr.mxu0 %v118
  %1435 = vmatpush1.msra.mxu0 %v117
  %1436 = vmatprep.subr.mxu0 %v122
  %1437 = vmatpush1.msra.mxu0 %v121
  %1438 = vmatprep.subr.mxu0 %v126
  %1439 = vmatpush1.msra.mxu0 %v125
  %1440 = vmatprep.subr.mxu0 %v130
  %1441 = vmatpush1.msra.mxu0 %v129
  %1442 = vmatprep.subr.mxu0 %v134
  %1443 = vmatpush1.msra.mxu0 %v133
  %1444 = vmatprep.subr.mxu0 0.0
  %1445 = vmatpush1.msra.mxu0 0.0
  %1446 = vmatprep.subr.mxu0 0.0
  %1447 = vmatpush1.msra.mxu0 0.0
  %1448 = vmatprep.subr.mxu0 0.0
  %1449 = vmatpush1.msra.mxu0 0.0
  %1450 = vmatprep.subr.mxu0 0.0
  %1451 = vmatpush1.msra.mxu0 0.0
  %1452 = vmatprep.subr.mxu0 0.0
  %1453 = vmatpush1.msra.mxu0 0.0
  %1454 = vmatprep.subr.mxu0 0.0
  %1455 = vmatpush1.msra.mxu0 0.0
  %1456 = vmatprep.subr.mxu0 0.0
  %1457 = vmatpush1.msra.mxu0 0.0
  %1458 = vmatprep.subr.mxu0 0.0
  %1459 = vmatpush1.msra.mxu0 0.0
  %1460 = vmatprep.subr.mxu0 0.0
  %1461 = vmatpush1.msra.mxu0 0.0
  %1462 = vmatprep.subr.mxu0 0.0
  %1463 = vmatpush1.msra.mxu0 0.0
  %1464 = vmatprep.subr.mxu0 0.0
  %1465 = vmatpush1.msra.mxu0 0.0
  %1466 = vmatprep.subr.mxu0 0.0
  %1467 = vmatpush1.msra.mxu0 0.0
  %1468 = vmatprep.subr.mxu0 0.0
  %1469 = vmatpush1.msra.mxu0 0.0
  %1470 = vmatprep.subr.mxu0 0.0
  %1471 = vmatpush1.msra.mxu0 0.0
  %1472 = vmatprep.subr.mxu0 0.0
  %1473 = vmatpush1.msra.mxu0 0.0
  %1474 = vmatprep.subr.mxu0 0.0
  %1475 = vmatpush1.msra.mxu0 0.0
  %1476 = vmatprep.mubr.f32.mxu0 0.0
  %1477 = vmatmul.mubr.f32.gmra.mrb[0].mxu0 %v1203
  %v1478 = vpop.f32.mrb[0].mxu0
  %v1479 = vadd.f32 0.0, %v1478
  %v1480 = vpop.f32.mrb[0].mxu0
  %v1481 = vadd.f32 0.0, %v1480
  %1482 = vdwg.mxu0
  %1483 = vmatprep.subr.mxu0 %v76
  %1484 = vmatpush1.msra.mxu0 %v75
  %1485 = vmatprep.subr.mxu0 %v80
  %1486 = vmatpush1.msra.mxu0 %v79
  %1487 = vmatprep.subr.mxu0 %v84
  %1488 = vmatpush1.msra.mxu0 %v83
  %1489 = vmatprep.subr.mxu0 %v88
  %1490 = vmatpush1.msra.mxu0 %v87
  %1491 = vmatprep.subr.mxu0 %v92
  %1492 = vmatpush1.msra.mxu0 %v91
  %1493 = vmatprep.subr.mxu0 %v96
  %1494 = vmatpush1.msra.mxu0 %v95
  %1495 = vmatprep.subr.mxu0 %v100
  %1496 = vmatpush1.msra.mxu0 %v99
  %1497 = vmatprep.subr.mxu0 %v104
  %1498 = vmatpush1.msra.mxu0 %v103
  %1499 = vmatprep.subr.mxu0 %v108
  %1500 = vmatpush1.msra.mxu0 %v107
  %1501 = vmatprep.subr.mxu0 %v112
  %1502 = vmatpush1.msra.mxu0 %v111
  %1503 = vmatprep.subr.mxu0 %v116
  %1504 = vmatpush1.msra.mxu0 %v115
  %1505 = vmatprep.subr.mxu0 %v120
  %1506 = vmatpush1.msra.mxu0 %v119
  %1507 = vmatprep.subr.mxu0 %v124
  %1508 = vmatpush1.msra.mxu0 %v123
  %1509 = vmatprep.subr.mxu0 %v128
  %1510 = vmatpush1.msra.mxu0 %v127
  %1511 = vmatprep.subr.mxu0 %v132
  %1512 = vmatpush1.msra.mxu0 %v131
  %1513 = vmatprep.subr.mxu0 %v136
  %1514 = vmatpush1.msra.mxu0 %v135
  %1515 = vmatprep.subr.mxu0 0.0
  %1516 = vmatpush1.msra.mxu0 0.0
  %1517 = vmatprep.subr.mxu0 0.0
  %1518 = vmatpush1.msra.mxu0 0.0
  %1519 = vmatprep.subr.mxu0 0.0
  %1520 = vmatpush1.msra.mxu0 0.0
  %1521 = vmatprep.subr.mxu0 0.0
  %1522 = vmatpush1.msra.mxu0 0.0
  %1523 = vmatprep.subr.mxu0 0.0
  %1524 = vmatpush1.msra.mxu0 0.0
  %1525 = vmatprep.subr.mxu0 0.0
  %1526 = vmatpush1.msra.mxu0 0.0
  %1527 = vmatprep.subr.mxu0 0.0
  %1528 = vmatpush1.msra.mxu0 0.0
  %1529 = vmatprep.subr.mxu0 0.0
  %1530 = vmatpush1.msra.mxu0 0.0
  %1531 = vmatprep.subr.mxu0 0.0
  %1532 = vmatpush1.msra.mxu0 0.0
  %1533 = vmatprep.subr.mxu0 0.0
  %1534 = vmatpush1.msra.mxu0 0.0
  %1535 = vmatprep.subr.mxu0 0.0
  %1536 = vmatpush1.msra.mxu0 0.0
  %1537 = vmatprep.subr.mxu0 0.0
  %1538 = vmatpush1.msra.mxu0 0.0
  %1539 = vmatprep.subr.mxu0 0.0
  %1540 = vmatpush1.msra.mxu0 0.0
  %1541 = vmatprep.subr.mxu0 0.0
  %1542 = vmatpush1.msra.mxu0 0.0
  %1543 = vmatprep.subr.mxu0 0.0
  %1544 = vmatpush1.msra.mxu0 0.0
  %1545 = vmatprep.subr.mxu0 0.0
  %1546 = vmatpush1.msra.mxu0 0.0
  %1547 = vmatprep.mubr.f32.mxu0 0.0
  %1548 = vmatmul.mubr.f32.gmra.mrb[0].mxu0 %v1203
  %v1549 = vpop.f32.mrb[0].mxu0
  %v1550 = vadd.f32 0.0, %v1549
  %v1551 = vpop.f32.mrb[0].mxu0
  %v1552 = vadd.f32 0.0, %v1551
  %1553 = vdwg.mxu0
  %v1554 = vadd.f32 %v1408, %v1479
  %v1555 = vadd.f32 %v1409, %v1481
  %v1556 = vadd.f32 %v1410, %v1550
  %v1557 = vadd.f32 %v1411, %v1552
  %v1558 = vxor.u32 %v1554, 2147483648
  %v1559 = vxor.u32 %v1555, 2147483648
  %v1560 = vxor.u32 %v1556, 2147483648
  %v1561 = vmul.f32 %v1558, 1.442695
  %v1562 = vpow.pop %v1561
  %v1563 = vmul.f32 %v1559, 1.442695
  %v1564 = vpow.pop %v1563
  %v1565 = vmul.f32 %v1560, 1.442695
  %v1566 = vpow.pop %v1565
  %v1567 = vadd.f32 %v1562, 1.0
  %v1568 = vadd.f32 %v1564, 1.0
  %v1569 = vadd.f32 %v1566, 1.0
  %v1570 = vrcp.pop %v1567
  %v1571 = vmul.f32 1.0, %v1570
  %v1572 = vrcp.pop %v1568
  %v1573 = vmul.f32 1.0, %v1572
  %v1574 = vrcp.pop %v1569
  %v1575 = vmul.f32 1.0, %v1574
  %v1576 = vtanh.pop %v1557
  %v1577 = vmul.f32 %v1573, %v1204
  %v1578 = vmul.f32 %v1571, %v1576
  %v1579 = vadd.f32 %v1577, %v1578
  %v1580 = vtanh.pop %v1579
  %v1581 = vmul.f32 %v1575, %v1580
  %v1582 = vsel %vm1407, 1, 0
  %1583 = vset.pattern.permute.xlu0 0
  %1584 = vperm.xlu0 %1583, %v1582
  %v1585 = vpop.permute.xlu0 %1584
  %vm1586 = vcmp.eq.s32.totalorder %v1585, 1
  %v1587 = vsel %vm1586, %v1581, %v1203
  %v1588 = vsel %vm1586, %v1579, %v1204
  %v1589 = vsel %vm1586, %v1581, 0.0
  %s1590 = scalar_lea.vmem %s5, 24
  %1591 = vst [vmem:[%s1590] sm:$0xff] %v1589
  %s1592 = scalar_lea.vmem %s50, 128
  %v1593 = vld [vmem:[%s1592] sm:$0xff]
  %v1594 = vld [vmem:[%s1592 + $0x8] sm:$0xff]
  %v1595 = vld [vmem:[%s1592 + $0x10] sm:$0xff]
  %v1596 = vld [vmem:[%s1592 + $0x18] sm:$0xff]
  %s1597 = sadd.s32 %s204, 4
  %v1598 = vstv %s1597
  %vm1599 = vcmp.lt.s32.totalorder %v1598, %v69
  %v1600 = vadd.f32 %v1593, %v431
  %v1601 = vadd.f32 %v1594, %v435
  %v1602 = vadd.f32 %v1595, %v439
  %v1603 = vadd.f32 %v1596, %v443
  %1604 = vmatprep.subr.mxu0 %v139
  %1605 = vmatpush1.msra.mxu0 %v138
  %1606 = vmatprep.subr.mxu0 %v143
  %1607 = vmatpush1.msra.mxu0 %v142
  %1608 = vmatprep.subr.mxu0 %v147
  %1609 = vmatpush1.msra.mxu0 %v146
  %1610 = vmatprep.subr.mxu0 %v151
  %1611 = vmatpush1.msra.mxu0 %v150
  %1612 = vmatprep.subr.mxu0 %v155
  %1613 = vmatpush1.msra.mxu0 %v154
  %1614 = vmatprep.subr.mxu0 %v159
  %1615 = vmatpush1.msra.mxu0 %v158
  %1616 = vmatprep.subr.mxu0 %v163
  %1617 = vmatpush1.msra.mxu0 %v162
  %1618 = vmatprep.subr.mxu0 %v167
  %1619 = vmatpush1.msra.mxu0 %v166
  %1620 = vmatprep.subr.mxu0 %v171
  %1621 = vmatpush1.msra.mxu0 %v170
  %1622 = vmatprep.subr.mxu0 %v175
  %1623 = vmatpush1.msra.mxu0 %v174
  %1624 = vmatprep.subr.mxu0 %v179
  %1625 = vmatpush1.msra.mxu0 %v178
  %1626 = vmatprep.subr.mxu0 %v183
  %1627 = vmatpush1.msra.mxu0 %v182
  %1628 = vmatprep.subr.mxu0 %v187
  %1629 = vmatpush1.msra.mxu0 %v186
  %1630 = vmatprep.subr.mxu0 %v191
  %1631 = vmatpush1.msra.mxu0 %v190
  %1632 = vmatprep.subr.mxu0 %v195
  %1633 = vmatpush1.msra.mxu0 %v194
  %1634 = vmatprep.subr.mxu0 %v199
  %1635 = vmatpush1.msra.mxu0 %v198
  %1636 = vmatprep.subr.mxu0 0.0
  %1637 = vmatpush1.msra.mxu0 0.0
  %1638 = vmatprep.subr.mxu0 0.0
  %1639 = vmatpush1.msra.mxu0 0.0
  %1640 = vmatprep.subr.mxu0 0.0
  %1641 = vmatpush1.msra.mxu0 0.0
  %1642 = vmatprep.subr.mxu0 0.0
  %1643 = vmatpush1.msra.mxu0 0.0
  %1644 = vmatprep.subr.mxu0 0.0
  %1645 = vmatpush1.msra.mxu0 0.0
  %1646 = vmatprep.subr.mxu0 0.0
  %1647 = vmatpush1.msra.mxu0 0.0
  %1648 = vmatprep.subr.mxu0 0.0
  %1649 = vmatpush1.msra.mxu0 0.0
  %1650 = vmatprep.subr.mxu0 0.0
  %1651 = vmatpush1.msra.mxu0 0.0
  %1652 = vmatprep.subr.mxu0 0.0
  %1653 = vmatpush1.msra.mxu0 0.0
  %1654 = vmatprep.subr.mxu0 0.0
  %1655 = vmatpush1.msra.mxu0 0.0
  %1656 = vmatprep.subr.mxu0 0.0
  %1657 = vmatpush1.msra.mxu0 0.0
  %1658 = vmatprep.subr.mxu0 0.0
  %1659 = vmatpush1.msra.mxu0 0.0
  %1660 = vmatprep.subr.mxu0 0.0
  %1661 = vmatpush1.msra.mxu0 0.0
  %1662 = vmatprep.subr.mxu0 0.0
  %1663 = vmatpush1.msra.mxu0 0.0
  %1664 = vmatprep.subr.mxu0 0.0
  %1665 = vmatpush1.msra.mxu0 0.0
  %1666 = vmatprep.subr.mxu0 0.0
  %1667 = vmatpush1.msra.mxu0 0.0
  %1668 = vmatprep.mubr.f32.mxu0 0.0
  %1669 = vmatmul.mubr.f32.gmra.mrb[0].mxu0 %v1395
  %v1670 = vpop.f32.mrb[0].mxu0
  %v1671 = vadd.f32 0.0, %v1670
  %v1672 = vpop.f32.mrb[0].mxu0
  %v1673 = vadd.f32 0.0, %v1672
  %1674 = vdwg.mxu0
  %1675 = vmatprep.subr.mxu0 %v141
  %1676 = vmatpush1.msra.mxu0 %v140
  %1677 = vmatprep.subr.mxu0 %v145
  %1678 = vmatpush1.msra.mxu0 %v144
  %1679 = vmatprep.subr.mxu0 %v149
  %1680 = vmatpush1.msra.mxu0 %v148
  %1681 = vmatprep.subr.mxu0 %v153
  %1682 = vmatpush1.msra.mxu0 %v152
  %1683 = vmatprep.subr.mxu0 %v157
  %1684 = vmatpush1.msra.mxu0 %v156
  %1685 = vmatprep.subr.mxu0 %v161
  %1686 = vmatpush1.msra.mxu0 %v160
  %1687 = vmatprep.subr.mxu0 %v165
  %1688 = vmatpush1.msra.mxu0 %v164
  %1689 = vmatprep.subr.mxu0 %v169
  %1690 = vmatpush1.msra.mxu0 %v168
  %1691 = vmatprep.subr.mxu0 %v173
  %1692 = vmatpush1.msra.mxu0 %v172
  %1693 = vmatprep.subr.mxu0 %v177
  %1694 = vmatpush1.msra.mxu0 %v176
  %1695 = vmatprep.subr.mxu0 %v181
  %1696 = vmatpush1.msra.mxu0 %v180
  %1697 = vmatprep.subr.mxu0 %v185
  %1698 = vmatpush1.msra.mxu0 %v184
  %1699 = vmatprep.subr.mxu0 %v189
  %1700 = vmatpush1.msra.mxu0 %v188
  %1701 = vmatprep.subr.mxu0 %v193
  %1702 = vmatpush1.msra.mxu0 %v192
  %1703 = vmatprep.subr.mxu0 %v197
  %1704 = vmatpush1.msra.mxu0 %v196
  %1705 = vmatprep.subr.mxu0 %v201
  %1706 = vmatpush1.msra.mxu0 %v200
  %1707 = vmatprep.subr.mxu0 0.0
  %1708 = vmatpush1.msra.mxu0 0.0
  %1709 = vmatprep.subr.mxu0 0.0
  %1710 = vmatpush1.msra.mxu0 0.0
  %1711 = vmatprep.subr.mxu0 0.0
  %1712 = vmatpush1.msra.mxu0 0.0
  %1713 = vmatprep.subr.mxu0 0.0
  %1714 = vmatpush1.msra.mxu0 0.0
  %1715 = vmatprep.subr.mxu0 0.0
  %1716 = vmatpush1.msra.mxu0 0.0
  %1717 = vmatprep.subr.mxu0 0.0
  %1718 = vmatpush1.msra.mxu0 0.0
  %1719 = vmatprep.subr.mxu0 0.0
  %1720 = vmatpush1.msra.mxu0 0.0
  %1721 = vmatprep.subr.mxu0 0.0
  %1722 = vmatpush1.msra.mxu0 0.0
  %1723 = vmatprep.subr.mxu0 0.0
  %1724 = vmatpush1.msra.mxu0 0.0
  %1725 = vmatprep.subr.mxu0 0.0
  %1726 = vmatpush1.msra.mxu0 0.0
  %1727 = vmatprep.subr.mxu0 0.0
  %1728 = vmatpush1.msra.mxu0 0.0
  %1729 = vmatprep.subr.mxu0 0.0
  %1730 = vmatpush1.msra.mxu0 0.0
  %1731 = vmatprep.subr.mxu0 0.0
  %1732 = vmatpush1.msra.mxu0 0.0
  %1733 = vmatprep.subr.mxu0 0.0
  %1734 = vmatpush1.msra.mxu0 0.0
  %1735 = vmatprep.subr.mxu0 0.0
  %1736 = vmatpush1.msra.mxu0 0.0
  %1737 = vmatprep.subr.mxu0 0.0
  %1738 = vmatpush1.msra.mxu0 0.0
  %1739 = vmatprep.mubr.f32.mxu0 0.0
  %1740 = vmatmul.mubr.f32.gmra.mrb[0].mxu0 %v1395
  %v1741 = vpop.f32.mrb[0].mxu0
  %v1742 = vadd.f32 0.0, %v1741
  %v1743 = vpop.f32.mrb[0].mxu0
  %v1744 = vadd.f32 0.0, %v1743
  %1745 = vdwg.mxu0
  %v1746 = vadd.f32 %v1600, %v1671
  %v1747 = vadd.f32 %v1601, %v1673
  %v1748 = vadd.f32 %v1602, %v1742
  %v1749 = vadd.f32 %v1603, %v1744
  %v1750 = vxor.u32 %v1746, 2147483648
  %v1751 = vxor.u32 %v1747, 2147483648
  %v1752 = vxor.u32 %v1748, 2147483648
  %v1753 = vmul.f32 %v1750, 1.442695
  %v1754 = vpow.pop %v1753
  %v1755 = vmul.f32 %v1751, 1.442695
  %v1756 = vpow.pop %v1755
  %v1757 = vmul.f32 %v1752, 1.442695
  %v1758 = vpow.pop %v1757
  %v1759 = vadd.f32 %v1754, 1.0
  %v1760 = vadd.f32 %v1756, 1.0
  %v1761 = vadd.f32 %v1758, 1.0
  %v1762 = vrcp.pop %v1759
  %v1763 = vmul.f32 1.0, %v1762
  %v1764 = vrcp.pop %v1760
  %v1765 = vmul.f32 1.0, %v1764
  %v1766 = vrcp.pop %v1761
  %v1767 = vmul.f32 1.0, %v1766
  %v1768 = vtanh.pop %v1749
  %v1769 = vmul.f32 %v1765, %v1396
  %v1770 = vmul.f32 %v1763, %v1768
  %v1771 = vadd.f32 %v1769, %v1770
  %v1772 = vtanh.pop %v1771
  %v1773 = vmul.f32 %v1767, %v1772
  %v1774 = vsel %vm1599, 1, 0
  %1775 = vset.pattern.permute.xlu0 0
  %1776 = vperm.xlu0 %1775, %v1774
  %v1777 = vpop.permute.xlu0 %1776
  %vm1778 = vcmp.eq.s32.totalorder %v1777, 1
  %v1779 = vsel %vm1778, %v1773, %v1395
  %v1780 = vsel %vm1778, %v1771, %v1396
  %v1781 = vsel %vm1778, %v1773, 0.0
  %s1782 = scalar_lea.vmem %s58, 32
  %1783 = vst [vmem:[%s1782] sm:$0xff] %v1781
  %s1784 = scalar_lea.vmem %s3, 128
  %v1785 = vld [vmem:[%s1784] sm:$0xff]
  %v1786 = vld [vmem:[%s1784 + $0x8] sm:$0xff]
  %v1787 = vld [vmem:[%s1784 + $0x10] sm:$0xff]
  %v1788 = vld [vmem:[%s1784 + $0x18] sm:$0xff]
  %s1789 = sadd.s32 %s202, 4
  %v1790 = vstv %s1789
  %vm1791 = vcmp.lt.s32.totalorder %v1790, %v69
  %v1792 = vadd.f32 %v1785, %v219
  %v1793 = vadd.f32 %v1786, %v223
  %v1794 = vadd.f32 %v1787, %v227
  %v1795 = vadd.f32 %v1788, %v231
  %1796 = vmatprep.subr.mxu0 %v74
  %1797 = vmatpush1.msra.mxu0 %v73
  %1798 = vmatprep.subr.mxu0 %v78
  %1799 = vmatpush1.msra.mxu0 %v77
  %1800 = vmatprep.subr.mxu0 %v82
  %1801 = vmatpush1.msra.mxu0 %v81
  %1802 = vmatprep.subr.mxu0 %v86
  %1803 = vmatpush1.msra.mxu0 %v85
  %1804 = vmatprep.subr.mxu0 %v90
  %1805 = vmatpush1.msra.mxu0 %v89
  %1806 = vmatprep.subr.mxu0 %v94
  %1807 = vmatpush1.msra.mxu0 %v93
  %1808 = vmatprep.subr.mxu0 %v98
  %1809 = vmatpush1.msra.mxu0 %v97
  %1810 = vmatprep.subr.mxu0 %v102
  %1811 = vmatpush1.msra.mxu0 %v101
  %1812 = vmatprep.subr.mxu0 %v106
  %1813 = vmatpush1.msra.mxu0 %v105
  %1814 = vmatprep.subr.mxu0 %v110
  %1815 = vmatpush1.msra.mxu0 %v109
  %1816 = vmatprep.subr.mxu0 %v114
  %1817 = vmatpush1.msra.mxu0 %v113
  %1818 = vmatprep.subr.mxu0 %v118
  %1819 = vmatpush1.msra.mxu0 %v117
  %1820 = vmatprep.subr.mxu0 %v122
  %1821 = vmatpush1.msra.mxu0 %v121
  %1822 = vmatprep.subr.mxu0 %v126
  %1823 = vmatpush1.msra.mxu0 %v125
  %1824 = vmatprep.subr.mxu0 %v130
  %1825 = vmatpush1.msra.mxu0 %v129
  %1826 = vmatprep.subr.mxu0 %v134
  %1827 = vmatpush1.msra.mxu0 %v133
  %1828 = vmatprep.subr.mxu0 0.0
  %1829 = vmatpush1.msra.mxu0 0.0
  %1830 = vmatprep.subr.mxu0 0.0
  %1831 = vmatpush1.msra.mxu0 0.0
  %1832 = vmatprep.subr.mxu0 0.0
  %1833 = vmatpush1.msra.mxu0 0.0
  %1834 = vmatprep.subr.mxu0 0.0
  %1835 = vmatpush1.msra.mxu0 0.0
  %1836 = vmatprep.subr.mxu0 0.0
  %1837 = vmatpush1.msra.mxu0 0.0
  %1838 = vmatprep.subr.mxu0 0.0
  %1839 = vmatpush1.msra.mxu0 0.0
  %1840 = vmatprep.subr.mxu0 0.0
  %1841 = vmatpush1.msra.mxu0 0.0
  %1842 = vmatprep.subr.mxu0 0.0
  %1843 = vmatpush1.msra.mxu0 0.0
  %1844 = vmatprep.subr.mxu0 0.0
  %1845 = vmatpush1.msra.mxu0 0.0
  %1846 = vmatprep.subr.mxu0 0.0
  %1847 = vmatpush1.msra.mxu0 0.0
  %1848 = vmatprep.subr.mxu0 0.0
  %1849 = vmatpush1.msra.mxu0 0.0
  %1850 = vmatprep.subr.mxu0 0.0
  %1851 = vmatpush1.msra.mxu0 0.0
  %1852 = vmatprep.subr.mxu0 0.0
  %1853 = vmatpush1.msra.mxu0 0.0
  %1854 = vmatprep.subr.mxu0 0.0
  %1855 = vmatpush1.msra.mxu0 0.0
  %1856 = vmatprep.subr.mxu0 0.0
  %1857 = vmatpush1.msra.mxu0 0.0
  %1858 = vmatprep.subr.mxu0 0.0
  %1859 = vmatpush1.msra.mxu0 0.0
  %1860 = vmatprep.mubr.f32.mxu0 0.0
  %1861 = vmatmul.mubr.f32.gmra.mrb[0].mxu0 %v1587
  %v1862 = vpop.f32.mrb[0].mxu0
  %v1863 = vadd.f32 0.0, %v1862
  %v1864 = vpop.f32.mrb[0].mxu0
  %v1865 = vadd.f32 0.0, %v1864
  %1866 = vdwg.mxu0
  %1867 = vmatprep.subr.mxu0 %v76
  %1868 = vmatpush1.msra.mxu0 %v75
  %1869 = vmatprep.subr.mxu0 %v80
  %1870 = vmatpush1.msra.mxu0 %v79
  %1871 = vmatprep.subr.mxu0 %v84
  %1872 = vmatpush1.msra.mxu0 %v83
  %1873 = vmatprep.subr.mxu0 %v88
  %1874 = vmatpush1.msra.mxu0 %v87
  %1875 = vmatprep.subr.mxu0 %v92
  %1876 = vmatpush1.msra.mxu0 %v91
  %1877 = vmatprep.subr.mxu0 %v96
  %1878 = vmatpush1.msra.mxu0 %v95
  %1879 = vmatprep.subr.mxu0 %v100
  %1880 = vmatpush1.msra.mxu0 %v99
  %1881 = vmatprep.subr.mxu0 %v104
  %1882 = vmatpush1.msra.mxu0 %v103
  %1883 = vmatprep.subr.mxu0 %v108
  %1884 = vmatpush1.msra.mxu0 %v107
  %1885 = vmatprep.subr.mxu0 %v112
  %1886 = vmatpush1.msra.mxu0 %v111
  %1887 = vmatprep.subr.mxu0 %v116
  %1888 = vmatpush1.msra.mxu0 %v115
  %1889 = vmatprep.subr.mxu0 %v120
  %1890 = vmatpush1.msra.mxu0 %v119
  %1891 = vmatprep.subr.mxu0 %v124
  %1892 = vmatpush1.msra.mxu0 %v123
  %1893 = vmatprep.subr.mxu0 %v128
  %1894 = vmatpush1.msra.mxu0 %v127
  %1895 = vmatprep.subr.mxu0 %v132
  %1896 = vmatpush1.msra.mxu0 %v131
  %1897 = vmatprep.subr.mxu0 %v136
  %1898 = vmatpush1.msra.mxu0 %v135
  %1899 = vmatprep.subr.mxu0 0.0
  %1900 = vmatpush1.msra.mxu0 0.0
  %1901 = vmatprep.subr.mxu0 0.0
  %1902 = vmatpush1.msra.mxu0 0.0
  %1903 = vmatprep.subr.mxu0 0.0
  %1904 = vmatpush1.msra.mxu0 0.0
  %1905 = vmatprep.subr.mxu0 0.0
  %1906 = vmatpush1.msra.mxu0 0.0
  %1907 = vmatprep.subr.mxu0 0.0
  %1908 = vmatpush1.msra.mxu0 0.0
  %1909 = vmatprep.subr.mxu0 0.0
  %1910 = vmatpush1.msra.mxu0 0.0
  %1911 = vmatprep.subr.mxu0 0.0
  %1912 = vmatpush1.msra.mxu0 0.0
  %1913 = vmatprep.subr.mxu0 0.0
  %1914 = vmatpush1.msra.mxu0 0.0
  %1915 = vmatprep.subr.mxu0 0.0
  %1916 = vmatpush1.msra.mxu0 0.0
  %1917 = vmatprep.subr.mxu0 0.0
  %1918 = vmatpush1.msra.mxu0 0.0
  %1919 = vmatprep.subr.mxu0 0.0
  %1920 = vmatpush1.msra.mxu0 0.0
  %1921 = vmatprep.subr.mxu0 0.0
  %1922 = vmatpush1.msra.mxu0 0.0
  %1923 = vmatprep.subr.mxu0 0.0
  %1924 = vmatpush1.msra.mxu0 0.0
  %1925 = vmatprep.subr.mxu0 0.0
  %1926 = vmatpush1.msra.mxu0 0.0
  %1927 = vmatprep.subr.mxu0 0.0
  %1928 = vmatpush1.msra.mxu0 0.0
  %1929 = vmatprep.subr.mxu0 0.0
  %1930 = vmatpush1.msra.mxu0 0.0
  %1931 = vmatprep.mubr.f32.mxu0 0.0
  %1932 = vmatmul.mubr.f32.gmra.mrb[0].mxu0 %v1587
  %v1933 = vpop.f32.mrb[0].mxu0
  %v1934 = vadd.f32 0.0, %v1933
  %v1935 = vpop.f32.mrb[0].mxu0
  %v1936 = vadd.f32 0.0, %v1935
  %1937 = vdwg.mxu0
  %v1938 = vadd.f32 %v1792, %v1863
  %v1939 = vadd.f32 %v1793, %v1865
  %v1940 = vadd.f32 %v1794, %v1934
  %v1941 = vadd.f32 %v1795, %v1936
  %v1942 = vxor.u32 %v1938, 2147483648
  %v1943 = vxor.u32 %v1939, 2147483648
  %v1944 = vxor.u32 %v1940, 2147483648
  %v1945 = vmul.f32 %v1942, 1.442695
  %v1946 = vpow.pop %v1945
  %v1947 = vmul.f32 %v1943, 1.442695
  %v1948 = vpow.pop %v1947
  %v1949 = vmul.f32 %v1944, 1.442695
  %v1950 = vpow.pop %v1949
  %v1951 = vadd.f32 %v1946, 1.0
  %v1952 = vadd.f32 %v1948, 1.0
  %v1953 = vadd.f32 %v1950, 1.0
  %v1954 = vrcp.pop %v1951
  %v1955 = vmul.f32 1.0, %v1954
  %v1956 = vrcp.pop %v1952
  %v1957 = vmul.f32 1.0, %v1956
  %v1958 = vrcp.pop %v1953
  %v1959 = vmul.f32 1.0, %v1958
  %v1960 = vtanh.pop %v1941
  %v1961 = vmul.f32 %v1957, %v1588
  %v1962 = vmul.f32 %v1955, %v1960
  %v1963 = vadd.f32 %v1961, %v1962
  %v1964 = vtanh.pop %v1963
  %v1965 = vmul.f32 %v1959, %v1964
  %v1966 = vsel %vm1791, 1, 0
  %1967 = vset.pattern.permute.xlu0 0
  %1968 = vperm.xlu0 %1967, %v1966
  %v1969 = vpop.permute.xlu0 %1968
  %vm1970 = vcmp.eq.s32.totalorder %v1969, 1
  %v1971 = vsel %vm1970, %v1965, %v1587
  %v1972 = vsel %vm1970, %v1963, %v1588
  %v1973 = vsel %vm1970, %v1965, 0.0
  %s1974 = scalar_lea.vmem %s5, 32
  %1975 = vst [vmem:[%s1974] sm:$0xff] %v1973
  %s1976 = scalar_lea.vmem %s50, 96
  %v1977 = vld [vmem:[%s1976] sm:$0xff]
  %v1978 = vld [vmem:[%s1976 + $0x8] sm:$0xff]
  %v1979 = vld [vmem:[%s1976 + $0x10] sm:$0xff]
  %v1980 = vld [vmem:[%s1976 + $0x18] sm:$0xff]
  %s1981 = sadd.s32 %s204, 3
  %v1982 = vstv %s1981
  %vm1983 = vcmp.lt.s32.totalorder %v1982, %v69
  %v1984 = vadd.f32 %v1977, %v431
  %v1985 = vadd.f32 %v1978, %v435
  %v1986 = vadd.f32 %v1979, %v439
  %v1987 = vadd.f32 %v1980, %v443
  %1988 = vmatprep.subr.mxu0 %v139
  %1989 = vmatpush1.msra.mxu0 %v138
  %1990 = vmatprep.subr.mxu0 %v143
  %1991 = vmatpush1.msra.mxu0 %v142
  %1992 = vmatprep.subr.mxu0 %v147
  %1993 = vmatpush1.msra.mxu0 %v146
  %1994 = vmatprep.subr.mxu0 %v151
  %1995 = vmatpush1.msra.mxu0 %v150
  %1996 = vmatprep.subr.mxu0 %v155
  %1997 = vmatpush1.msra.mxu0 %v154
  %1998 = vmatprep.subr.mxu0 %v159
  %1999 = vmatpush1.msra.mxu0 %v158
  %2000 = vmatprep.subr.mxu0 %v163
  %2001 = vmatpush1.msra.mxu0 %v162
  %2002 = vmatprep.subr.mxu0 %v167
  %2003 = vmatpush1.msra.mxu0 %v166
  %2004 = vmatprep.subr.mxu0 %v171
  %2005 = vmatpush1.msra.mxu0 %v170
  %2006 = vmatprep.subr.mxu0 %v175
  %2007 = vmatpush1.msra.mxu0 %v174
  %2008 = vmatprep.subr.mxu0 %v179
  %2009 = vmatpush1.msra.mxu0 %v178
  %2010 = vmatprep.subr.mxu0 %v183
  %2011 = vmatpush1.msra.mxu0 %v182
  %2012 = vmatprep.subr.mxu0 %v187
  %2013 = vmatpush1.msra.mxu0 %v186
  %2014 = vmatprep.subr.mxu0 %v191
  %2015 = vmatpush1.msra.mxu0 %v190
  %2016 = vmatprep.subr.mxu0 %v195
  %2017 = vmatpush1.msra.mxu0 %v194
  %2018 = vmatprep.subr.mxu0 %v199
  %2019 = vmatpush1.msra.mxu0 %v198
  %2020 = vmatprep.subr.mxu0 0.0
  %2021 = vmatpush1.msra.mxu0 0.0
  %2022 = vmatprep.subr.mxu0 0.0
  %2023 = vmatpush1.msra.mxu0 0.0
  %2024 = vmatprep.subr.mxu0 0.0
  %2025 = vmatpush1.msra.mxu0 0.0
  %2026 = vmatprep.subr.mxu0 0.0
  %2027 = vmatpush1.msra.mxu0 0.0
  %2028 = vmatprep.subr.mxu0 0.0
  %2029 = vmatpush1.msra.mxu0 0.0
  %2030 = vmatprep.subr.mxu0 0.0
  %2031 = vmatpush1.msra.mxu0 0.0
  %2032 = vmatprep.subr.mxu0 0.0
  %2033 = vmatpush1.msra.mxu0 0.0
  %2034 = vmatprep.subr.mxu0 0.0
  %2035 = vmatpush1.msra.mxu0 0.0
  %2036 = vmatprep.subr.mxu0 0.0
  %2037 = vmatpush1.msra.mxu0 0.0
  %2038 = vmatprep.subr.mxu0 0.0
  %2039 = vmatpush1.msra.mxu0 0.0
  %2040 = vmatprep.subr.mxu0 0.0
  %2041 = vmatpush1.msra.mxu0 0.0
  %2042 = vmatprep.subr.mxu0 0.0
  %2043 = vmatpush1.msra.mxu0 0.0
  %2044 = vmatprep.subr.mxu0 0.0
  %2045 = vmatpush1.msra.mxu0 0.0
  %2046 = vmatprep.subr.mxu0 0.0
  %2047 = vmatpush1.msra.mxu0 0.0
  %2048 = vmatprep.subr.mxu0 0.0
  %2049 = vmatpush1.msra.mxu0 0.0
  %2050 = vmatprep.subr.mxu0 0.0
  %2051 = vmatpush1.msra.mxu0 0.0
  %2052 = vmatprep.mubr.f32.mxu0 0.0
  %2053 = vmatmul.mubr.f32.gmra.mrb[0].mxu0 %v1779
  %v2054 = vpop.f32.mrb[0].mxu0
  %v2055 = vadd.f32 0.0, %v2054
  %v2056 = vpop.f32.mrb[0].mxu0
  %v2057 = vadd.f32 0.0, %v2056
  %2058 = vdwg.mxu0
  %2059 = vmatprep.subr.mxu0 %v141
  %2060 = vmatpush1.msra.mxu0 %v140
  %2061 = vmatprep.subr.mxu0 %v145
  %2062 = vmatpush1.msra.mxu0 %v144
  %2063 = vmatprep.subr.mxu0 %v149
  %2064 = vmatpush1.msra.mxu0 %v148
  %2065 = vmatprep.subr.mxu0 %v153
  %2066 = vmatpush1.msra.mxu0 %v152
  %2067 = vmatprep.subr.mxu0 %v157
  %2068 = vmatpush1.msra.mxu0 %v156
  %2069 = vmatprep.subr.mxu0 %v161
  %2070 = vmatpush1.msra.mxu0 %v160
  %2071 = vmatprep.subr.mxu0 %v165
  %2072 = vmatpush1.msra.mxu0 %v164
  %2073 = vmatprep.subr.mxu0 %v169
  %2074 = vmatpush1.msra.mxu0 %v168
  %2075 = vmatprep.subr.mxu0 %v173
  %2076 = vmatpush1.msra.mxu0 %v172
  %2077 = vmatprep.subr.mxu0 %v177
  %2078 = vmatpush1.msra.mxu0 %v176
  %2079 = vmatprep.subr.mxu0 %v181
  %2080 = vmatpush1.msra.mxu0 %v180
  %2081 = vmatprep.subr.mxu0 %v185
  %2082 = vmatpush1.msra.mxu0 %v184
  %2083 = vmatprep.subr.mxu0 %v189
  %2084 = vmatpush1.msra.mxu0 %v188
  %2085 = vmatprep.subr.mxu0 %v193
  %2086 = vmatpush1.msra.mxu0 %v192
  %2087 = vmatprep.subr.mxu0 %v197
  %2088 = vmatpush1.msra.mxu0 %v196
  %2089 = vmatprep.subr.mxu0 %v201
  %2090 = vmatpush1.msra.mxu0 %v200
  %2091 = vmatprep.subr.mxu0 0.0
  %2092 = vmatpush1.msra.mxu0 0.0
  %2093 = vmatprep.subr.mxu0 0.0
  %2094 = vmatpush1.msra.mxu0 0.0
  %2095 = vmatprep.subr.mxu0 0.0
  %2096 = vmatpush1.msra.mxu0 0.0
  %2097 = vmatprep.subr.mxu0 0.0
  %2098 = vmatpush1.msra.mxu0 0.0
  %2099 = vmatprep.subr.mxu0 0.0
  %2100 = vmatpush1.msra.mxu0 0.0
  %2101 = vmatprep.subr.mxu0 0.0
  %2102 = vmatpush1.msra.mxu0 0.0
  %2103 = vmatprep.subr.mxu0 0.0
  %2104 = vmatpush1.msra.mxu0 0.0
  %2105 = vmatprep.subr.mxu0 0.0
  %2106 = vmatpush1.msra.mxu0 0.0
  %2107 = vmatprep.subr.mxu0 0.0
  %2108 = vmatpush1.msra.mxu0 0.0
  %2109 = vmatprep.subr.mxu0 0.0
  %2110 = vmatpush1.msra.mxu0 0.0
  %2111 = vmatprep.subr.mxu0 0.0
  %2112 = vmatpush1.msra.mxu0 0.0
  %2113 = vmatprep.subr.mxu0 0.0
  %2114 = vmatpush1.msra.mxu0 0.0
  %2115 = vmatprep.subr.mxu0 0.0
  %2116 = vmatpush1.msra.mxu0 0.0
  %2117 = vmatprep.subr.mxu0 0.0
  %2118 = vmatpush1.msra.mxu0 0.0
  %2119 = vmatprep.subr.mxu0 0.0
  %2120 = vmatpush1.msra.mxu0 0.0
  %2121 = vmatprep.subr.mxu0 0.0
  %2122 = vmatpush1.msra.mxu0 0.0
  %2123 = vmatprep.mubr.f32.mxu0 0.0
  %2124 = vmatmul.mubr.f32.gmra.mrb[0].mxu0 %v1779
  %v2125 = vpop.f32.mrb[0].mxu0
  %v2126 = vadd.f32 0.0, %v2125
  %v2127 = vpop.f32.mrb[0].mxu0
  %v2128 = vadd.f32 0.0, %v2127
  %2129 = vdwg.mxu0
  %v2130 = vadd.f32 %v1984, %v2055
  %v2131 = vadd.f32 %v1985, %v2057
  %v2132 = vadd.f32 %v1986, %v2126
  %v2133 = vadd.f32 %v1987, %v2128
  %v2134 = vxor.u32 %v2130, 2147483648
  %v2135 = vxor.u32 %v2131, 2147483648
  %v2136 = vxor.u32 %v2132, 2147483648
  %v2137 = vmul.f32 %v2134, 1.442695
  %v2138 = vpow.pop %v2137
  %v2139 = vmul.f32 %v2135, 1.442695
  %v2140 = vpow.pop %v2139
  %v2141 = vmul.f32 %v2136, 1.442695
  %v2142 = vpow.pop %v2141
  %v2143 = vadd.f32 %v2138, 1.0
  %v2144 = vadd.f32 %v2140, 1.0
  %v2145 = vadd.f32 %v2142, 1.0
  %v2146 = vrcp.pop %v2143
  %v2147 = vmul.f32 1.0, %v2146
  %v2148 = vrcp.pop %v2144
  %v2149 = vmul.f32 1.0, %v2148
  %v2150 = vrcp.pop %v2145
  %v2151 = vmul.f32 1.0, %v2150
  %v2152 = vtanh.pop %v2133
  %v2153 = vmul.f32 %v2149, %v1780
  %v2154 = vmul.f32 %v2147, %v2152
  %v2155 = vadd.f32 %v2153, %v2154
  %v2156 = vtanh.pop %v2155
  %v2157 = vmul.f32 %v2151, %v2156
  %v2158 = vsel %vm1983, 1, 0
  %2159 = vset.pattern.permute.xlu0 0
  %2160 = vperm.xlu0 %2159, %v2158
  %v2161 = vpop.permute.xlu0 %2160
  %vm2162 = vcmp.eq.s32.totalorder %v2161, 1
  %v2163 = vsel %vm2162, %v2157, %v1779
  %v2164 = vsel %vm2162, %v2155, %v1780
  %v2165 = vsel %vm2162, %v2157, 0.0
  %s2166 = scalar_lea.vmem %s58, 24
  %2167 = vst [vmem:[%s2166] sm:$0xff] %v2165
  %s2168 = scalar_lea.vmem %s3, 160
  %v2169 = vld [vmem:[%s2168] sm:$0xff]
  %v2170 = vld [vmem:[%s2168 + $0x8] sm:$0xff]
  %v2171 = vld [vmem:[%s2168 + $0x10] sm:$0xff]
  %v2172 = vld [vmem:[%s2168 + $0x18] sm:$0xff]
  %s2173 = sadd.s32 %s202, 5
  %v2174 = vstv %s2173
  %vm2175 = vcmp.lt.s32.totalorder %v2174, %v69
  %v2176 = vadd.f32 %v2169, %v219
  %v2177 = vadd.f32 %v2170, %v223
  %v2178 = vadd.f32 %v2171, %v227
  %v2179 = vadd.f32 %v2172, %v231
  %2180 = vmatprep.subr.mxu0 %v74
  %2181 = vmatpush1.msra.mxu0 %v73
  %2182 = vmatprep.subr.mxu0 %v78
  %2183 = vmatpush1.msra.mxu0 %v77
  %2184 = vmatprep.subr.mxu0 %v82
  %2185 = vmatpush1.msra.mxu0 %v81
  %2186 = vmatprep.subr.mxu0 %v86
  %2187 = vmatpush1.msra.mxu0 %v85
  %2188 = vmatprep.subr.mxu0 %v90
  %2189 = vmatpush1.msra.mxu0 %v89
  %2190 = vmatprep.subr.mxu0 %v94
  %2191 = vmatpush1.msra.mxu0 %v93
  %2192 = vmatprep.subr.mxu0 %v98
  %2193 = vmatpush1.msra.mxu0 %v97
  %2194 = vmatprep.subr.mxu0 %v102
  %2195 = vmatpush1.msra.mxu0 %v101
  %2196 = vmatprep.subr.mxu0 %v106
  %2197 = vmatpush1.msra.mxu0 %v105
  %2198 = vmatprep.subr.mxu0 %v110
  %2199 = vmatpush1.msra.mxu0 %v109
  %2200 = vmatprep.subr.mxu0 %v114
  %2201 = vmatpush1.msra.mxu0 %v113
  %2202 = vmatprep.subr.mxu0 %v118
  %2203 = vmatpush1.msra.mxu0 %v117
  %2204 = vmatprep.subr.mxu0 %v122
  %2205 = vmatpush1.msra.mxu0 %v121
  %2206 = vmatprep.subr.mxu0 %v126
  %2207 = vmatpush1.msra.mxu0 %v125
  %2208 = vmatprep.subr.mxu0 %v130
  %2209 = vmatpush1.msra.mxu0 %v129
  %2210 = vmatprep.subr.mxu0 %v134
  %2211 = vmatpush1.msra.mxu0 %v133
  %2212 = vmatprep.subr.mxu0 0.0
  %2213 = vmatpush1.msra.mxu0 0.0
  %2214 = vmatprep.subr.mxu0 0.0
  %2215 = vmatpush1.msra.mxu0 0.0
  %2216 = vmatprep.subr.mxu0 0.0
  %2217 = vmatpush1.msra.mxu0 0.0
  %2218 = vmatprep.subr.mxu0 0.0
  %2219 = vmatpush1.msra.mxu0 0.0
  %2220 = vmatprep.subr.mxu0 0.0
  %2221 = vmatpush1.msra.mxu0 0.0
  %2222 = vmatprep.subr.mxu0 0.0
  %2223 = vmatpush1.msra.mxu0 0.0
  %2224 = vmatprep.subr.mxu0 0.0
  %2225 = vmatpush1.msra.mxu0 0.0
  %2226 = vmatprep.subr.mxu0 0.0
  %2227 = vmatpush1.msra.mxu0 0.0
  %2228 = vmatprep.subr.mxu0 0.0
  %2229 = vmatpush1.msra.mxu0 0.0
  %2230 = vmatprep.subr.mxu0 0.0
  %2231 = vmatpush1.msra.mxu0 0.0
  %2232 = vmatprep.subr.mxu0 0.0
  %2233 = vmatpush1.msra.mxu0 0.0
  %2234 = vmatprep.subr.mxu0 0.0
  %2235 = vmatpush1.msra.mxu0 0.0
  %2236 = vmatprep.subr.mxu0 0.0
  %2237 = vmatpush1.msra.mxu0 0.0
  %2238 = vmatprep.subr.mxu0 0.0
  %2239 = vmatpush1.msra.mxu0 0.0
  %2240 = vmatprep.subr.mxu0 0.0
  %2241 = vmatpush1.msra.mxu0 0.0
  %2242 = vmatprep.subr.mxu0 0.0
  %2243 = vmatpush1.msra.mxu0 0.0
  %2244 = vmatprep.mubr.f32.mxu0 0.0
  %2245 = vmatmul.mubr.f32.gmra.mrb[0].mxu0 %v1971
  %v2246 = vpop.f32.mrb[0].mxu0
  %v2247 = vadd.f32 0.0, %v2246
  %v2248 = vpop.f32.mrb[0].mxu0
  %v2249 = vadd.f32 0.0, %v2248
  %2250 = vdwg.mxu0
  %2251 = vmatprep.subr.mxu0 %v76
  %2252 = vmatpush1.msra.mxu0 %v75
  %2253 = vmatprep.subr.mxu0 %v80
  %2254 = vmatpush1.msra.mxu0 %v79
  %2255 = vmatprep.subr.mxu0 %v84
  %2256 = vmatpush1.msra.mxu0 %v83
  %2257 = vmatprep.subr.mxu0 %v88
  %2258 = vmatpush1.msra.mxu0 %v87
  %2259 = vmatprep.subr.mxu0 %v92
  %2260 = vmatpush1.msra.mxu0 %v91
  %2261 = vmatprep.subr.mxu0 %v96
  %2262 = vmatpush1.msra.mxu0 %v95
  %2263 = vmatprep.subr.mxu0 %v100
  %2264 = vmatpush1.msra.mxu0 %v99
  %2265 = vmatprep.subr.mxu0 %v104
  %2266 = vmatpush1.msra.mxu0 %v103
  %2267 = vmatprep.subr.mxu0 %v108
  %2268 = vmatpush1.msra.mxu0 %v107
  %2269 = vmatprep.subr.mxu0 %v112
  %2270 = vmatpush1.msra.mxu0 %v111
  %2271 = vmatprep.subr.mxu0 %v116
  %2272 = vmatpush1.msra.mxu0 %v115
  %2273 = vmatprep.subr.mxu0 %v120
  %2274 = vmatpush1.msra.mxu0 %v119
  %2275 = vmatprep.subr.mxu0 %v124
  %2276 = vmatpush1.msra.mxu0 %v123
  %2277 = vmatprep.subr.mxu0 %v128
  %2278 = vmatpush1.msra.mxu0 %v127
  %2279 = vmatprep.subr.mxu0 %v132
  %2280 = vmatpush1.msra.mxu0 %v131
  %2281 = vmatprep.subr.mxu0 %v136
  %2282 = vmatpush1.msra.mxu0 %v135
  %2283 = vmatprep.subr.mxu0 0.0
  %2284 = vmatpush1.msra.mxu0 0.0
  %2285 = vmatprep.subr.mxu0 0.0
  %2286 = vmatpush1.msra.mxu0 0.0
  %2287 = vmatprep.subr.mxu0 0.0
  %2288 = vmatpush1.msra.mxu0 0.0
  %2289 = vmatprep.subr.mxu0 0.0
  %2290 = vmatpush1.msra.mxu0 0.0
  %2291 = vmatprep.subr.mxu0 0.0
  %2292 = vmatpush1.msra.mxu0 0.0
  %2293 = vmatprep.subr.mxu0 0.0
  %2294 = vmatpush1.msra.mxu0 0.0
  %2295 = vmatprep.subr.mxu0 0.0
  %2296 = vmatpush1.msra.mxu0 0.0
  %2297 = vmatprep.subr.mxu0 0.0
  %2298 = vmatpush1.msra.mxu0 0.0
  %2299 = vmatprep.subr.mxu0 0.0
  %2300 = vmatpush1.msra.mxu0 0.0
  %2301 = vmatprep.subr.mxu0 0.0
  %2302 = vmatpush1.msra.mxu0 0.0
  %2303 = vmatprep.subr.mxu0 0.0
  %2304 = vmatpush1.msra.mxu0 0.0
  %2305 = vmatprep.subr.mxu0 0.0
  %2306 = vmatpush1.msra.mxu0 0.0
  %2307 = vmatprep.subr.mxu0 0.0
  %2308 = vmatpush1.msra.mxu0 0.0
  %2309 = vmatprep.subr.mxu0 0.0
  %2310 = vmatpush1.msra.mxu0 0.0
  %2311 = vmatprep.subr.mxu0 0.0
  %2312 = vmatpush1.msra.mxu0 0.0
  %2313 = vmatprep.subr.mxu0 0.0
  %2314 = vmatpush1.msra.mxu0 0.0
  %2315 = vmatprep.mubr.f32.mxu0 0.0
  %2316 = vmatmul.mubr.f32.gmra.mrb[0].mxu0 %v1971
  %v2317 = vpop.f32.mrb[0].mxu0
  %v2318 = vadd.f32 0.0, %v2317
  %v2319 = vpop.f32.mrb[0].mxu0
  %v2320 = vadd.f32 0.0, %v2319
  %2321 = vdwg.mxu0
  %v2322 = vadd.f32 %v2176, %v2247
  %v2323 = vadd.f32 %v2177, %v2249
  %v2324 = vadd.f32 %v2178, %v2318
  %v2325 = vadd.f32 %v2179, %v2320
  %v2326 = vxor.u32 %v2322, 2147483648
  %v2327 = vxor.u32 %v2323, 2147483648
  %v2328 = vxor.u32 %v2324, 2147483648
  %v2329 = vmul.f32 %v2326, 1.442695
  %v2330 = vpow.pop %v2329
  %v2331 = vmul.f32 %v2327, 1.442695
  %v2332 = vpow.pop %v2331
  %v2333 = vmul.f32 %v2328, 1.442695
  %v2334 = vpow.pop %v2333
  %v2335 = vadd.f32 %v2330, 1.0
  %v2336 = vadd.f32 %v2332, 1.0
  %v2337 = vadd.f32 %v2334, 1.0
  %v2338 = vrcp.pop %v2335
  %v2339 = vmul.f32 1.0, %v2338
  %v2340 = vrcp.pop %v2336
  %v2341 = vmul.f32 1.0, %v2340
  %v2342 = vrcp.pop %v2337
  %v2343 = vmul.f32 1.0, %v2342
  %v2344 = vtanh.pop %v2325
  %v2345 = vmul.f32 %v2341, %v1972
  %v2346 = vmul.f32 %v2339, %v2344
  %v2347 = vadd.f32 %v2345, %v2346
  %v2348 = vtanh.pop %v2347
  %v2349 = vmul.f32 %v2343, %v2348
  %v2350 = vsel %vm2175, 1, 0
  %2351 = vset.pattern.permute.xlu0 0
  %2352 = vperm.xlu0 %2351, %v2350
  %v2353 = vpop.permute.xlu0 %2352
  %vm2354 = vcmp.eq.s32.totalorder %v2353, 1
  %v2355 = vsel %vm2354, %v2349, %v1971
  %v2356 = vsel %vm2354, %v2347, %v1972
  %v2357 = vsel %vm2354, %v2349, 0.0
  %s2358 = scalar_lea.vmem %s5, 40
  %2359 = vst [vmem:[%s2358] sm:$0xff] %v2357
  %s2360 = scalar_lea.vmem %s50, 64
  %v2361 = vld [vmem:[%s2360] sm:$0xff]
  %v2362 = vld [vmem:[%s2360 + $0x8] sm:$0xff]
  %v2363 = vld [vmem:[%s2360 + $0x10] sm:$0xff]
  %v2364 = vld [vmem:[%s2360 + $0x18] sm:$0xff]
  %s2365 = sadd.s32 %s204, 2
  %v2366 = vstv %s2365
  %vm2367 = vcmp.lt.s32.totalorder %v2366, %v69
  %v2368 = vadd.f32 %v2361, %v431
  %v2369 = vadd.f32 %v2362, %v435
  %v2370 = vadd.f32 %v2363, %v439
  %v2371 = vadd.f32 %v2364, %v443
  %2372 = vmatprep.subr.mxu0 %v139
  %2373 = vmatpush1.msra.mxu0 %v138
  %2374 = vmatprep.subr.mxu0 %v143
  %2375 = vmatpush1.msra.mxu0 %v142
  %2376 = vmatprep.subr.mxu0 %v147
  %2377 = vmatpush1.msra.mxu0 %v146
  %2378 = vmatprep.subr.mxu0 %v151
  %2379 = vmatpush1.msra.mxu0 %v150
  %2380 = vmatprep.subr.mxu0 %v155
  %2381 = vmatpush1.msra.mxu0 %v154
  %2382 = vmatprep.subr.mxu0 %v159
  %2383 = vmatpush1.msra.mxu0 %v158
  %2384 = vmatprep.subr.mxu0 %v163
  %2385 = vmatpush1.msra.mxu0 %v162
  %2386 = vmatprep.subr.mxu0 %v167
  %2387 = vmatpush1.msra.mxu0 %v166
  %2388 = vmatprep.subr.mxu0 %v171
  %2389 = vmatpush1.msra.mxu0 %v170
  %2390 = vmatprep.subr.mxu0 %v175
  %2391 = vmatpush1.msra.mxu0 %v174
  %2392 = vmatprep.subr.mxu0 %v179
  %2393 = vmatpush1.msra.mxu0 %v178
  %2394 = vmatprep.subr.mxu0 %v183
  %2395 = vmatpush1.msra.mxu0 %v182
  %2396 = vmatprep.subr.mxu0 %v187
  %2397 = vmatpush1.msra.mxu0 %v186
  %2398 = vmatprep.subr.mxu0 %v191
  %2399 = vmatpush1.msra.mxu0 %v190
  %2400 = vmatprep.subr.mxu0 %v195
  %2401 = vmatpush1.msra.mxu0 %v194
  %2402 = vmatprep.subr.mxu0 %v199
  %2403 = vmatpush1.msra.mxu0 %v198
  %2404 = vmatprep.subr.mxu0 0.0
  %2405 = vmatpush1.msra.mxu0 0.0
  %2406 = vmatprep.subr.mxu0 0.0
  %2407 = vmatpush1.msra.mxu0 0.0
  %2408 = vmatprep.subr.mxu0 0.0
  %2409 = vmatpush1.msra.mxu0 0.0
  %2410 = vmatprep.subr.mxu0 0.0
  %2411 = vmatpush1.msra.mxu0 0.0
  %2412 = vmatprep.subr.mxu0 0.0
  %2413 = vmatpush1.msra.mxu0 0.0
  %2414 = vmatprep.subr.mxu0 0.0
  %2415 = vmatpush1.msra.mxu0 0.0
  %2416 = vmatprep.subr.mxu0 0.0
  %2417 = vmatpush1.msra.mxu0 0.0
  %2418 = vmatprep.subr.mxu0 0.0
  %2419 = vmatpush1.msra.mxu0 0.0
  %2420 = vmatprep.subr.mxu0 0.0
  %2421 = vmatpush1.msra.mxu0 0.0
  %2422 = vmatprep.subr.mxu0 0.0
  %2423 = vmatpush1.msra.mxu0 0.0
  %2424 = vmatprep.subr.mxu0 0.0
  %2425 = vmatpush1.msra.mxu0 0.0
  %2426 = vmatprep.subr.mxu0 0.0
  %2427 = vmatpush1.msra.mxu0 0.0
  %2428 = vmatprep.subr.mxu0 0.0
  %2429 = vmatpush1.msra.mxu0 0.0
  %2430 = vmatprep.subr.mxu0 0.0
  %2431 = vmatpush1.msra.mxu0 0.0
  %2432 = vmatprep.subr.mxu0 0.0
  %2433 = vmatpush1.msra.mxu0 0.0
  %2434 = vmatprep.subr.mxu0 0.0
  %2435 = vmatpush1.msra.mxu0 0.0
  %2436 = vmatprep.mubr.f32.mxu0 0.0
  %2437 = vmatmul.mubr.f32.gmra.mrb[0].mxu0 %v2163
  %v2438 = vpop.f32.mrb[0].mxu0
  %v2439 = vadd.f32 0.0, %v2438
  %v2440 = vpop.f32.mrb[0].mxu0
  %v2441 = vadd.f32 0.0, %v2440
  %2442 = vdwg.mxu0
  %2443 = vmatprep.subr.mxu0 %v141
  %2444 = vmatpush1.msra.mxu0 %v140
  %2445 = vmatprep.subr.mxu0 %v145
  %2446 = vmatpush1.msra.mxu0 %v144
  %2447 = vmatprep.subr.mxu0 %v149
  %2448 = vmatpush1.msra.mxu0 %v148
  %2449 = vmatprep.subr.mxu0 %v153
  %2450 = vmatpush1.msra.mxu0 %v152
  %2451 = vmatprep.subr.mxu0 %v157
  %2452 = vmatpush1.msra.mxu0 %v156
  %2453 = vmatprep.subr.mxu0 %v161
  %2454 = vmatpush1.msra.mxu0 %v160
  %2455 = vmatprep.subr.mxu0 %v165
  %2456 = vmatpush1.msra.mxu0 %v164
  %2457 = vmatprep.subr.mxu0 %v169
  %2458 = vmatpush1.msra.mxu0 %v168
  %2459 = vmatprep.subr.mxu0 %v173
  %2460 = vmatpush1.msra.mxu0 %v172
  %2461 = vmatprep.subr.mxu0 %v177
  %2462 = vmatpush1.msra.mxu0 %v176
  %2463 = vmatprep.subr.mxu0 %v181
  %2464 = vmatpush1.msra.mxu0 %v180
  %2465 = vmatprep.subr.mxu0 %v185
  %2466 = vmatpush1.msra.mxu0 %v184
  %2467 = vmatprep.subr.mxu0 %v189
  %2468 = vmatpush1.msra.mxu0 %v188
  %2469 = vmatprep.subr.mxu0 %v193
  %2470 = vmatpush1.msra.mxu0 %v192
  %2471 = vmatprep.subr.mxu0 %v197
  %2472 = vmatpush1.msra.mxu0 %v196
  %2473 = vmatprep.subr.mxu0 %v201
  %2474 = vmatpush1.msra.mxu0 %v200
  %2475 = vmatprep.subr.mxu0 0.0
  %2476 = vmatpush1.msra.mxu0 0.0
  %2477 = vmatprep.subr.mxu0 0.0
  %2478 = vmatpush1.msra.mxu0 0.0
  %2479 = vmatprep.subr.mxu0 0.0
  %2480 = vmatpush1.msra.mxu0 0.0
  %2481 = vmatprep.subr.mxu0 0.0
  %2482 = vmatpush1.msra.mxu0 0.0
  %2483 = vmatprep.subr.mxu0 0.0
  %2484 = vmatpush1.msra.mxu0 0.0
  %2485 = vmatprep.subr.mxu0 0.0
  %2486 = vmatpush1.msra.mxu0 0.0
  %2487 = vmatprep.subr.mxu0 0.0
  %2488 = vmatpush1.msra.mxu0 0.0
  %2489 = vmatprep.subr.mxu0 0.0
  %2490 = vmatpush1.msra.mxu0 0.0
  %2491 = vmatprep.subr.mxu0 0.0
  %2492 = vmatpush1.msra.mxu0 0.0
  %2493 = vmatprep.subr.mxu0 0.0
  %2494 = vmatpush1.msra.mxu0 0.0
  %2495 = vmatprep.subr.mxu0 0.0
  %2496 = vmatpush1.msra.mxu0 0.0
  %2497 = vmatprep.subr.mxu0 0.0
  %2498 = vmatpush1.msra.mxu0 0.0
  %2499 = vmatprep.subr.mxu0 0.0
  %2500 = vmatpush1.msra.mxu0 0.0
  %2501 = vmatprep.subr.mxu0 0.0
  %2502 = vmatpush1.msra.mxu0 0.0
  %2503 = vmatprep.subr.mxu0 0.0
  %2504 = vmatpush1.msra.mxu0 0.0
  %2505 = vmatprep.subr.mxu0 0.0
  %2506 = vmatpush1.msra.mxu0 0.0
  %2507 = vmatprep.mubr.f32.mxu0 0.0
  %2508 = vmatmul.mubr.f32.gmra.mrb[0].mxu0 %v2163
  %v2509 = vpop.f32.mrb[0].mxu0
  %v2510 = vadd.f32 0.0, %v2509
  %v2511 = vpop.f32.mrb[0].mxu0
  %v2512 = vadd.f32 0.0, %v2511
  %2513 = vdwg.mxu0
  %v2514 = vadd.f32 %v2368, %v2439
  %v2515 = vadd.f32 %v2369, %v2441
  %v2516 = vadd.f32 %v2370, %v2510
  %v2517 = vadd.f32 %v2371, %v2512
  %v2518 = vxor.u32 %v2514, 2147483648
  %v2519 = vxor.u32 %v2515, 2147483648
  %v2520 = vxor.u32 %v2516, 2147483648
  %v2521 = vmul.f32 %v2518, 1.442695
  %v2522 = vpow.pop %v2521
  %v2523 = vmul.f32 %v2519, 1.442695
  %v2524 = vpow.pop %v2523
  %v2525 = vmul.f32 %v2520, 1.442695
  %v2526 = vpow.pop %v2525
  %v2527 = vadd.f32 %v2522, 1.0
  %v2528 = vadd.f32 %v2524, 1.0
  %v2529 = vadd.f32 %v2526, 1.0
  %v2530 = vrcp.pop %v2527
  %v2531 = vmul.f32 1.0, %v2530
  %v2532 = vrcp.pop %v2528
  %v2533 = vmul.f32 1.0, %v2532
  %v2534 = vrcp.pop %v2529
  %v2535 = vmul.f32 1.0, %v2534
  %v2536 = vtanh.pop %v2517
  %v2537 = vmul.f32 %v2533, %v2164
  %v2538 = vmul.f32 %v2531, %v2536
  %v2539 = vadd.f32 %v2537, %v2538
  %v2540 = vtanh.pop %v2539
  %v2541 = vmul.f32 %v2535, %v2540
  %v2542 = vsel %vm2367, 1, 0
  %2543 = vset.pattern.permute.xlu0 0
  %2544 = vperm.xlu0 %2543, %v2542
  %v2545 = vpop.permute.xlu0 %2544
  %vm2546 = vcmp.eq.s32.totalorder %v2545, 1
  %v2547 = vsel %vm2546, %v2541, %v2163
  %v2548 = vsel %vm2546, %v2539, %v2164
  %v2549 = vsel %vm2546, %v2541, 0.0
  %s2550 = scalar_lea.vmem %s58, 16
  %2551 = vst [vmem:[%s2550] sm:$0xff] %v2549
  %s2552 = scalar_lea.vmem %s3, 192
  %v2553 = vld [vmem:[%s2552] sm:$0xff]
  %v2554 = vld [vmem:[%s2552 + $0x8] sm:$0xff]
  %v2555 = vld [vmem:[%s2552 + $0x10] sm:$0xff]
  %v2556 = vld [vmem:[%s2552 + $0x18] sm:$0xff]
  %s2557 = sadd.s32 %s202, 6
  %v2558 = vstv %s2557
  %vm2559 = vcmp.lt.s32.totalorder %v2558, %v69
  %v2560 = vadd.f32 %v2553, %v219
  %v2561 = vadd.f32 %v2554, %v223
  %v2562 = vadd.f32 %v2555, %v227
  %v2563 = vadd.f32 %v2556, %v231
  %2564 = vmatprep.subr.mxu0 %v74
  %2565 = vmatpush1.msra.mxu0 %v73
  %2566 = vmatprep.subr.mxu0 %v78
  %2567 = vmatpush1.msra.mxu0 %v77
  %2568 = vmatprep.subr.mxu0 %v82
  %2569 = vmatpush1.msra.mxu0 %v81
  %2570 = vmatprep.subr.mxu0 %v86
  %2571 = vmatpush1.msra.mxu0 %v85
  %2572 = vmatprep.subr.mxu0 %v90
  %2573 = vmatpush1.msra.mxu0 %v89
  %2574 = vmatprep.subr.mxu0 %v94
  %2575 = vmatpush1.msra.mxu0 %v93
  %2576 = vmatprep.subr.mxu0 %v98
  %2577 = vmatpush1.msra.mxu0 %v97
  %2578 = vmatprep.subr.mxu0 %v102
  %2579 = vmatpush1.msra.mxu0 %v101
  %2580 = vmatprep.subr.mxu0 %v106
  %2581 = vmatpush1.msra.mxu0 %v105
  %2582 = vmatprep.subr.mxu0 %v110
  %2583 = vmatpush1.msra.mxu0 %v109
  %2584 = vmatprep.subr.mxu0 %v114
  %2585 = vmatpush1.msra.mxu0 %v113
  %2586 = vmatprep.subr.mxu0 %v118
  %2587 = vmatpush1.msra.mxu0 %v117
  %2588 = vmatprep.subr.mxu0 %v122
  %2589 = vmatpush1.msra.mxu0 %v121
  %2590 = vmatprep.subr.mxu0 %v126
  %2591 = vmatpush1.msra.mxu0 %v125
  %2592 = vmatprep.subr.mxu0 %v130
  %2593 = vmatpush1.msra.mxu0 %v129
  %2594 = vmatprep.subr.mxu0 %v134
  %2595 = vmatpush1.msra.mxu0 %v133
  %2596 = vmatprep.subr.mxu0 0.0
  %2597 = vmatpush1.msra.mxu0 0.0
  %2598 = vmatprep.subr.mxu0 0.0
  %2599 = vmatpush1.msra.mxu0 0.0
  %2600 = vmatprep.subr.mxu0 0.0
  %2601 = vmatpush1.msra.mxu0 0.0
  %2602 = vmatprep.subr.mxu0 0.0
  %2603 = vmatpush1.msra.mxu0 0.0
  %2604 = vmatprep.subr.mxu0 0.0
  %2605 = vmatpush1.msra.mxu0 0.0
  %2606 = vmatprep.subr.mxu0 0.0
  %2607 = vmatpush1.msra.mxu0 0.0
  %2608 = vmatprep.subr.mxu0 0.0
  %2609 = vmatpush1.msra.mxu0 0.0
  %2610 = vmatprep.subr.mxu0 0.0
  %2611 = vmatpush1.msra.mxu0 0.0
  %2612 = vmatprep.subr.mxu0 0.0
  %2613 = vmatpush1.msra.mxu0 0.0
  %2614 = vmatprep.subr.mxu0 0.0
  %2615 = vmatpush1.msra.mxu0 0.0
  %2616 = vmatprep.subr.mxu0 0.0
  %2617 = vmatpush1.msra.mxu0 0.0
  %2618 = vmatprep.subr.mxu0 0.0
  %2619 = vmatpush1.msra.mxu0 0.0
  %2620 = vmatprep.subr.mxu0 0.0
  %2621 = vmatpush1.msra.mxu0 0.0
  %2622 = vmatprep.subr.mxu0 0.0
  %2623 = vmatpush1.msra.mxu0 0.0
  %2624 = vmatprep.subr.mxu0 0.0
  %2625 = vmatpush1.msra.mxu0 0.0
  %2626 = vmatprep.subr.mxu0 0.0
  %2627 = vmatpush1.msra.mxu0 0.0
  %2628 = vmatprep.mubr.f32.mxu0 0.0
  %2629 = vmatmul.mubr.f32.gmra.mrb[0].mxu0 %v2355
  %v2630 = vpop.f32.mrb[0].mxu0
  %v2631 = vadd.f32 0.0, %v2630
  %v2632 = vpop.f32.mrb[0].mxu0
  %v2633 = vadd.f32 0.0, %v2632
  %2634 = vdwg.mxu0
  %2635 = vmatprep.subr.mxu0 %v76
  %2636 = vmatpush1.msra.mxu0 %v75
  %2637 = vmatprep.subr.mxu0 %v80
  %2638 = vmatpush1.msra.mxu0 %v79
  %2639 = vmatprep.subr.mxu0 %v84
  %2640 = vmatpush1.msra.mxu0 %v83
  %2641 = vmatprep.subr.mxu0 %v88
  %2642 = vmatpush1.msra.mxu0 %v87
  %2643 = vmatprep.subr.mxu0 %v92
  %2644 = vmatpush1.msra.mxu0 %v91
  %2645 = vmatprep.subr.mxu0 %v96
  %2646 = vmatpush1.msra.mxu0 %v95
  %2647 = vmatprep.subr.mxu0 %v100
  %2648 = vmatpush1.msra.mxu0 %v99
  %2649 = vmatprep.subr.mxu0 %v104
  %2650 = vmatpush1.msra.mxu0 %v103
  %2651 = vmatprep.subr.mxu0 %v108
  %2652 = vmatpush1.msra.mxu0 %v107
  %2653 = vmatprep.subr.mxu0 %v112
  %2654 = vmatpush1.msra.mxu0 %v111
  %2655 = vmatprep.subr.mxu0 %v116
  %2656 = vmatpush1.msra.mxu0 %v115
  %2657 = vmatprep.subr.mxu0 %v120
  %2658 = vmatpush1.msra.mxu0 %v119
  %2659 = vmatprep.subr.mxu0 %v124
  %2660 = vmatpush1.msra.mxu0 %v123
  %2661 = vmatprep.subr.mxu0 %v128
  %2662 = vmatpush1.msra.mxu0 %v127
  %2663 = vmatprep.subr.mxu0 %v132
  %2664 = vmatpush1.msra.mxu0 %v131
  %2665 = vmatprep.subr.mxu0 %v136
  %2666 = vmatpush1.msra.mxu0 %v135
  %2667 = vmatprep.subr.mxu0 0.0
  %2668 = vmatpush1.msra.mxu0 0.0
  %2669 = vmatprep.subr.mxu0 0.0
  %2670 = vmatpush1.msra.mxu0 0.0
  %2671 = vmatprep.subr.mxu0 0.0
  %2672 = vmatpush1.msra.mxu0 0.0
  %2673 = vmatprep.subr.mxu0 0.0
  %2674 = vmatpush1.msra.mxu0 0.0
  %2675 = vmatprep.subr.mxu0 0.0
  %2676 = vmatpush1.msra.mxu0 0.0
  %2677 = vmatprep.subr.mxu0 0.0
  %2678 = vmatpush1.msra.mxu0 0.0
  %2679 = vmatprep.subr.mxu0 0.0
  %2680 = vmatpush1.msra.mxu0 0.0
  %2681 = vmatprep.subr.mxu0 0.0
  %2682 = vmatpush1.msra.mxu0 0.0
  %2683 = vmatprep.subr.mxu0 0.0
  %2684 = vmatpush1.msra.mxu0 0.0
  %2685 = vmatprep.subr.mxu0 0.0
  %2686 = vmatpush1.msra.mxu0 0.0
  %2687 = vmatprep.subr.mxu0 0.0
  %2688 = vmatpush1.msra.mxu0 0.0
  %2689 = vmatprep.subr.mxu0 0.0
  %2690 = vmatpush1.msra.mxu0 0.0
  %2691 = vmatprep.subr.mxu0 0.0
  %2692 = vmatpush1.msra.mxu0 0.0
  %2693 = vmatprep.subr.mxu0 0.0
  %2694 = vmatpush1.msra.mxu0 0.0
  %2695 = vmatprep.subr.mxu0 0.0
  %2696 = vmatpush1.msra.mxu0 0.0
  %2697 = vmatprep.subr.mxu0 0.0
  %2698 = vmatpush1.msra.mxu0 0.0
  %2699 = vmatprep.mubr.f32.mxu0 0.0
  %2700 = vmatmul.mubr.f32.gmra.mrb[0].mxu0 %v2355
  %v2701 = vpop.f32.mrb[0].mxu0
  %v2702 = vadd.f32 0.0, %v2701
  %v2703 = vpop.f32.mrb[0].mxu0
  %v2704 = vadd.f32 0.0, %v2703
  %2705 = vdwg.mxu0
  %v2706 = vadd.f32 %v2560, %v2631
  %v2707 = vadd.f32 %v2561, %v2633
  %v2708 = vadd.f32 %v2562, %v2702
  %v2709 = vadd.f32 %v2563, %v2704
  %v2710 = vxor.u32 %v2706, 2147483648
  %v2711 = vxor.u32 %v2707, 2147483648
  %v2712 = vxor.u32 %v2708, 2147483648
  %v2713 = vmul.f32 %v2710, 1.442695
  %v2714 = vpow.pop %v2713
  %v2715 = vmul.f32 %v2711, 1.442695
  %v2716 = vpow.pop %v2715
  %v2717 = vmul.f32 %v2712, 1.442695
  %v2718 = vpow.pop %v2717
  %v2719 = vadd.f32 %v2714, 1.0
  %v2720 = vadd.f32 %v2716, 1.0
  %v2721 = vadd.f32 %v2718, 1.0
  %v2722 = vrcp.pop %v2719
  %v2723 = vmul.f32 1.0, %v2722
  %v2724 = vrcp.pop %v2720
  %v2725 = vmul.f32 1.0, %v2724
  %v2726 = vrcp.pop %v2721
  %v2727 = vmul.f32 1.0, %v2726
  %v2728 = vtanh.pop %v2709
  %v2729 = vmul.f32 %v2725, %v2356
  %v2730 = vmul.f32 %v2723, %v2728
  %v2731 = vadd.f32 %v2729, %v2730
  %v2732 = vtanh.pop %v2731
  %v2733 = vmul.f32 %v2727, %v2732
  %v2734 = vsel %vm2559, 1, 0
  %2735 = vset.pattern.permute.xlu0 0
  %2736 = vperm.xlu0 %2735, %v2734
  %v2737 = vpop.permute.xlu0 %2736
  %vm2738 = vcmp.eq.s32.totalorder %v2737, 1
  %v2739 = vsel %vm2738, %v2733, %v2355
  %v2740 = vsel %vm2738, %v2731, %v2356
  %v2741 = vsel %vm2738, %v2733, 0.0
  %s2742 = scalar_lea.vmem %s5, 48
  %2743 = vst [vmem:[%s2742] sm:$0xff] %v2741
  %s2744 = scalar_lea.vmem %s50, 32
  %v2745 = vld [vmem:[%s2744] sm:$0xff]
  %v2746 = vld [vmem:[%s2744 + $0x8] sm:$0xff]
  %v2747 = vld [vmem:[%s2744 + $0x10] sm:$0xff]
  %v2748 = vld [vmem:[%s2744 + $0x18] sm:$0xff]
  %s2749 = sadd.s32 %s204, 1
  %v2750 = vstv %s2749
  %vm2751 = vcmp.lt.s32.totalorder %v2750, %v69
  %v2752 = vadd.f32 %v2745, %v431
  %v2753 = vadd.f32 %v2746, %v435
  %v2754 = vadd.f32 %v2747, %v439
  %v2755 = vadd.f32 %v2748, %v443
  %2756 = vmatprep.subr.mxu0 %v139
  %2757 = vmatpush1.msra.mxu0 %v138
  %2758 = vmatprep.subr.mxu0 %v143
  %2759 = vmatpush1.msra.mxu0 %v142
  %2760 = vmatprep.subr.mxu0 %v147
  %2761 = vmatpush1.msra.mxu0 %v146
  %2762 = vmatprep.subr.mxu0 %v151
  %2763 = vmatpush1.msra.mxu0 %v150
  %2764 = vmatprep.subr.mxu0 %v155
  %2765 = vmatpush1.msra.mxu0 %v154
  %2766 = vmatprep.subr.mxu0 %v159
  %2767 = vmatpush1.msra.mxu0 %v158
  %2768 = vmatprep.subr.mxu0 %v163
  %2769 = vmatpush1.msra.mxu0 %v162
  %2770 = vmatprep.subr.mxu0 %v167
  %2771 = vmatpush1.msra.mxu0 %v166
  %2772 = vmatprep.subr.mxu0 %v171
  %2773 = vmatpush1.msra.mxu0 %v170
  %2774 = vmatprep.subr.mxu0 %v175
  %2775 = vmatpush1.msra.mxu0 %v174
  %2776 = vmatprep.subr.mxu0 %v179
  %2777 = vmatpush1.msra.mxu0 %v178
  %2778 = vmatprep.subr.mxu0 %v183
  %2779 = vmatpush1.msra.mxu0 %v182
  %2780 = vmatprep.subr.mxu0 %v187
  %2781 = vmatpush1.msra.mxu0 %v186
  %2782 = vmatprep.subr.mxu0 %v191
  %2783 = vmatpush1.msra.mxu0 %v190
  %2784 = vmatprep.subr.mxu0 %v195
  %2785 = vmatpush1.msra.mxu0 %v194
  %2786 = vmatprep.subr.mxu0 %v199
  %2787 = vmatpush1.msra.mxu0 %v198
  %2788 = vmatprep.subr.mxu0 0.0
  %2789 = vmatpush1.msra.mxu0 0.0
  %2790 = vmatprep.subr.mxu0 0.0
  %2791 = vmatpush1.msra.mxu0 0.0
  %2792 = vmatprep.subr.mxu0 0.0
  %2793 = vmatpush1.msra.mxu0 0.0
  %2794 = vmatprep.subr.mxu0 0.0
  %2795 = vmatpush1.msra.mxu0 0.0
  %2796 = vmatprep.subr.mxu0 0.0
  %2797 = vmatpush1.msra.mxu0 0.0
  %2798 = vmatprep.subr.mxu0 0.0
  %2799 = vmatpush1.msra.mxu0 0.0
  %2800 = vmatprep.subr.mxu0 0.0
  %2801 = vmatpush1.msra.mxu0 0.0
  %2802 = vmatprep.subr.mxu0 0.0
  %2803 = vmatpush1.msra.mxu0 0.0
  %2804 = vmatprep.subr.mxu0 0.0
  %2805 = vmatpush1.msra.mxu0 0.0
  %2806 = vmatprep.subr.mxu0 0.0
  %2807 = vmatpush1.msra.mxu0 0.0
  %2808 = vmatprep.subr.mxu0 0.0
  %2809 = vmatpush1.msra.mxu0 0.0
  %2810 = vmatprep.subr.mxu0 0.0
  %2811 = vmatpush1.msra.mxu0 0.0
  %2812 = vmatprep.subr.mxu0 0.0
  %2813 = vmatpush1.msra.mxu0 0.0
  %2814 = vmatprep.subr.mxu0 0.0
  %2815 = vmatpush1.msra.mxu0 0.0
  %2816 = vmatprep.subr.mxu0 0.0
  %2817 = vmatpush1.msra.mxu0 0.0
  %2818 = vmatprep.subr.mxu0 0.0
  %2819 = vmatpush1.msra.mxu0 0.0
  %2820 = vmatprep.mubr.f32.mxu0 0.0
  %2821 = vmatmul.mubr.f32.gmra.mrb[0].mxu0 %v2547
  %v2822 = vpop.f32.mrb[0].mxu0
  %v2823 = vadd.f32 0.0, %v2822
  %v2824 = vpop.f32.mrb[0].mxu0
  %v2825 = vadd.f32 0.0, %v2824
  %2826 = vdwg.mxu0
  %2827 = vmatprep.subr.mxu0 %v141
  %2828 = vmatpush1.msra.mxu0 %v140
  %2829 = vmatprep.subr.mxu0 %v145
  %2830 = vmatpush1.msra.mxu0 %v144
  %2831 = vmatprep.subr.mxu0 %v149
  %2832 = vmatpush1.msra.mxu0 %v148
  %2833 = vmatprep.subr.mxu0 %v153
  %2834 = vmatpush1.msra.mxu0 %v152
  %2835 = vmatprep.subr.mxu0 %v157
  %2836 = vmatpush1.msra.mxu0 %v156
  %2837 = vmatprep.subr.mxu0 %v161
  %2838 = vmatpush1.msra.mxu0 %v160
  %2839 = vmatprep.subr.mxu0 %v165
  %2840 = vmatpush1.msra.mxu0 %v164
  %2841 = vmatprep.subr.mxu0 %v169
  %2842 = vmatpush1.msra.mxu0 %v168
  %2843 = vmatprep.subr.mxu0 %v173
  %2844 = vmatpush1.msra.mxu0 %v172
  %2845 = vmatprep.subr.mxu0 %v177
  %2846 = vmatpush1.msra.mxu0 %v176
  %2847 = vmatprep.subr.mxu0 %v181
  %2848 = vmatpush1.msra.mxu0 %v180
  %2849 = vmatprep.subr.mxu0 %v185
  %2850 = vmatpush1.msra.mxu0 %v184
  %2851 = vmatprep.subr.mxu0 %v189
  %2852 = vmatpush1.msra.mxu0 %v188
  %2853 = vmatprep.subr.mxu0 %v193
  %2854 = vmatpush1.msra.mxu0 %v192
  %2855 = vmatprep.subr.mxu0 %v197
  %2856 = vmatpush1.msra.mxu0 %v196
  %2857 = vmatprep.subr.mxu0 %v201
  %2858 = vmatpush1.msra.mxu0 %v200
  %2859 = vmatprep.subr.mxu0 0.0
  %2860 = vmatpush1.msra.mxu0 0.0
  %2861 = vmatprep.subr.mxu0 0.0
  %2862 = vmatpush1.msra.mxu0 0.0
  %2863 = vmatprep.subr.mxu0 0.0
  %2864 = vmatpush1.msra.mxu0 0.0
  %2865 = vmatprep.subr.mxu0 0.0
  %2866 = vmatpush1.msra.mxu0 0.0
  %2867 = vmatprep.subr.mxu0 0.0
  %2868 = vmatpush1.msra.mxu0 0.0
  %2869 = vmatprep.subr.mxu0 0.0
  %2870 = vmatpush1.msra.mxu0 0.0
  %2871 = vmatprep.subr.mxu0 0.0
  %2872 = vmatpush1.msra.mxu0 0.0
  %2873 = vmatprep.subr.mxu0 0.0
  %2874 = vmatpush1.msra.mxu0 0.0
  %2875 = vmatprep.subr.mxu0 0.0
  %2876 = vmatpush1.msra.mxu0 0.0
  %2877 = vmatprep.subr.mxu0 0.0
  %2878 = vmatpush1.msra.mxu0 0.0
  %2879 = vmatprep.subr.mxu0 0.0
  %2880 = vmatpush1.msra.mxu0 0.0
  %2881 = vmatprep.subr.mxu0 0.0
  %2882 = vmatpush1.msra.mxu0 0.0
  %2883 = vmatprep.subr.mxu0 0.0
  %2884 = vmatpush1.msra.mxu0 0.0
  %2885 = vmatprep.subr.mxu0 0.0
  %2886 = vmatpush1.msra.mxu0 0.0
  %2887 = vmatprep.subr.mxu0 0.0
  %2888 = vmatpush1.msra.mxu0 0.0
  %2889 = vmatprep.subr.mxu0 0.0
  %2890 = vmatpush1.msra.mxu0 0.0
  %2891 = vmatprep.mubr.f32.mxu0 0.0
  %2892 = vmatmul.mubr.f32.gmra.mrb[0].mxu0 %v2547
  %v2893 = vpop.f32.mrb[0].mxu0
  %v2894 = vadd.f32 0.0, %v2893
  %v2895 = vpop.f32.mrb[0].mxu0
  %v2896 = vadd.f32 0.0, %v2895
  %2897 = vdwg.mxu0
  %v2898 = vadd.f32 %v2752, %v2823
  %v2899 = vadd.f32 %v2753, %v2825
  %v2900 = vadd.f32 %v2754, %v2894
  %v2901 = vadd.f32 %v2755, %v2896
  %v2902 = vxor.u32 %v2898, 2147483648
  %v2903 = vxor.u32 %v2899, 2147483648
  %v2904 = vxor.u32 %v2900, 2147483648
  %v2905 = vmul.f32 %v2902, 1.442695
  %v2906 = vpow.pop %v2905
  %v2907 = vmul.f32 %v2903, 1.442695
  %v2908 = vpow.pop %v2907
  %v2909 = vmul.f32 %v2904, 1.442695
  %v2910 = vpow.pop %v2909
  %v2911 = vadd.f32 %v2906, 1.0
  %v2912 = vadd.f32 %v2908, 1.0
  %v2913 = vadd.f32 %v2910, 1.0
  %v2914 = vrcp.pop %v2911
  %v2915 = vmul.f32 1.0, %v2914
  %v2916 = vrcp.pop %v2912
  %v2917 = vmul.f32 1.0, %v2916
  %v2918 = vrcp.pop %v2913
  %v2919 = vmul.f32 1.0, %v2918
  %v2920 = vtanh.pop %v2901
  %v2921 = vmul.f32 %v2917, %v2548
  %v2922 = vmul.f32 %v2915, %v2920
  %v2923 = vadd.f32 %v2921, %v2922
  %v2924 = vtanh.pop %v2923
  %v2925 = vmul.f32 %v2919, %v2924
  %v2926 = vsel %vm2751, 1, 0
  %2927 = vset.pattern.permute.xlu0 0
  %2928 = vperm.xlu0 %2927, %v2926
  %v2929 = vpop.permute.xlu0 %2928
  %vm2930 = vcmp.eq.s32.totalorder %v2929, 1
  %v2931 = vsel %vm2930, %v2925, %v2547
  %v2932 = vsel %vm2930, %v2923, %v2548
  %v2933 = vsel %vm2930, %v2925, 0.0
  %s2934 = scalar_lea.vmem %s58, 8
  %2935 = vst [vmem:[%s2934] sm:$0xff] %v2933
  %s2936 = scalar_lea.vmem %s3, 224
  %v2937 = vld [vmem:[%s2936] sm:$0xff]
  %v2938 = vld [vmem:[%s2936 + $0x8] sm:$0xff]
  %v2939 = vld [vmem:[%s2936 + $0x10] sm:$0xff]
  %v2940 = vld [vmem:[%s2936 + $0x18] sm:$0xff]
  %s2941 = sadd.s32 %s202, 7
  %v2942 = vstv %s2941
  %vm2943 = vcmp.lt.s32.totalorder %v2942, %v69
  %v2944 = vadd.f32 %v2937, %v219
  %v2945 = vadd.f32 %v2938, %v223
  %v2946 = vadd.f32 %v2939, %v227
  %v2947 = vadd.f32 %v2940, %v231
  %2948 = vmatprep.subr.mxu0 %v74
  %2949 = vmatpush1.msra.mxu0 %v73
  %2950 = vmatprep.subr.mxu0 %v78
  %2951 = vmatpush1.msra.mxu0 %v77
  %2952 = vmatprep.subr.mxu0 %v82
  %2953 = vmatpush1.msra.mxu0 %v81
  %2954 = vmatprep.subr.mxu0 %v86
  %2955 = vmatpush1.msra.mxu0 %v85
  %2956 = vmatprep.subr.mxu0 %v90
  %2957 = vmatpush1.msra.mxu0 %v89
  %2958 = vmatprep.subr.mxu0 %v94
  %2959 = vmatpush1.msra.mxu0 %v93
  %2960 = vmatprep.subr.mxu0 %v98
  %2961 = vmatpush1.msra.mxu0 %v97
  %2962 = vmatprep.subr.mxu0 %v102
  %2963 = vmatpush1.msra.mxu0 %v101
  %2964 = vmatprep.subr.mxu0 %v106
  %2965 = vmatpush1.msra.mxu0 %v105
  %2966 = vmatprep.subr.mxu0 %v110
  %2967 = vmatpush1.msra.mxu0 %v109
  %2968 = vmatprep.subr.mxu0 %v114
  %2969 = vmatpush1.msra.mxu0 %v113
  %2970 = vmatprep.subr.mxu0 %v118
  %2971 = vmatpush1.msra.mxu0 %v117
  %2972 = vmatprep.subr.mxu0 %v122
  %2973 = vmatpush1.msra.mxu0 %v121
  %2974 = vmatprep.subr.mxu0 %v126
  %2975 = vmatpush1.msra.mxu0 %v125
  %2976 = vmatprep.subr.mxu0 %v130
  %2977 = vmatpush1.msra.mxu0 %v129
  %2978 = vmatprep.subr.mxu0 %v134
  %2979 = vmatpush1.msra.mxu0 %v133
  %2980 = vmatprep.subr.mxu0 0.0
  %2981 = vmatpush1.msra.mxu0 0.0
  %2982 = vmatprep.subr.mxu0 0.0
  %2983 = vmatpush1.msra.mxu0 0.0
  %2984 = vmatprep.subr.mxu0 0.0
  %2985 = vmatpush1.msra.mxu0 0.0
  %2986 = vmatprep.subr.mxu0 0.0
  %2987 = vmatpush1.msra.mxu0 0.0
  %2988 = vmatprep.subr.mxu0 0.0
  %2989 = vmatpush1.msra.mxu0 0.0
  %2990 = vmatprep.subr.mxu0 0.0
  %2991 = vmatpush1.msra.mxu0 0.0
  %2992 = vmatprep.subr.mxu0 0.0
  %2993 = vmatpush1.msra.mxu0 0.0
  %2994 = vmatprep.subr.mxu0 0.0
  %2995 = vmatpush1.msra.mxu0 0.0
  %2996 = vmatprep.subr.mxu0 0.0
  %2997 = vmatpush1.msra.mxu0 0.0
  %2998 = vmatprep.subr.mxu0 0.0
  %2999 = vmatpush1.msra.mxu0 0.0
  %3000 = vmatprep.subr.mxu0 0.0
  %3001 = vmatpush1.msra.mxu0 0.0
  %3002 = vmatprep.subr.mxu0 0.0
  %3003 = vmatpush1.msra.mxu0 0.0
  %3004 = vmatprep.subr.mxu0 0.0
  %3005 = vmatpush1.msra.mxu0 0.0
  %3006 = vmatprep.subr.mxu0 0.0
  %3007 = vmatpush1.msra.mxu0 0.0
  %3008 = vmatprep.subr.mxu0 0.0
  %3009 = vmatpush1.msra.mxu0 0.0
  %3010 = vmatprep.subr.mxu0 0.0
  %3011 = vmatpush1.msra.mxu0 0.0
  %3012 = vmatprep.mubr.f32.mxu0 0.0
  %3013 = vmatmul.mubr.f32.gmra.mrb[0].mxu0 %v2739
  %v3014 = vpop.f32.mrb[0].mxu0
  %v3015 = vadd.f32 0.0, %v3014
  %v3016 = vpop.f32.mrb[0].mxu0
  %v3017 = vadd.f32 0.0, %v3016
  %3018 = vdwg.mxu0
  %3019 = vmatprep.subr.mxu0 %v76
  %3020 = vmatpush1.msra.mxu0 %v75
  %3021 = vmatprep.subr.mxu0 %v80
  %3022 = vmatpush1.msra.mxu0 %v79
  %3023 = vmatprep.subr.mxu0 %v84
  %3024 = vmatpush1.msra.mxu0 %v83
  %3025 = vmatprep.subr.mxu0 %v88
  %3026 = vmatpush1.msra.mxu0 %v87
  %3027 = vmatprep.subr.mxu0 %v92
  %3028 = vmatpush1.msra.mxu0 %v91
  %3029 = vmatprep.subr.mxu0 %v96
  %3030 = vmatpush1.msra.mxu0 %v95
  %3031 = vmatprep.subr.mxu0 %v100
  %3032 = vmatpush1.msra.mxu0 %v99
  %3033 = vmatprep.subr.mxu0 %v104
  %3034 = vmatpush1.msra.mxu0 %v103
  %3035 = vmatprep.subr.mxu0 %v108
  %3036 = vmatpush1.msra.mxu0 %v107
  %3037 = vmatprep.subr.mxu0 %v112
  %3038 = vmatpush1.msra.mxu0 %v111
  %3039 = vmatprep.subr.mxu0 %v116
  %3040 = vmatpush1.msra.mxu0 %v115
  %3041 = vmatprep.subr.mxu0 %v120
  %3042 = vmatpush1.msra.mxu0 %v119
  %3043 = vmatprep.subr.mxu0 %v124
  %3044 = vmatpush1.msra.mxu0 %v123
  %3045 = vmatprep.subr.mxu0 %v128
  %3046 = vmatpush1.msra.mxu0 %v127
  %3047 = vmatprep.subr.mxu0 %v132
  %3048 = vmatpush1.msra.mxu0 %v131
  %3049 = vmatprep.subr.mxu0 %v136
  %3050 = vmatpush1.msra.mxu0 %v135
  %3051 = vmatprep.subr.mxu0 0.0
  %3052 = vmatpush1.msra.mxu0 0.0
  %3053 = vmatprep.subr.mxu0 0.0
  %3054 = vmatpush1.msra.mxu0 0.0
  %3055 = vmatprep.subr.mxu0 0.0
  %3056 = vmatpush1.msra.mxu0 0.0
  %3057 = vmatprep.subr.mxu0 0.0
  %3058 = vmatpush1.msra.mxu0 0.0
  %3059 = vmatprep.subr.mxu0 0.0
  %3060 = vmatpush1.msra.mxu0 0.0
  %3061 = vmatprep.subr.mxu0 0.0
  %3062 = vmatpush1.msra.mxu0 0.0
  %3063 = vmatprep.subr.mxu0 0.0
  %3064 = vmatpush1.msra.mxu0 0.0
  %3065 = vmatprep.subr.mxu0 0.0
  %3066 = vmatpush1.msra.mxu0 0.0
  %3067 = vmatprep.subr.mxu0 0.0
  %3068 = vmatpush1.msra.mxu0 0.0
  %3069 = vmatprep.subr.mxu0 0.0
  %3070 = vmatpush1.msra.mxu0 0.0
  %3071 = vmatprep.subr.mxu0 0.0
  %3072 = vmatpush1.msra.mxu0 0.0
  %3073 = vmatprep.subr.mxu0 0.0
  %3074 = vmatpush1.msra.mxu0 0.0
  %3075 = vmatprep.subr.mxu0 0.0
  %3076 = vmatpush1.msra.mxu0 0.0
  %3077 = vmatprep.subr.mxu0 0.0
  %3078 = vmatpush1.msra.mxu0 0.0
  %3079 = vmatprep.subr.mxu0 0.0
  %3080 = vmatpush1.msra.mxu0 0.0
  %3081 = vmatprep.subr.mxu0 0.0
  %3082 = vmatpush1.msra.mxu0 0.0
  %3083 = vmatprep.mubr.f32.mxu0 0.0
  %3084 = vmatmul.mubr.f32.gmra.mrb[0].mxu0 %v2739
  %v3085 = vpop.f32.mrb[0].mxu0
  %v3086 = vadd.f32 0.0, %v3085
  %v3087 = vpop.f32.mrb[0].mxu0
  %v3088 = vadd.f32 0.0, %v3087
  %3089 = vdwg.mxu0
  %v3090 = vadd.f32 %v2944, %v3015
  %v3091 = vadd.f32 %v2945, %v3017
  %v3092 = vadd.f32 %v2946, %v3086
  %v3093 = vadd.f32 %v2947, %v3088
  %v3094 = vxor.u32 %v3090, 2147483648
  %v3095 = vxor.u32 %v3091, 2147483648
  %v3096 = vxor.u32 %v3092, 2147483648
  %v3097 = vmul.f32 %v3094, 1.442695
  %v3098 = vpow.pop %v3097
  %v3099 = vmul.f32 %v3095, 1.442695
  %v3100 = vpow.pop %v3099
  %v3101 = vmul.f32 %v3096, 1.442695
  %v3102 = vpow.pop %v3101
  %v3103 = vadd.f32 %v3098, 1.0
  %v3104 = vadd.f32 %v3100, 1.0
  %v3105 = vadd.f32 %v3102, 1.0
  %v3106 = vrcp.pop %v3103
  %v3107 = vmul.f32 1.0, %v3106
  %v3108 = vrcp.pop %v3104
  %v3109 = vmul.f32 1.0, %v3108
  %v3110 = vrcp.pop %v3105
  %v3111 = vmul.f32 1.0, %v3110
  %v3112 = vtanh.pop %v3093
  %v3113 = vmul.f32 %v3109, %v2740
  %v3114 = vmul.f32 %v3107, %v3112
  %v3115 = vadd.f32 %v3113, %v3114
  %v3116 = vtanh.pop %v3115
  %v3117 = vmul.f32 %v3111, %v3116
  %v3118 = vsel %vm2943, 1, 0
  %3119 = vset.pattern.permute.xlu0 0
  %3120 = vperm.xlu0 %3119, %v3118
  %v3121 = vpop.permute.xlu0 %3120
  %vm3122 = vcmp.eq.s32.totalorder %v3121, 1
  %v3123 = vsel %vm3122, %v3117, %v2739
  %v3124 = vsel %vm3122, %v3115, %v2740
  %v3125 = vsel %vm3122, %v3117, 0.0
  %s3126 = scalar_lea.vmem %s5, 56
  %3127 = vst [vmem:[%s3126] sm:$0xff] %v3125
  %v3128 = vld [vmem:[%s50] sm:$0xff]
  %v3129 = vld [vmem:[%s50 + $0x8] sm:$0xff]
  %v3130 = vld [vmem:[%s50 + $0x10] sm:$0xff]
  %v3131 = vld [vmem:[%s50 + $0x18] sm:$0xff]
  %v3132 = vstv %s204
  %vm3133 = vcmp.lt.s32.totalorder %v3132, %v69
  %v3134 = vadd.f32 %v3128, %v431
  %v3135 = vadd.f32 %v3129, %v435
  %v3136 = vadd.f32 %v3130, %v439
  %v3137 = vadd.f32 %v3131, %v443
  %3138 = vmatprep.subr.mxu0 %v139
  %3139 = vmatpush1.msra.mxu0 %v138
  %3140 = vmatprep.subr.mxu0 %v143
  %3141 = vmatpush1.msra.mxu0 %v142
  %3142 = vmatprep.subr.mxu0 %v147
  %3143 = vmatpush1.msra.mxu0 %v146
  %3144 = vmatprep.subr.mxu0 %v151
  %3145 = vmatpush1.msra.mxu0 %v150
  %3146 = vmatprep.subr.mxu0 %v155
  %3147 = vmatpush1.msra.mxu0 %v154
  %3148 = vmatprep.subr.mxu0 %v159
  %3149 = vmatpush1.msra.mxu0 %v158
  %3150 = vmatprep.subr.mxu0 %v163
  %3151 = vmatpush1.msra.mxu0 %v162
  %3152 = vmatprep.subr.mxu0 %v167
  %3153 = vmatpush1.msra.mxu0 %v166
  %3154 = vmatprep.subr.mxu0 %v171
  %3155 = vmatpush1.msra.mxu0 %v170
  %3156 = vmatprep.subr.mxu0 %v175
  %3157 = vmatpush1.msra.mxu0 %v174
  %3158 = vmatprep.subr.mxu0 %v179
  %3159 = vmatpush1.msra.mxu0 %v178
  %3160 = vmatprep.subr.mxu0 %v183
  %3161 = vmatpush1.msra.mxu0 %v182
  %3162 = vmatprep.subr.mxu0 %v187
  %3163 = vmatpush1.msra.mxu0 %v186
  %3164 = vmatprep.subr.mxu0 %v191
  %3165 = vmatpush1.msra.mxu0 %v190
  %3166 = vmatprep.subr.mxu0 %v195
  %3167 = vmatpush1.msra.mxu0 %v194
  %3168 = vmatprep.subr.mxu0 %v199
  %3169 = vmatpush1.msra.mxu0 %v198
  %3170 = vmatprep.subr.mxu0 0.0
  %3171 = vmatpush1.msra.mxu0 0.0
  %3172 = vmatprep.subr.mxu0 0.0
  %3173 = vmatpush1.msra.mxu0 0.0
  %3174 = vmatprep.subr.mxu0 0.0
  %3175 = vmatpush1.msra.mxu0 0.0
  %3176 = vmatprep.subr.mxu0 0.0
  %3177 = vmatpush1.msra.mxu0 0.0
  %3178 = vmatprep.subr.mxu0 0.0
  %3179 = vmatpush1.msra.mxu0 0.0
  %3180 = vmatprep.subr.mxu0 0.0
  %3181 = vmatpush1.msra.mxu0 0.0
  %3182 = vmatprep.subr.mxu0 0.0
  %3183 = vmatpush1.msra.mxu0 0.0
  %3184 = vmatprep.subr.mxu0 0.0
  %3185 = vmatpush1.msra.mxu0 0.0
  %3186 = vmatprep.subr.mxu0 0.0
  %3187 = vmatpush1.msra.mxu0 0.0
  %3188 = vmatprep.subr.mxu0 0.0
  %3189 = vmatpush1.msra.mxu0 0.0
  %3190 = vmatprep.subr.mxu0 0.0
  %3191 = vmatpush1.msra.mxu0 0.0
  %3192 = vmatprep.subr.mxu0 0.0
  %3193 = vmatpush1.msra.mxu0 0.0
  %3194 = vmatprep.subr.mxu0 0.0
  %3195 = vmatpush1.msra.mxu0 0.0
  %3196 = vmatprep.subr.mxu0 0.0
  %3197 = vmatpush1.msra.mxu0 0.0
  %3198 = vmatprep.subr.mxu0 0.0
  %3199 = vmatpush1.msra.mxu0 0.0
  %3200 = vmatprep.subr.mxu0 0.0
  %3201 = vmatpush1.msra.mxu0 0.0
  %3202 = vmatprep.mubr.f32.mxu0 0.0
  %3203 = vmatmul.mubr.f32.gmra.mrb[0].mxu0 %v2931
  %v3204 = vpop.f32.mrb[0].mxu0
  %v3205 = vadd.f32 0.0, %v3204
  %v3206 = vpop.f32.mrb[0].mxu0
  %v3207 = vadd.f32 0.0, %v3206
  %3208 = vdwg.mxu0
  %3209 = vmatprep.subr.mxu0 %v141
  %3210 = vmatpush1.msra.mxu0 %v140
  %3211 = vmatprep.subr.mxu0 %v145
  %3212 = vmatpush1.msra.mxu0 %v144
  %3213 = vmatprep.subr.mxu0 %v149
  %3214 = vmatpush1.msra.mxu0 %v148
  %3215 = vmatprep.subr.mxu0 %v153
  %3216 = vmatpush1.msra.mxu0 %v152
  %3217 = vmatprep.subr.mxu0 %v157
  %3218 = vmatpush1.msra.mxu0 %v156
  %3219 = vmatprep.subr.mxu0 %v161
  %3220 = vmatpush1.msra.mxu0 %v160
  %3221 = vmatprep.subr.mxu0 %v165
  %3222 = vmatpush1.msra.mxu0 %v164
  %3223 = vmatprep.subr.mxu0 %v169
  %3224 = vmatpush1.msra.mxu0 %v168
  %3225 = vmatprep.subr.mxu0 %v173
  %3226 = vmatpush1.msra.mxu0 %v172
  %3227 = vmatprep.subr.mxu0 %v177
  %3228 = vmatpush1.msra.mxu0 %v176
  %3229 = vmatprep.subr.mxu0 %v181
  %3230 = vmatpush1.msra.mxu0 %v180
  %3231 = vmatprep.subr.mxu0 %v185
  %3232 = vmatpush1.msra.mxu0 %v184
  %3233 = vmatprep.subr.mxu0 %v189
  %3234 = vmatpush1.msra.mxu0 %v188
  %3235 = vmatprep.subr.mxu0 %v193
  %3236 = vmatpush1.msra.mxu0 %v192
  %3237 = vmatprep.subr.mxu0 %v197
  %3238 = vmatpush1.msra.mxu0 %v196
  %3239 = vmatprep.subr.mxu0 %v201
  %3240 = vmatpush1.msra.mxu0 %v200
  %3241 = vmatprep.subr.mxu0 0.0
  %3242 = vmatpush1.msra.mxu0 0.0
  %3243 = vmatprep.subr.mxu0 0.0
  %3244 = vmatpush1.msra.mxu0 0.0
  %3245 = vmatprep.subr.mxu0 0.0
  %3246 = vmatpush1.msra.mxu0 0.0
  %3247 = vmatprep.subr.mxu0 0.0
  %3248 = vmatpush1.msra.mxu0 0.0
  %3249 = vmatprep.subr.mxu0 0.0
  %3250 = vmatpush1.msra.mxu0 0.0
  %3251 = vmatprep.subr.mxu0 0.0
  %3252 = vmatpush1.msra.mxu0 0.0
  %3253 = vmatprep.subr.mxu0 0.0
  %3254 = vmatpush1.msra.mxu0 0.0
  %3255 = vmatprep.subr.mxu0 0.0
  %3256 = vmatpush1.msra.mxu0 0.0
  %3257 = vmatprep.subr.mxu0 0.0
  %3258 = vmatpush1.msra.mxu0 0.0
  %3259 = vmatprep.subr.mxu0 0.0
  %3260 = vmatpush1.msra.mxu0 0.0
  %3261 = vmatprep.subr.mxu0 0.0
  %3262 = vmatpush1.msra.mxu0 0.0
  %3263 = vmatprep.subr.mxu0 0.0
  %3264 = vmatpush1.msra.mxu0 0.0
  %3265 = vmatprep.subr.mxu0 0.0
  %3266 = vmatpush1.msra.mxu0 0.0
  %3267 = vmatprep.subr.mxu0 0.0
  %3268 = vmatpush1.msra.mxu0 0.0
  %3269 = vmatprep.subr.mxu0 0.0
  %3270 = vmatpush1.msra.mxu0 0.0
  %3271 = vmatprep.subr.mxu0 0.0
  %3272 = vmatpush1.msra.mxu0 0.0
  %3273 = vmatprep.mubr.f32.mxu0 0.0
  %3274 = vmatmul.mubr.f32.gmra.mrb[0].mxu0 %v2931
  %v3275 = vpop.f32.mrb[0].mxu0
  %v3276 = vadd.f32 0.0, %v3275
  %v3277 = vpop.f32.mrb[0].mxu0
  %v3278 = vadd.f32 0.0, %v3277
  %3279 = vdwg.mxu0
  %v3280 = vadd.f32 %v3134, %v3205
  %v3281 = vadd.f32 %v3135, %v3207
  %v3282 = vadd.f32 %v3136, %v3276
  %v3283 = vadd.f32 %v3137, %v3278
  %v3284 = vxor.u32 %v3280, 2147483648
  %v3285 = vxor.u32 %v3281, 2147483648
  %v3286 = vxor.u32 %v3282, 2147483648
  %v3287 = vmul.f32 %v3284, 1.442695
  %v3288 = vpow.pop %v3287
  %v3289 = vmul.f32 %v3285, 1.442695
  %v3290 = vpow.pop %v3289
  %v3291 = vmul.f32 %v3286, 1.442695
  %v3292 = vpow.pop %v3291
  %v3293 = vadd.f32 %v3288, 1.0
  %v3294 = vadd.f32 %v3290, 1.0
  %v3295 = vadd.f32 %v3292, 1.0
  %v3296 = vrcp.pop %v3293
  %v3297 = vmul.f32 1.0, %v3296
  %v3298 = vrcp.pop %v3294
  %v3299 = vmul.f32 1.0, %v3298
  %v3300 = vrcp.pop %v3295
  %v3301 = vmul.f32 1.0, %v3300
  %v3302 = vtanh.pop %v3283
  %v3303 = vmul.f32 %v3299, %v2932
  %v3304 = vmul.f32 %v3297, %v3302
  %v3305 = vadd.f32 %v3303, %v3304
  %v3306 = vtanh.pop %v3305
  %v3307 = vmul.f32 %v3301, %v3306
  %v3308 = vsel %vm3133, 1, 0
  %3309 = vset.pattern.permute.xlu0 0
  %3310 = vperm.xlu0 %3309, %v3308
  %v3311 = vpop.permute.xlu0 %3310
  %vm3312 = vcmp.eq.s32.totalorder %v3311, 1
  %v3313 = vsel %vm3312, %v3307, %v2931
  %v3314 = vsel %vm3312, %v3305, %v2932
  %v3315 = vsel %vm3312, %v3307, 0.0
  %3316 = vst [vmem:[%s58] sm:$0xff] %v3315
  %3317 = vst [vmem:[#allocation2] sm:$0xff] %v3123
  %3318 = vst [vmem:[#allocation3] sm:$0xff] %v3124
  %3319 = vst [vmem:[#allocation4] sm:$0xff] %v3313
  %3320 = vst [vmem:[#allocation5] sm:$0xff] %v3314
  %s3321 = ssub.s32 0, 0
  %s3322 = smul.u32 8, %s3321
  %p3323 = scmp.lt.s32.totalorder %s3322, 7
  %s3324 = scalar_select %p3323, %s3322, 7
  %s3325 = smul.addr %s3324, 8
  %s3326 = scalar_lea.vmem %s6, %s3325
  // Predicated region
  $region26: #{stacked_brnn_forward.2} parent=0 // pred_check
    _
  $region27: #{stacked_brnn_forward.2} parent=0 // pred_check_branch
    %3328 = sbr.rel (0) target = $region29
  $region28: #{stacked_brnn_forward.2} parent=0 // pred_region
    _
  $region29: #{stacked_brnn_forward.2} parent=0 // pred_fallthru
    _
  // Predicated region
  $region30: #{stacked_brnn_forward.2} parent=0 // pred_check
    _
  $region31: #{stacked_brnn_forward.2} parent=0 // pred_check_branch
    %3330 = sbr.rel (0) target = $region33
  $region32: #{stacked_brnn_forward.2} parent=0 // pred_region
    %s3331 = ssub.s32 0, 0
    %s3332 = smul.u32 8, %s3331
  $region33: #{stacked_brnn_forward.2} parent=0 // pred_fallthru
    _
  // Predicated region
  $region34: #{stacked_brnn_forward.2} parent=0 // pred_check
    _
  $region35: #{stacked_brnn_forward.2} parent=0 // pred_check_branch
    %3334 = sbr.rel (0) target = $region37
  $region36: #{stacked_brnn_forward.2} parent=0 // pred_region
    _
  $region37: #{stacked_brnn_forward.2} parent=0 // pred_fallthru
    _
  // Predicated region
  $region38: #{stacked_brnn_forward.2} parent=0 // pred_check
    _
  $region39: #{stacked_brnn_forward.2} parent=0 // pred_check_branch
    %3336 = sbr.rel (0) target = $region41
  $region40: #{stacked_brnn_forward.2} parent=0 // pred_region
    %s3337 = ssub.s32 0, 0
    %s3338 = smul.u32 8, %s3337
    %p3339 = scmp.lt.s32.totalorder %s3338, 7
    %s3340 = scalar_select %p3339, %s3338, 7
    %s3341 = smul.addr %s3340, 8
    %s3342 = scalar_lea.vmem %s6, %s3341
  $region41: #{stacked_brnn_forward.2} parent=0 // pred_fallthru
    _

</llo_original>
